<compile_context>
chip_gen: v7x
topology: tpu7x:2x2x1
jax: 0.10.0
libtpu: 0.0.40
codegen_flags: <defaults>
</compile_context>

<pallas_src>
import numpy as np
import jax
import jax.numpy as jnp
from jax.experimental import pallas as pl
from jax.experimental.pallas import tpu as pltpu

# ----- small synthetic DINOv2-style ViT config -----
IMG      = 16                      # input spatial size
PATCH    = 4                       # patch size
IN_CH    = 3                       # RGB
EMBED    = 32                      # hidden dim D
HEADS    = 4
HEAD_DIM = EMBED // HEADS
MLP      = 4 * EMBED               # 128
DEPTH    = 2
LN_EPS   = 1e-6

N_PATCH  = (IMG // PATCH) ** 2     # 16 patches
N_TOK    = N_PATCH + 1             # 17 tokens (cls + patches)
T_PAD    = 24                      # tokens padded to a multiple of 8 sublanes
PATCH_K  = IN_CH * PATCH * PATCH   # 48 = flattened patch length

# row layout of the packed per-layer small-vector array (DEPTH, 8, MLP)
_V_WN1, _V_BN1, _V_BQKV, _V_BPROJ, _V_WN2, _V_BN2, _V_BFC1, _V_BFC2 = range(8)


def _ln(x, w, b):
    mu = jnp.mean(x, axis=-1, keepdims=True)
    var = jnp.mean(jnp.square(x - mu), axis=-1, keepdims=True)
    return (x - mu) * jax.lax.rsqrt(var + LN_EPS) * w + b


# ---------------- fused Pallas kernel ----------------

def vit_kernel(patches_ref, tokb_ref, bias_ref, nwb_ref, pw_ref,
               wqkv_ref, wproj_ref, wfc1_ref, wfc2_ref, vecs_ref, o_ref):
    """Whole ViT forward for a block of Bblk images, flattened to BT = Bblk*T_PAD rows.

    patches_ref: (BT, K) bf16     tokb_ref: (BT, D) f32 (cls+pos baked into row 0)
    bias_ref:    (BT, BT) f32 additive attention mask (block-diag + padding mask)
    nwb_ref:     (2, D) final LN weight / bias
    pw_ref:      (K, D) bf16
    wqkv_ref:    (L, D, 3D) bf16 (q columns pre-scaled by HEAD_DIM**-0.5)
    wproj_ref:   (L, D, D) bf16 (LayerScale g1 folded)
    wfc1_ref:    (L, D, MLP) bf16      wfc2_ref: (L, MLP, D) bf16 (g2 folded)
    vecs_ref:    (L, 8, MLP) f32 packed small per-layer vectors
    o_ref:       (BT, D) f32
    """
    D = EMBED
    H, Hd = HEADS, HEAD_DIM
    CDT = jnp.bfloat16          # MXU operand dtype; accumulation + elementwise stay f32

    nw = nwb_ref[0:1, :]
    nb = nwb_ref[1:2, :]
    bias = bias_ref[...]        # (BT, BT): 0 for valid same-image keys, -1e30 otherwise

    # --- patch embed; cls token + positional embedding are baked into tokb ---
    x = jnp.dot(patches_ref[...], pw_ref[...],
                preferred_element_type=jnp.float32) + tokb_ref[...]        # (BT, D) f32

    for l in range(DEPTH):                                   # static depth loop
        vec = vecs_ref[l]                                    # (8, MLP)
        wn1   = vec[_V_WN1:_V_WN1 + 1, :D]
        bn1   = vec[_V_BN1:_V_BN1 + 1, :D]
        bqkv  = vec[_V_BQKV:_V_BQKV + 1, :3 * D]
        bproj = vec[_V_BPROJ:_V_BPROJ + 1, :D]               # LayerScale g1 pre-folded
        wn2   = vec[_V_WN2:_V_WN2 + 1, :D]
        bn2   = vec[_V_BN2:_V_BN2 + 1, :D]
        bfc1  = vec[_V_BFC1:_V_BFC1 + 1, :]
        bfc2  = vec[_V_BFC2:_V_BFC2 + 1, :D]                 # LayerScale g2 pre-folded

        # ---- attention: single lane-dense (BT,D)x(D,3D) qkv matmul ----
        xn = _ln(x, wn1, bn1)
        qkv = jnp.dot(xn.astype(CDT), wqkv_ref[l],
                      preferred_element_type=jnp.float32) + bqkv           # (BT, 3D)
        head_out = []
        for h in range(H):                                   # static, H=4
            q = qkv[:, h * Hd:(h + 1) * Hd].astype(CDT)                    # (BT, Hd)
            k = qkv[:, D + h * Hd:D + (h + 1) * Hd].astype(CDT)
            v = qkv[:, 2 * D + h * Hd:2 * D + (h + 1) * Hd].astype(CDT)
            # softmax scale is folded into the q weights/bias
            s = jax.lax.dot_general(q, k, (((1,), (1,)), ((), ())),
                                    preferred_element_type=jnp.float32) + bias
            s = s - jnp.max(s, axis=-1, keepdims=True)
            p = jnp.exp(s)
            p = p * pl.reciprocal(jnp.sum(p, axis=-1, keepdims=True))      # exact
            head_out.append(jnp.dot(p.astype(CDT), v,
                                    preferred_element_type=jnp.float32))   # (BT, Hd)
        oh = jnp.concatenate(head_out, axis=-1)                            # (BT, D)
        attn = jnp.dot(oh.astype(CDT), wproj_ref[l],
                       preferred_element_type=jnp.float32) + bproj
        x = x + attn            # plain residual: LayerScale folded into wproj/bproj

        # ---- MLP ----
        xn2 = _ln(x, wn2, bn2)
        h1 = jnp.dot(xn2.astype(CDT), wfc1_ref[l],
                     preferred_element_type=jnp.float32) + bfc1            # (BT, MLP)
        # TODO(synk): PyTorch nn.GELU defaults to exact erf GELU; the tanh
        # approximation is used because erf has no guaranteed Mosaic lowering.
        h1 = jax.nn.gelu(h1, approximate=True)
        m = jnp.dot(h1.astype(CDT), wfc2_ref[l],
                    preferred_element_type=jnp.float32) + bfc2
        x = x + m               # LayerScale folded into wfc2/bfc2

    # Final LayerNorm.  Kept at (BT, 32): a lane-dense (.., 128) repack would need
    # a sublane->lane relayout costing more than the few masked stores it saves,
    # and HBM writeback bytes are identical.
    o_ref[...] = _ln(x, nw, nb)


# ---------------- wrappers ----------------

_W_ORDER = ('norm_wb', 'patch_w', 'wqkv', 'wproj', 'wfc1', 'wfc2', 'vecs')


def _num_tensorcores():
    """Best-effort TensorCore count per device; falls back to 1 (always safe)."""
    try:
        d = jax.devices()[0]
        for attr in ('num_cores', 'core_count'):
            v = getattr(d, attr, None)
            if isinstance(v, int) and v > 0:
                return v
    except Exception:
        pass
    return 1


def _attn_bias(n_img):
    """(n_img*T_PAD, n_img*T_PAD) additive mask: 0 where the key is a real token of
    the same image, -1e30 otherwise (padding rows / cross-image pairs)."""
    bt = n_img * T_PAD
    idx = np.arange(bt)
    same_img = (idx[:, None] // T_PAD) == (idx[None, :] // T_PAD)
    key_valid = (idx[None, :] % T_PAD) < N_TOK
    return jnp.asarray(np.where(same_img & key_valid, 0.0, -1e30).astype(np.float32))


def vit_forward(patches, w):
    """patches: (B*T_PAD, K) bf16; row 0 of each image is the (zero) cls slot and
    rows N_TOK..T_PAD-1 are zero padding."""
    bt_total, K = patches.shape
    B = bt_total // T_PAD

    # one batch block per TensorCore when that divides B, otherwise a single block
    ncores = _num_tensorcores()
    G = ncores if (ncores > 1 and B % ncores == 0) else 1
    Bblk = B // G
    BT = Bblk * T_PAD

    tokb = jnp.tile(w['tokb'], (Bblk, 1))            # (BT, D)
    bias = _attn_bias(Bblk)                          # (BT, BT)

    def const_spec(a):
        nd = a.ndim
        return pl.BlockSpec(a.shape, lambda g, _nd=nd: (0,) * _nd)

    consts = [w[name] for name in _W_ORDER]
    # Constant blocks keep the same block index across the grid so they are DMA'd
    # once; the (<0.25 MiB) extra pipeline buffer is negligible on every generation.
    in_specs = ([pl.BlockSpec((BT, K), lambda g: (g, 0)),
                 const_spec(tokb), const_spec(bias)]
                + [const_spec(a) for a in consts])

    return pl.pallas_call(
        vit_kernel,
        out_shape=jax.ShapeDtypeStruct((bt_total, EMBED), jnp.float32),
        grid=(G,),
        in_specs=in_specs,
        out_specs=pl.BlockSpec((BT, EMBED), lambda g: (g, 0)),
        compiler_params=pltpu.CompilerParams(
            dimension_semantics=("parallel",)),
    )(patches, tokb, bias, *consts)


# ---------------- parameters ----------------

def init_params(key):
    keys = jax.random.split(key, 4 + DEPTH)

    def rnorm(k, shape, scale=0.02):
        return scale * jax.random.normal(k, shape, dtype=jnp.float32)

    params = {
        'patch_w': rnorm(keys[0], (PATCH_K, EMBED)),   # flattened Conv2d weight
        'patch_b': rnorm(keys[1], (1, EMBED)),
        'cls':     rnorm(keys[2], (1, 1, EMBED)),
        'pos':     rnorm(keys[3], (1, N_TOK, EMBED)),
        'norm_w':  jnp.ones((1, EMBED), jnp.float32),
        'norm_b':  jnp.zeros((1, EMBED), jnp.float32),
        'blocks':  [],
    }
    for i in range(DEPTH):
        bk = jax.random.split(keys[4 + i], 4)
        params['blocks'].append({
            'wqkv':  rnorm(bk[0], (EMBED, 3 * EMBED)),
            'bqkv':  jnp.zeros((1, 3 * EMBED), jnp.float32),
            'wproj': rnorm(bk[1], (EMBED, EMBED)),
            'bproj': jnp.zeros((1, EMBED), jnp.float32),
            'g1':    jnp.full((1, EMBED), 0.1, jnp.float32),   # LayerScale gamma
            'wn1':   jnp.ones((1, EMBED), jnp.float32),
            'bn1':   jnp.zeros((1, EMBED), jnp.float32),
            'wn2':   jnp.ones((1, EMBED), jnp.float32),
            'bn2':   jnp.zeros((1, EMBED), jnp.float32),
            'wfc1':  rnorm(bk[2], (EMBED, MLP)),
            'bfc1':  jnp.zeros((1, MLP), jnp.float32),
            'wfc2':  rnorm(bk[3], (MLP, EMBED)),
            'bfc2':  jnp.zeros((1, EMBED), jnp.float32),
            'g2':    jnp.full((1, EMBED), 0.1, jnp.float32),
        })
    return params


def prep_weights(params):
    """Parameter-only preprocessing (constant-folded under jit):
       - cls token + positional embedding baked into a padded (T_PAD, D) token bias
       - softmax scale folded into the q columns of the fused qkv weight/bias
       - LayerScale gammas folded into proj / fc2 weights+biases
       - all tiny per-layer vectors packed into one (DEPTH, 8, MLP) array
       - MXU weight operands cast to bf16 (LN / bias vectors stay f32)."""
    D, Hd = EMBED, HEAD_DIM
    scale = Hd ** -0.5
    cdt = jnp.bfloat16

    def pad_row(v):                       # (1, n) -> (1, MLP)
        return jnp.pad(v, ((0, 0), (0, MLP - v.shape[1])))

    tokb = jnp.zeros((T_PAD, EMBED), jnp.float32)
    tokb = tokb.at[0].set(params['cls'][0, 0] + params['pos'][0, 0])
    tokb = tokb.at[1:N_TOK].set(params['patch_b'] + params['pos'][0, 1:])

    wqkv_l, wproj_l, wfc1_l, wfc2_l, vec_l = [], [], [], [], []
    for blk in params['blocks']:
        # TODO(synk): fused-qkv column order (q|k|v major, then head, then within-head)
        # must be re-verified against the real torch.hub checkpoint before a real port.
        wqkv = blk['wqkv'].at[:, :D].multiply(scale)   # fold softmax scale into q
        bqkv = blk['bqkv'].at[:, :D].multiply(scale)
        wproj = blk['wproj'] * blk['g1']               # fold LayerScale gamma_1
        bproj = blk['bproj'] * blk['g1']
        wfc2 = blk['wfc2'] * blk['g2']                 # fold LayerScale gamma_2
        bfc2 = blk['bfc2'] * blk['g2']
        wqkv_l.append(wqkv.astype(cdt))
        wproj_l.append(wproj.astype(cdt))
        wfc1_l.append(blk['wfc1'].astype(cdt))
        wfc2_l.append(wfc2.astype(cdt))
        vec_l.append(jnp.concatenate([
            pad_row(blk['wn1']), pad_row(blk['bn1']), pad_row(bqkv), pad_row(bproj),
            pad_row(blk['wn2']), pad_row(blk['bn2']), blk['bfc1'], pad_row(bfc2)],
            axis=0))                                   # (8, MLP)

    return {
        'tokb':    tokb,                                                   # (T_PAD, D) f32
        'norm_wb': jnp.concatenate([params['norm_w'], params['norm_b']], axis=0),
        'patch_w': params['patch_w'].astype(cdt),                          # (K, D) bf16
        'wqkv':    jnp.stack(wqkv_l),                                      # (L, D, 3D) bf16
        'wproj':   jnp.stack(wproj_l),                                     # (L, D, D) bf16
        'wfc1':    jnp.stack(wfc1_l),                                      # (L, D, MLP) bf16
        'wfc2':    jnp.stack(wfc2_l),                                      # (L, MLP, D) bf16
        'vecs':    jnp.stack(vec_l),                                       # (L, 8, MLP) f32
    }


# ---------------- forward ----------------

def dinov2_forward(params, x):
    """x: (B, C, H, W) float32, NCHW like the PyTorch module."""
    B, C, Himg, Wimg = x.shape
    P = Himg // PATCH
    N = P * P
    K = C * PATCH * PATCH

    # Conv2d(kernel=stride=PATCH) == non-overlapping patch extraction + matmul.
    patches = x.reshape(B, C, P, PATCH, P, PATCH)
    patches = patches.transpose(0, 2, 4, 1, 3, 5).reshape(B, N, K)
    # zero row 0 (cls slot; cls+pos baked into tokb) + zero pad to T_PAD tokens,
    # then flatten the batch into the matmul M dim and cast the MXU operand to bf16.
    patches = jnp.pad(patches, ((0, 0), (1, T_PAD - 1 - N), (0, 0)))
    patches = patches.reshape(B * T_PAD, K).astype(jnp.bfloat16)

    w = prep_weights(params)                 # param-only math; constant under jit
    out = vit_forward(patches, w)            # (B*T_PAD, D)
    out = out.reshape(B, T_PAD, EMBED)[:, :N + 1]   # drop padding rows

    cls_tok = out[:, 0, :]                                        # (B, D)
    patch_emb = out[:, 1:, :]                                     # (B, N, D)
    feature_map = patch_emb.reshape(B, P, P, EMBED).transpose(0, 3, 1, 2)  # (B, D, P, P)
    return {'patch_embeddings': patch_emb,
            'embedding': cls_tok,
            'feature_map': feature_map}


# ---------------- pure-JAX reference (for correctness check) ----------------

def reference_forward(params, x):
    B, C, Himg, Wimg = x.shape
    P = Himg // PATCH
    N = P * P
    T = N + 1
    patches = x.reshape(B, C, P, PATCH, P, PATCH).transpose(0, 2, 4, 1, 3, 5)
    patches = patches.reshape(B, N, C * PATCH * PATCH)
    tok = patches @ params['patch_w'] + params['patch_b']
    cls = jnp.broadcast_to(params['cls'], (B, 1, EMBED))
    xs = jnp.concatenate([cls, tok], axis=1) + params['pos']
    for blk in params['blocks']:
        xn = _ln(xs, blk['wn1'], blk['bn1'])
        qkv = xn @ blk['wqkv'] + blk['bqkv']
        q, k, v = (qkv[..., :EMBED], qkv[..., EMBED:2 * EMBED], qkv[..., 2 * EMBED:])
        q = q.reshape(B, T, HEADS, HEAD_DIM).transpose(0, 2, 1, 3)
        k = k.reshape(B, T, HEADS, HEAD_DIM).transpose(0, 2, 1, 3)
        v = v.reshape(B, T, HEADS, HEAD_DIM).transpose(0, 2, 1, 3)
        s = jnp.einsum('bhtd,bhsd->bhts', q, k) * HEAD_DIM ** -0.5
        p = jax.nn.softmax(s, axis=-1)
        o = jnp.einsum('bhts,bhsd->bhtd', p, v).transpose(0, 2, 1, 3).reshape(B, T, EMBED)
        attn = o @ blk['wproj'] + blk['bproj']
        xs = xs + blk['g1'] * attn
        xn2 = _ln(xs, blk['wn2'], blk['bn2'])
        h1 = jax.nn.gelu(xn2 @ blk['wfc1'] + blk['bfc1'], approximate=True)
        xs = xs + blk['g2'] * (h1 @ blk['wfc2'] + blk['bfc2'])
    return _ln(xs, params['norm_w'], params['norm_b'])


if __name__ == "__main__":
    x = jax.random.normal(jax.random.PRNGKey(0), (2, IN_CH, IMG, IMG), dtype=jnp.float32)
    params = init_params(jax.random.PRNGKey(42))

    fwd = jax.jit(lambda inp: dinov2_forward(params, inp))
    out = fwd(x)
    jax.block_until_ready(out)

    P = IMG // PATCH
    assert out['patch_embeddings'].shape == (2, P * P, EMBED)
    assert out['embedding'].shape == (2, EMBED)
    assert out['feature_map'].shape == (2, EMBED, P, P)
    assert bool(jnp.all(jnp.isfinite(out['patch_embeddings'])))
    assert bool(jnp.all(jnp.isfinite(out['embedding'])))

    # Reference is pure f32; the kernel uses bf16 MXU operands with f32 accumulate,
    # so the tolerance includes bf16 quantization of weights/patches.
    ref = reference_forward(params, x)
    assert bool(jnp.allclose(out['patch_embeddings'], ref[:, 1:, :], atol=3e-2, rtol=3e-2))
    assert bool(jnp.allclose(out['embedding'], ref[:, 0, :], atol=3e-2, rtol=3e-2))
    print("KERNEL_OK")
</pallas_src>

<mosaic_0001>
module attributes {stable_mosaic.version = 11 : i64} {
  func.func @vit_kernel(%arg0: i32, %arg1: memref<48x48xbf16, #tpu.memory_space<vmem>>, %arg2: memref<48x32xf32, #tpu.memory_space<vmem>>, %arg3: memref<48x48xf32, #tpu.memory_space<vmem>>, %arg4: memref<2x32xf32, #tpu.memory_space<vmem>>, %arg5: memref<48x32xbf16, #tpu.memory_space<vmem>>, %arg6: memref<2x32x96xbf16, #tpu.memory_space<vmem>>, %arg7: memref<2x32x32xbf16, #tpu.memory_space<vmem>>, %arg8: memref<2x32x128xbf16, #tpu.memory_space<vmem>>, %arg9: memref<2x128x32xbf16, #tpu.memory_space<vmem>>, %arg10: memref<2x8x128xf32, #tpu.memory_space<vmem>>, %arg11: memref<48x32xf32, #tpu.memory_space<vmem>>) attributes {dimension_semantics = [#tpu.dimension_semantics<parallel>], iteration_bounds = array<i64: 1>, scalar_prefetch = 0 : i64, scratch_operands = 0 : i64, tpu.core_type = #tpu.core_type<tc>, window_params = [{transform_indices = @transform_0, window_bounds = array<i64: 48, 48>}, {pipeline_mode = #tpu.pipeline_mode<synchronous>, transform_indices = @transform_1, window_bounds = array<i64: 48, 32>}, {pipeline_mode = #tpu.pipeline_mode<synchronous>, transform_indices = @transform_2, window_bounds = array<i64: 48, 48>}, {pipeline_mode = #tpu.pipeline_mode<synchronous>, transform_indices = @transform_3, window_bounds = array<i64: 2, 32>}, {pipeline_mode = #tpu.pipeline_mode<synchronous>, transform_indices = @transform_4, window_bounds = array<i64: 48, 32>}, {pipeline_mode = #tpu.pipeline_mode<synchronous>, transform_indices = @transform_5, window_bounds = array<i64: 2, 32, 96>}, {pipeline_mode = #tpu.pipeline_mode<synchronous>, transform_indices = @transform_6, window_bounds = array<i64: 2, 32, 32>}, {pipeline_mode = #tpu.pipeline_mode<synchronous>, transform_indices = @transform_7, window_bounds = array<i64: 2, 32, 128>}, {pipeline_mode = #tpu.pipeline_mode<synchronous>, transform_indices = @transform_8, window_bounds = array<i64: 2, 128, 32>}, {pipeline_mode = #tpu.pipeline_mode<synchronous>, transform_indices = @transform_9, window_bounds = array<i64: 2, 8, 128>}, {transform_indices = @transform_10, window_bounds = array<i64: 48, 32>}]} {
    %c0 = arith.constant 0 : index
    %c0_0 = arith.constant 0 : index
    %0 = vector.load %arg4[%c0, %c0_0] : memref<2x32xf32, #tpu.memory_space<vmem>>, vector<1x32xf32>
    %c1 = arith.constant 1 : index
    %c0_1 = arith.constant 0 : index
    %1 = vector.load %arg4[%c1, %c0_1] : memref<2x32xf32, #tpu.memory_space<vmem>>, vector<1x32xf32>
    %c0_2 = arith.constant 0 : index
    %c0_3 = arith.constant 0 : index
    %2 = vector.load %arg3[%c0_2, %c0_3] : memref<48x48xf32, #tpu.memory_space<vmem>>, vector<48x48xf32>
    %c0_4 = arith.constant 0 : index
    %c0_5 = arith.constant 0 : index
    %3 = vector.load %arg1[%c0_4, %c0_5] : memref<48x48xbf16, #tpu.memory_space<vmem>>, vector<48x48xbf16>
    %c0_6 = arith.constant 0 : index
    %c0_7 = arith.constant 0 : index
    %4 = vector.load %arg5[%c0_6, %c0_7] : memref<48x32xbf16, #tpu.memory_space<vmem>>, vector<48x32xbf16>
    %cst = arith.constant dense<0.000000e+00> : vector<48x32xf32>
    %5 = tpu.matmul %3, %4, %cst {dimension_numbers = #tpu.dot_dimension_numbers<[1], [0], [0], [1], [0, 0, 1, 1], [], []>} : vector<48x48xbf16>, vector<48x32xbf16>, vector<48x32xf32> -> vector<48x32xf32>
    %c0_8 = arith.constant 0 : index
    %c0_9 = arith.constant 0 : index
    %6 = vector.load %arg2[%c0_8, %c0_9] : memref<48x32xf32, #tpu.memory_space<vmem>>, vector<48x32xf32>
    %7 = arith.addf %5, %6 : vector<48x32xf32>
    %c0_10 = arith.constant 0 : index
    %c0_11 = arith.constant 0 : index
    %c0_12 = arith.constant 0 : index
    %8 = vector.load %arg10[%c0_10, %c0_11, %c0_12] : memref<2x8x128xf32, #tpu.memory_space<vmem>>, vector<1x8x128xf32>
    %9 = vector.shape_cast %8 : vector<1x8x128xf32> to vector<8x128xf32>
    %10 = vector.extract_strided_slice %9 {offsets = [0, 0], sizes = [1, 32], strides = [1, 1]} : vector<8x128xf32> to vector<1x32xf32>
    %11 = vector.extract_strided_slice %9 {offsets = [1, 0], sizes = [1, 32], strides = [1, 1]} : vector<8x128xf32> to vector<1x32xf32>
    %12 = vector.extract_strided_slice %9 {offsets = [2, 0], sizes = [1, 96], strides = [1, 1]} : vector<8x128xf32> to vector<1x96xf32>
    %13 = vector.extract_strided_slice %9 {offsets = [3, 0], sizes = [1, 32], strides = [1, 1]} : vector<8x128xf32> to vector<1x32xf32>
    %14 = vector.extract_strided_slice %9 {offsets = [4, 0], sizes = [1, 32], strides = [1, 1]} : vector<8x128xf32> to vector<1x32xf32>
    %15 = vector.extract_strided_slice %9 {offsets = [5, 0], sizes = [1, 32], strides = [1, 1]} : vector<8x128xf32> to vector<1x32xf32>
    %16 = vector.extract_strided_slice %9 {offsets = [6, 0], sizes = [1, 128], strides = [1, 1]} : vector<8x128xf32> to vector<1x128xf32>
    %17 = vector.extract_strided_slice %9 {offsets = [7, 0], sizes = [1, 32], strides = [1, 1]} : vector<8x128xf32> to vector<1x32xf32>
    %cst_13 = arith.constant dense<0.000000e+00> : vector<48xf32>
    %18 = vector.multi_reduction <add>, %7, %cst_13 [1] : vector<48x32xf32> to vector<48xf32>
    %19 = vector.shape_cast %18 : vector<48xf32> to vector<48x1xf32>
    %cst_14 = arith.constant 3.200000e+01 : f32
    %20 = vector.broadcast %cst_14 : f32 to vector<48x1xf32>
    %21 = arith.divf %19, %20 : vector<48x1xf32>
    %22 = vector.broadcast %21 : vector<48x1xf32> to vector<48x32xf32>
    %23 = arith.subf %7, %22 : vector<48x32xf32>
    %24 = arith.mulf %23, %23 : vector<48x32xf32>
    %cst_15 = arith.constant dense<0.000000e+00> : vector<48xf32>
    %25 = vector.multi_reduction <add>, %24, %cst_15 [1] : vector<48x32xf32> to vector<48xf32>
    %26 = vector.shape_cast %25 : vector<48xf32> to vector<48x1xf32>
    %cst_16 = arith.constant 3.200000e+01 : f32
    %27 = vector.broadcast %cst_16 : f32 to vector<48x1xf32>
    %28 = arith.divf %26, %27 : vector<48x1xf32>
    %29 = vector.broadcast %21 : vector<48x1xf32> to vector<48x32xf32>
    %30 = arith.subf %7, %29 : vector<48x32xf32>
    %cst_17 = arith.constant 9.99999997E-7 : f32
    %31 = vector.broadcast %cst_17 : f32 to vector<48x1xf32>
    %32 = arith.addf %28, %31 : vector<48x1xf32>
    %33 = math.rsqrt %32 : vector<48x1xf32>
    %34 = vector.broadcast %33 : vector<48x1xf32> to vector<48x32xf32>
    %35 = arith.mulf %30, %34 : vector<48x32xf32>
    %36 = vector.broadcast %10 : vector<1x32xf32> to vector<48x32xf32>
    %37 = arith.mulf %35, %36 : vector<48x32xf32>
    %38 = vector.broadcast %11 : vector<1x32xf32> to vector<48x32xf32>
    %39 = arith.addf %37, %38 : vector<48x32xf32>
    %40 = arith.truncf %39 : vector<48x32xf32> to vector<48x32xbf16>
    %c0_18 = arith.constant 0 : index
    %c0_19 = arith.constant 0 : index
    %c0_20 = arith.constant 0 : index
    %41 = vector.load %arg6[%c0_18, %c0_19, %c0_20] : memref<2x32x96xbf16, #tpu.memory_space<vmem>>, vector<1x32x96xbf16>
    %42 = vector.shape_cast %41 : vector<1x32x96xbf16> to vector<32x96xbf16>
    %cst_21 = arith.constant dense<0.000000e+00> : vector<48x96xf32>
    %43 = tpu.matmul %40, %42, %cst_21 {dimension_numbers = #tpu.dot_dimension_numbers<[1], [0], [0], [1], [0, 0, 1, 1], [], []>} : vector<48x32xbf16>, vector<32x96xbf16>, vector<48x96xf32> -> vector<48x96xf32>
    %44 = vector.broadcast %12 : vector<1x96xf32> to vector<48x96xf32>
    %45 = arith.addf %43, %44 : vector<48x96xf32>
    %46 = vector.extract_strided_slice %45 {offsets = [0, 0], sizes = [48, 8], strides = [1, 1]} : vector<48x96xf32> to vector<48x8xf32>
    %47 = arith.truncf %46 : vector<48x8xf32> to vector<48x8xbf16>
    %48 = vector.extract_strided_slice %45 {offsets = [0, 32], sizes = [48, 8], strides = [1, 1]} : vector<48x96xf32> to vector<48x8xf32>
    %49 = arith.truncf %48 : vector<48x8xf32> to vector<48x8xbf16>
    %50 = vector.extract_strided_slice %45 {offsets = [0, 64], sizes = [48, 8], strides = [1, 1]} : vector<48x96xf32> to vector<48x8xf32>
    %51 = arith.truncf %50 : vector<48x8xf32> to vector<48x8xbf16>
    %cst_22 = arith.constant dense<0.000000e+00> : vector<48x48xf32>
    %52 = tpu.matmul %47, %49, %cst_22 {dimension_numbers = #tpu.dot_dimension_numbers<[1], [1], [0], [0], [0, 0, 1, 0], [], []>} : vector<48x8xbf16>, vector<48x8xbf16>, vector<48x48xf32> -> vector<48x48xf32>
    %53 = arith.addf %52, %2 : vector<48x48xf32>
    %cst_23 = arith.constant dense<0xFF800000> : vector<48xf32>
    %54 = vector.multi_reduction <maximumf>, %53, %cst_23 [1] : vector<48x48xf32> to vector<48xf32>
    %55 = vector.shape_cast %54 : vector<48xf32> to vector<48x1xf32>
    %56 = vector.broadcast %55 : vector<48x1xf32> to vector<48x48xf32>
    %57 = arith.subf %53, %56 : vector<48x48xf32>
    %58 = math.exp %57 : vector<48x48xf32>
    %cst_24 = arith.constant dense<0.000000e+00> : vector<48xf32>
    %59 = vector.multi_reduction <add>, %58, %cst_24 [1] : vector<48x48xf32> to vector<48xf32>
    %60 = vector.shape_cast %59 : vector<48xf32> to vector<48x1xf32>
    %61 = tpu.reciprocal %60 : vector<48x1xf32> -> vector<48x1xf32>
    %62 = vector.broadcast %61 : vector<48x1xf32> to vector<48x48xf32>
    %63 = arith.mulf %58, %62 : vector<48x48xf32>
    %64 = arith.truncf %63 : vector<48x48xf32> to vector<48x48xbf16>
    %cst_25 = arith.constant dense<0.000000e+00> : vector<48x8xf32>
    %65 = tpu.matmul %64, %51, %cst_25 {dimension_numbers = #tpu.dot_dimension_numbers<[1], [0], [0], [1], [0, 0, 1, 1], [], []>} : vector<48x48xbf16>, vector<48x8xbf16>, vector<48x8xf32> -> vector<48x8xf32>
    %66 = vector.extract_strided_slice %45 {offsets = [0, 8], sizes = [48, 8], strides = [1, 1]} : vector<48x96xf32> to vector<48x8xf32>
    %67 = arith.truncf %66 : vector<48x8xf32> to vector<48x8xbf16>
    %68 = vector.extract_strided_slice %45 {offsets = [0, 40], sizes = [48, 8], strides = [1, 1]} : vector<48x96xf32> to vector<48x8xf32>
    %69 = arith.truncf %68 : vector<48x8xf32> to vector<48x8xbf16>
    %70 = vector.extract_strided_slice %45 {offsets = [0, 72], sizes = [48, 8], strides = [1, 1]} : vector<48x96xf32> to vector<48x8xf32>
    %71 = arith.truncf %70 : vector<48x8xf32> to vector<48x8xbf16>
    %cst_26 = arith.constant dense<0.000000e+00> : vector<48x48xf32>
    %72 = tpu.matmul %67, %69, %cst_26 {dimension_numbers = #tpu.dot_dimension_numbers<[1], [1], [0], [0], [0, 0, 1, 0], [], []>} : vector<48x8xbf16>, vector<48x8xbf16>, vector<48x48xf32> -> vector<48x48xf32>
    %73 = arith.addf %72, %2 : vector<48x48xf32>
    %cst_27 = arith.constant dense<0xFF800000> : vector<48xf32>
    %74 = vector.multi_reduction <maximumf>, %73, %cst_27 [1] : vector<48x48xf32> to vector<48xf32>
    %75 = vector.shape_cast %74 : vector<48xf32> to vector<48x1xf32>
    %76 = vector.broadcast %75 : vector<48x1xf32> to vector<48x48xf32>
    %77 = arith.subf %73, %76 : vector<48x48xf32>
    %78 = math.exp %77 : vector<48x48xf32>
    %cst_28 = arith.constant dense<0.000000e+00> : vector<48xf32>
    %79 = vector.multi_reduction <add>, %78, %cst_28 [1] : vector<48x48xf32> to vector<48xf32>
    %80 = vector.shape_cast %79 : vector<48xf32> to vector<48x1xf32>
    %81 = tpu.reciprocal %80 : vector<48x1xf32> -> vector<48x1xf32>
    %82 = vector.broadcast %81 : vector<48x1xf32> to vector<48x48xf32>
    %83 = arith.mulf %78, %82 : vector<48x48xf32>
    %84 = arith.truncf %83 : vector<48x48xf32> to vector<48x48xbf16>
    %cst_29 = arith.constant dense<0.000000e+00> : vector<48x8xf32>
    %85 = tpu.matmul %84, %71, %cst_29 {dimension_numbers = #tpu.dot_dimension_numbers<[1], [0], [0], [1], [0, 0, 1, 1], [], []>} : vector<48x48xbf16>, vector<48x8xbf16>, vector<48x8xf32> -> vector<48x8xf32>
    %86 = vector.extract_strided_slice %45 {offsets = [0, 16], sizes = [48, 8], strides = [1, 1]} : vector<48x96xf32> to vector<48x8xf32>
    %87 = arith.truncf %86 : vector<48x8xf32> to vector<48x8xbf16>
    %88 = vector.extract_strided_slice %45 {offsets = [0, 48], sizes = [48, 8], strides = [1, 1]} : vector<48x96xf32> to vector<48x8xf32>
    %89 = arith.truncf %88 : vector<48x8xf32> to vector<48x8xbf16>
    %90 = vector.extract_strided_slice %45 {offsets = [0, 80], sizes = [48, 8], strides = [1, 1]} : vector<48x96xf32> to vector<48x8xf32>
    %91 = arith.truncf %90 : vector<48x8xf32> to vector<48x8xbf16>
    %cst_30 = arith.constant dense<0.000000e+00> : vector<48x48xf32>
    %92 = tpu.matmul %87, %89, %cst_30 {dimension_numbers = #tpu.dot_dimension_numbers<[1], [1], [0], [0], [0, 0, 1, 0], [], []>} : vector<48x8xbf16>, vector<48x8xbf16>, vector<48x48xf32> -> vector<48x48xf32>
    %93 = arith.addf %92, %2 : vector<48x48xf32>
    %cst_31 = arith.constant dense<0xFF800000> : vector<48xf32>
    %94 = vector.multi_reduction <maximumf>, %93, %cst_31 [1] : vector<48x48xf32> to vector<48xf32>
    %95 = vector.shape_cast %94 : vector<48xf32> to vector<48x1xf32>
    %96 = vector.broadcast %95 : vector<48x1xf32> to vector<48x48xf32>
    %97 = arith.subf %93, %96 : vector<48x48xf32>
    %98 = math.exp %97 : vector<48x48xf32>
    %cst_32 = arith.constant dense<0.000000e+00> : vector<48xf32>
    %99 = vector.multi_reduction <add>, %98, %cst_32 [1] : vector<48x48xf32> to vector<48xf32>
    %100 = vector.shape_cast %99 : vector<48xf32> to vector<48x1xf32>
    %101 = tpu.reciprocal %100 : vector<48x1xf32> -> vector<48x1xf32>
    %102 = vector.broadcast %101 : vector<48x1xf32> to vector<48x48xf32>
    %103 = arith.mulf %98, %102 : vector<48x48xf32>
    %104 = arith.truncf %103 : vector<48x48xf32> to vector<48x48xbf16>
    %cst_33 = arith.constant dense<0.000000e+00> : vector<48x8xf32>
    %105 = tpu.matmul %104, %91, %cst_33 {dimension_numbers = #tpu.dot_dimension_numbers<[1], [0], [0], [1], [0, 0, 1, 1], [], []>} : vector<48x48xbf16>, vector<48x8xbf16>, vector<48x8xf32> -> vector<48x8xf32>
    %106 = vector.extract_strided_slice %45 {offsets = [0, 24], sizes = [48, 8], strides = [1, 1]} : vector<48x96xf32> to vector<48x8xf32>
    %107 = arith.truncf %106 : vector<48x8xf32> to vector<48x8xbf16>
    %108 = vector.extract_strided_slice %45 {offsets = [0, 56], sizes = [48, 8], strides = [1, 1]} : vector<48x96xf32> to vector<48x8xf32>
    %109 = arith.truncf %108 : vector<48x8xf32> to vector<48x8xbf16>
    %110 = vector.extract_strided_slice %45 {offsets = [0, 88], sizes = [48, 8], strides = [1, 1]} : vector<48x96xf32> to vector<48x8xf32>
    %111 = arith.truncf %110 : vector<48x8xf32> to vector<48x8xbf16>
    %cst_34 = arith.constant dense<0.000000e+00> : vector<48x48xf32>
    %112 = tpu.matmul %107, %109, %cst_34 {dimension_numbers = #tpu.dot_dimension_numbers<[1], [1], [0], [0], [0, 0, 1, 0], [], []>} : vector<48x8xbf16>, vector<48x8xbf16>, vector<48x48xf32> -> vector<48x48xf32>
    %113 = arith.addf %112, %2 : vector<48x48xf32>
    %cst_35 = arith.constant dense<0xFF800000> : vector<48xf32>
    %114 = vector.multi_reduction <maximumf>, %113, %cst_35 [1] : vector<48x48xf32> to vector<48xf32>
    %115 = vector.shape_cast %114 : vector<48xf32> to vector<48x1xf32>
    %116 = vector.broadcast %115 : vector<48x1xf32> to vector<48x48xf32>
    %117 = arith.subf %113, %116 : vector<48x48xf32>
    %118 = math.exp %117 : vector<48x48xf32>
    %cst_36 = arith.constant dense<0.000000e+00> : vector<48xf32>
    %119 = vector.multi_reduction <add>, %118, %cst_36 [1] : vector<48x48xf32> to vector<48xf32>
    %120 = vector.shape_cast %119 : vector<48xf32> to vector<48x1xf32>
    %121 = tpu.reciprocal %120 : vector<48x1xf32> -> vector<48x1xf32>
    %122 = vector.broadcast %121 : vector<48x1xf32> to vector<48x48xf32>
    %123 = arith.mulf %118, %122 : vector<48x48xf32>
    %124 = arith.truncf %123 : vector<48x48xf32> to vector<48x48xbf16>
    %cst_37 = arith.constant dense<0.000000e+00> : vector<48x8xf32>
    %125 = tpu.matmul %124, %111, %cst_37 {dimension_numbers = #tpu.dot_dimension_numbers<[1], [0], [0], [1], [0, 0, 1, 1], [], []>} : vector<48x48xbf16>, vector<48x8xbf16>, vector<48x8xf32> -> vector<48x8xf32>
    %126 = tpu.concatenate %65, %85, %105, %125 in 1 : vector<48x8xf32>, vector<48x8xf32>, vector<48x8xf32>, vector<48x8xf32> -> vector<48x32xf32>
    %127 = arith.truncf %126 : vector<48x32xf32> to vector<48x32xbf16>
    %c0_38 = arith.constant 0 : index
    %c0_39 = arith.constant 0 : index
    %c0_40 = arith.constant 0 : index
    %128 = vector.load %arg7[%c0_38, %c0_39, %c0_40] : memref<2x32x32xbf16, #tpu.memory_space<vmem>>, vector<1x32x32xbf16>
    %129 = vector.shape_cast %128 : vector<1x32x32xbf16> to vector<32x32xbf16>
    %cst_41 = arith.constant dense<0.000000e+00> : vector<48x32xf32>
    %130 = tpu.matmul %127, %129, %cst_41 {dimension_numbers = #tpu.dot_dimension_numbers<[1], [0], [0], [1], [0, 0, 1, 1], [], []>} : vector<48x32xbf16>, vector<32x32xbf16>, vector<48x32xf32> -> vector<48x32xf32>
    %131 = vector.broadcast %13 : vector<1x32xf32> to vector<48x32xf32>
    %132 = arith.addf %130, %131 : vector<48x32xf32>
    %133 = arith.addf %7, %132 : vector<48x32xf32>
    %cst_42 = arith.constant dense<0.000000e+00> : vector<48xf32>
    %134 = vector.multi_reduction <add>, %133, %cst_42 [1] : vector<48x32xf32> to vector<48xf32>
    %135 = vector.shape_cast %134 : vector<48xf32> to vector<48x1xf32>
    %cst_43 = arith.constant 3.200000e+01 : f32
    %136 = vector.broadcast %cst_43 : f32 to vector<48x1xf32>
    %137 = arith.divf %135, %136 : vector<48x1xf32>
    %138 = vector.broadcast %137 : vector<48x1xf32> to vector<48x32xf32>
    %139 = arith.subf %133, %138 : vector<48x32xf32>
    %140 = arith.mulf %139, %139 : vector<48x32xf32>
    %cst_44 = arith.constant dense<0.000000e+00> : vector<48xf32>
    %141 = vector.multi_reduction <add>, %140, %cst_44 [1] : vector<48x32xf32> to vector<48xf32>
    %142 = vector.shape_cast %141 : vector<48xf32> to vector<48x1xf32>
    %cst_45 = arith.constant 3.200000e+01 : f32
    %143 = vector.broadcast %cst_45 : f32 to vector<48x1xf32>
    %144 = arith.divf %142, %143 : vector<48x1xf32>
    %145 = vector.broadcast %137 : vector<48x1xf32> to vector<48x32xf32>
    %146 = arith.subf %133, %145 : vector<48x32xf32>
    %cst_46 = arith.constant 9.99999997E-7 : f32
    %147 = vector.broadcast %cst_46 : f32 to vector<48x1xf32>
    %148 = arith.addf %144, %147 : vector<48x1xf32>
    %149 = math.rsqrt %148 : vector<48x1xf32>
    %150 = vector.broadcast %149 : vector<48x1xf32> to vector<48x32xf32>
    %151 = arith.mulf %146, %150 : vector<48x32xf32>
    %152 = vector.broadcast %14 : vector<1x32xf32> to vector<48x32xf32>
    %153 = arith.mulf %151, %152 : vector<48x32xf32>
    %154 = vector.broadcast %15 : vector<1x32xf32> to vector<48x32xf32>
    %155 = arith.addf %153, %154 : vector<48x32xf32>
    %156 = arith.truncf %155 : vector<48x32xf32> to vector<48x32xbf16>
    %c0_47 = arith.constant 0 : index
    %c0_48 = arith.constant 0 : index
    %c0_49 = arith.constant 0 : index
    %157 = vector.load %arg8[%c0_47, %c0_48, %c0_49] : memref<2x32x128xbf16, #tpu.memory_space<vmem>>, vector<1x32x128xbf16>
    %158 = vector.shape_cast %157 : vector<1x32x128xbf16> to vector<32x128xbf16>
    %cst_50 = arith.constant dense<0.000000e+00> : vector<48x128xf32>
    %159 = tpu.matmul %156, %158, %cst_50 {dimension_numbers = #tpu.dot_dimension_numbers<[1], [0], [0], [1], [0, 0, 1, 1], [], []>} : vector<48x32xbf16>, vector<32x128xbf16>, vector<48x128xf32> -> vector<48x128xf32>
    %160 = vector.broadcast %16 : vector<1x128xf32> to vector<48x128xf32>
    %161 = arith.addf %159, %160 : vector<48x128xf32>
    %162 = arith.mulf %161, %161 : vector<48x128xf32>
    %163 = arith.mulf %161, %162 : vector<48x128xf32>
    %cst_51 = arith.constant 4.471500e-02 : f32
    %164 = vector.broadcast %cst_51 : f32 to vector<48x128xf32>
    %165 = arith.mulf %164, %163 : vector<48x128xf32>
    %166 = arith.addf %161, %165 : vector<48x128xf32>
    %cst_52 = arith.constant 0.797884583 : f32
    %167 = vector.broadcast %cst_52 : f32 to vector<48x128xf32>
    %168 = arith.mulf %167, %166 : vector<48x128xf32>
    %169 = math.tanh %168 : vector<48x128xf32>
    %cst_53 = arith.constant 1.000000e+00 : f32
    %170 = vector.broadcast %cst_53 : f32 to vector<48x128xf32>
    %171 = arith.addf %170, %169 : vector<48x128xf32>
    %cst_54 = arith.constant 5.000000e-01 : f32
    %172 = vector.broadcast %cst_54 : f32 to vector<48x128xf32>
    %173 = arith.mulf %172, %171 : vector<48x128xf32>
    %174 = arith.mulf %161, %173 : vector<48x128xf32>
    %175 = arith.truncf %174 : vector<48x128xf32> to vector<48x128xbf16>
    %c0_55 = arith.constant 0 : index
    %c0_56 = arith.constant 0 : index
    %c0_57 = arith.constant 0 : index
    %176 = vector.load %arg9[%c0_55, %c0_56, %c0_57] : memref<2x128x32xbf16, #tpu.memory_space<vmem>>, vector<1x128x32xbf16>
    %177 = vector.shape_cast %176 : vector<1x128x32xbf16> to vector<128x32xbf16>
    %cst_58 = arith.constant dense<0.000000e+00> : vector<48x32xf32>
    %178 = tpu.matmul %175, %177, %cst_58 {dimension_numbers = #tpu.dot_dimension_numbers<[1], [0], [0], [1], [0, 0, 1, 1], [], []>} : vector<48x128xbf16>, vector<128x32xbf16>, vector<48x32xf32> -> vector<48x32xf32>
    %179 = vector.broadcast %17 : vector<1x32xf32> to vector<48x32xf32>
    %180 = arith.addf %178, %179 : vector<48x32xf32>
    %181 = arith.addf %133, %180 : vector<48x32xf32>
    %c1_59 = arith.constant 1 : index
    %c0_60 = arith.constant 0 : index
    %c0_61 = arith.constant 0 : index
    %182 = vector.load %arg10[%c1_59, %c0_60, %c0_61] : memref<2x8x128xf32, #tpu.memory_space<vmem>>, vector<1x8x128xf32>
    %183 = vector.shape_cast %182 : vector<1x8x128xf32> to vector<8x128xf32>
    %184 = vector.extract_strided_slice %183 {offsets = [0, 0], sizes = [1, 32], strides = [1, 1]} : vector<8x128xf32> to vector<1x32xf32>
    %185 = vector.extract_strided_slice %183 {offsets = [1, 0], sizes = [1, 32], strides = [1, 1]} : vector<8x128xf32> to vector<1x32xf32>
    %186 = vector.extract_strided_slice %183 {offsets = [2, 0], sizes = [1, 96], strides = [1, 1]} : vector<8x128xf32> to vector<1x96xf32>
    %187 = vector.extract_strided_slice %183 {offsets = [3, 0], sizes = [1, 32], strides = [1, 1]} : vector<8x128xf32> to vector<1x32xf32>
    %188 = vector.extract_strided_slice %183 {offsets = [4, 0], sizes = [1, 32], strides = [1, 1]} : vector<8x128xf32> to vector<1x32xf32>
    %189 = vector.extract_strided_slice %183 {offsets = [5, 0], sizes = [1, 32], strides = [1, 1]} : vector<8x128xf32> to vector<1x32xf32>
    %190 = vector.extract_strided_slice %183 {offsets = [6, 0], sizes = [1, 128], strides = [1, 1]} : vector<8x128xf32> to vector<1x128xf32>
    %191 = vector.extract_strided_slice %183 {offsets = [7, 0], sizes = [1, 32], strides = [1, 1]} : vector<8x128xf32> to vector<1x32xf32>
    %cst_62 = arith.constant dense<0.000000e+00> : vector<48xf32>
    %192 = vector.multi_reduction <add>, %181, %cst_62 [1] : vector<48x32xf32> to vector<48xf32>
    %193 = vector.shape_cast %192 : vector<48xf32> to vector<48x1xf32>
    %cst_63 = arith.constant 3.200000e+01 : f32
    %194 = vector.broadcast %cst_63 : f32 to vector<48x1xf32>
    %195 = arith.divf %193, %194 : vector<48x1xf32>
    %196 = vector.broadcast %195 : vector<48x1xf32> to vector<48x32xf32>
    %197 = arith.subf %181, %196 : vector<48x32xf32>
    %198 = arith.mulf %197, %197 : vector<48x32xf32>
    %cst_64 = arith.constant dense<0.000000e+00> : vector<48xf32>
    %199 = vector.multi_reduction <add>, %198, %cst_64 [1] : vector<48x32xf32> to vector<48xf32>
    %200 = vector.shape_cast %199 : vector<48xf32> to vector<48x1xf32>
    %cst_65 = arith.constant 3.200000e+01 : f32
    %201 = vector.broadcast %cst_65 : f32 to vector<48x1xf32>
    %202 = arith.divf %200, %201 : vector<48x1xf32>
    %203 = vector.broadcast %195 : vector<48x1xf32> to vector<48x32xf32>
    %204 = arith.subf %181, %203 : vector<48x32xf32>
    %cst_66 = arith.constant 9.99999997E-7 : f32
    %205 = vector.broadcast %cst_66 : f32 to vector<48x1xf32>
    %206 = arith.addf %202, %205 : vector<48x1xf32>
    %207 = math.rsqrt %206 : vector<48x1xf32>
    %208 = vector.broadcast %207 : vector<48x1xf32> to vector<48x32xf32>
    %209 = arith.mulf %204, %208 : vector<48x32xf32>
    %210 = vector.broadcast %184 : vector<1x32xf32> to vector<48x32xf32>
    %211 = arith.mulf %209, %210 : vector<48x32xf32>
    %212 = vector.broadcast %185 : vector<1x32xf32> to vector<48x32xf32>
    %213 = arith.addf %211, %212 : vector<48x32xf32>
    %214 = arith.truncf %213 : vector<48x32xf32> to vector<48x32xbf16>
    %c1_67 = arith.constant 1 : index
    %c0_68 = arith.constant 0 : index
    %c0_69 = arith.constant 0 : index
    %215 = vector.load %arg6[%c1_67, %c0_68, %c0_69] : memref<2x32x96xbf16, #tpu.memory_space<vmem>>, vector<1x32x96xbf16>
    %216 = vector.shape_cast %215 : vector<1x32x96xbf16> to vector<32x96xbf16>
    %cst_70 = arith.constant dense<0.000000e+00> : vector<48x96xf32>
    %217 = tpu.matmul %214, %216, %cst_70 {dimension_numbers = #tpu.dot_dimension_numbers<[1], [0], [0], [1], [0, 0, 1, 1], [], []>} : vector<48x32xbf16>, vector<32x96xbf16>, vector<48x96xf32> -> vector<48x96xf32>
    %218 = vector.broadcast %186 : vector<1x96xf32> to vector<48x96xf32>
    %219 = arith.addf %217, %218 : vector<48x96xf32>
    %220 = vector.extract_strided_slice %219 {offsets = [0, 0], sizes = [48, 8], strides = [1, 1]} : vector<48x96xf32> to vector<48x8xf32>
    %221 = arith.truncf %220 : vector<48x8xf32> to vector<48x8xbf16>
    %222 = vector.extract_strided_slice %219 {offsets = [0, 32], sizes = [48, 8], strides = [1, 1]} : vector<48x96xf32> to vector<48x8xf32>
    %223 = arith.truncf %222 : vector<48x8xf32> to vector<48x8xbf16>
    %224 = vector.extract_strided_slice %219 {offsets = [0, 64], sizes = [48, 8], strides = [1, 1]} : vector<48x96xf32> to vector<48x8xf32>
    %225 = arith.truncf %224 : vector<48x8xf32> to vector<48x8xbf16>
    %cst_71 = arith.constant dense<0.000000e+00> : vector<48x48xf32>
    %226 = tpu.matmul %221, %223, %cst_71 {dimension_numbers = #tpu.dot_dimension_numbers<[1], [1], [0], [0], [0, 0, 1, 0], [], []>} : vector<48x8xbf16>, vector<48x8xbf16>, vector<48x48xf32> -> vector<48x48xf32>
    %227 = arith.addf %226, %2 : vector<48x48xf32>
    %cst_72 = arith.constant dense<0xFF800000> : vector<48xf32>
    %228 = vector.multi_reduction <maximumf>, %227, %cst_72 [1] : vector<48x48xf32> to vector<48xf32>
    %229 = vector.shape_cast %228 : vector<48xf32> to vector<48x1xf32>
    %230 = vector.broadcast %229 : vector<48x1xf32> to vector<48x48xf32>
    %231 = arith.subf %227, %230 : vector<48x48xf32>
    %232 = math.exp %231 : vector<48x48xf32>
    %cst_73 = arith.constant dense<0.000000e+00> : vector<48xf32>
    %233 = vector.multi_reduction <add>, %232, %cst_73 [1] : vector<48x48xf32> to vector<48xf32>
    %234 = vector.shape_cast %233 : vector<48xf32> to vector<48x1xf32>
    %235 = tpu.reciprocal %234 : vector<48x1xf32> -> vector<48x1xf32>
    %236 = vector.broadcast %235 : vector<48x1xf32> to vector<48x48xf32>
    %237 = arith.mulf %232, %236 : vector<48x48xf32>
    %238 = arith.truncf %237 : vector<48x48xf32> to vector<48x48xbf16>
    %cst_74 = arith.constant dense<0.000000e+00> : vector<48x8xf32>
    %239 = tpu.matmul %238, %225, %cst_74 {dimension_numbers = #tpu.dot_dimension_numbers<[1], [0], [0], [1], [0, 0, 1, 1], [], []>} : vector<48x48xbf16>, vector<48x8xbf16>, vector<48x8xf32> -> vector<48x8xf32>
    %240 = vector.extract_strided_slice %219 {offsets = [0, 8], sizes = [48, 8], strides = [1, 1]} : vector<48x96xf32> to vector<48x8xf32>
    %241 = arith.truncf %240 : vector<48x8xf32> to vector<48x8xbf16>
    %242 = vector.extract_strided_slice %219 {offsets = [0, 40], sizes = [48, 8], strides = [1, 1]} : vector<48x96xf32> to vector<48x8xf32>
    %243 = arith.truncf %242 : vector<48x8xf32> to vector<48x8xbf16>
    %244 = vector.extract_strided_slice %219 {offsets = [0, 72], sizes = [48, 8], strides = [1, 1]} : vector<48x96xf32> to vector<48x8xf32>
    %245 = arith.truncf %244 : vector<48x8xf32> to vector<48x8xbf16>
    %cst_75 = arith.constant dense<0.000000e+00> : vector<48x48xf32>
    %246 = tpu.matmul %241, %243, %cst_75 {dimension_numbers = #tpu.dot_dimension_numbers<[1], [1], [0], [0], [0, 0, 1, 0], [], []>} : vector<48x8xbf16>, vector<48x8xbf16>, vector<48x48xf32> -> vector<48x48xf32>
    %247 = arith.addf %246, %2 : vector<48x48xf32>
    %cst_76 = arith.constant dense<0xFF800000> : vector<48xf32>
    %248 = vector.multi_reduction <maximumf>, %247, %cst_76 [1] : vector<48x48xf32> to vector<48xf32>
    %249 = vector.shape_cast %248 : vector<48xf32> to vector<48x1xf32>
    %250 = vector.broadcast %249 : vector<48x1xf32> to vector<48x48xf32>
    %251 = arith.subf %247, %250 : vector<48x48xf32>
    %252 = math.exp %251 : vector<48x48xf32>
    %cst_77 = arith.constant dense<0.000000e+00> : vector<48xf32>
    %253 = vector.multi_reduction <add>, %252, %cst_77 [1] : vector<48x48xf32> to vector<48xf32>
    %254 = vector.shape_cast %253 : vector<48xf32> to vector<48x1xf32>
    %255 = tpu.reciprocal %254 : vector<48x1xf32> -> vector<48x1xf32>
    %256 = vector.broadcast %255 : vector<48x1xf32> to vector<48x48xf32>
    %257 = arith.mulf %252, %256 : vector<48x48xf32>
    %258 = arith.truncf %257 : vector<48x48xf32> to vector<48x48xbf16>
    %cst_78 = arith.constant dense<0.000000e+00> : vector<48x8xf32>
    %259 = tpu.matmul %258, %245, %cst_78 {dimension_numbers = #tpu.dot_dimension_numbers<[1], [0], [0], [1], [0, 0, 1, 1], [], []>} : vector<48x48xbf16>, vector<48x8xbf16>, vector<48x8xf32> -> vector<48x8xf32>
    %260 = vector.extract_strided_slice %219 {offsets = [0, 16], sizes = [48, 8], strides = [1, 1]} : vector<48x96xf32> to vector<48x8xf32>
    %261 = arith.truncf %260 : vector<48x8xf32> to vector<48x8xbf16>
    %262 = vector.extract_strided_slice %219 {offsets = [0, 48], sizes = [48, 8], strides = [1, 1]} : vector<48x96xf32> to vector<48x8xf32>
    %263 = arith.truncf %262 : vector<48x8xf32> to vector<48x8xbf16>
    %264 = vector.extract_strided_slice %219 {offsets = [0, 80], sizes = [48, 8], strides = [1, 1]} : vector<48x96xf32> to vector<48x8xf32>
    %265 = arith.truncf %264 : vector<48x8xf32> to vector<48x8xbf16>
    %cst_79 = arith.constant dense<0.000000e+00> : vector<48x48xf32>
    %266 = tpu.matmul %261, %263, %cst_79 {dimension_numbers = #tpu.dot_dimension_numbers<[1], [1], [0], [0], [0, 0, 1, 0], [], []>} : vector<48x8xbf16>, vector<48x8xbf16>, vector<48x48xf32> -> vector<48x48xf32>
    %267 = arith.addf %266, %2 : vector<48x48xf32>
    %cst_80 = arith.constant dense<0xFF800000> : vector<48xf32>
    %268 = vector.multi_reduction <maximumf>, %267, %cst_80 [1] : vector<48x48xf32> to vector<48xf32>
    %269 = vector.shape_cast %268 : vector<48xf32> to vector<48x1xf32>
    %270 = vector.broadcast %269 : vector<48x1xf32> to vector<48x48xf32>
    %271 = arith.subf %267, %270 : vector<48x48xf32>
    %272 = math.exp %271 : vector<48x48xf32>
    %cst_81 = arith.constant dense<0.000000e+00> : vector<48xf32>
    %273 = vector.multi_reduction <add>, %272, %cst_81 [1] : vector<48x48xf32> to vector<48xf32>
    %274 = vector.shape_cast %273 : vector<48xf32> to vector<48x1xf32>
    %275 = tpu.reciprocal %274 : vector<48x1xf32> -> vector<48x1xf32>
    %276 = vector.broadcast %275 : vector<48x1xf32> to vector<48x48xf32>
    %277 = arith.mulf %272, %276 : vector<48x48xf32>
    %278 = arith.truncf %277 : vector<48x48xf32> to vector<48x48xbf16>
    %cst_82 = arith.constant dense<0.000000e+00> : vector<48x8xf32>
    %279 = tpu.matmul %278, %265, %cst_82 {dimension_numbers = #tpu.dot_dimension_numbers<[1], [0], [0], [1], [0, 0, 1, 1], [], []>} : vector<48x48xbf16>, vector<48x8xbf16>, vector<48x8xf32> -> vector<48x8xf32>
    %280 = vector.extract_strided_slice %219 {offsets = [0, 24], sizes = [48, 8], strides = [1, 1]} : vector<48x96xf32> to vector<48x8xf32>
    %281 = arith.truncf %280 : vector<48x8xf32> to vector<48x8xbf16>
    %282 = vector.extract_strided_slice %219 {offsets = [0, 56], sizes = [48, 8], strides = [1, 1]} : vector<48x96xf32> to vector<48x8xf32>
    %283 = arith.truncf %282 : vector<48x8xf32> to vector<48x8xbf16>
    %284 = vector.extract_strided_slice %219 {offsets = [0, 88], sizes = [48, 8], strides = [1, 1]} : vector<48x96xf32> to vector<48x8xf32>
    %285 = arith.truncf %284 : vector<48x8xf32> to vector<48x8xbf16>
    %cst_83 = arith.constant dense<0.000000e+00> : vector<48x48xf32>
    %286 = tpu.matmul %281, %283, %cst_83 {dimension_numbers = #tpu.dot_dimension_numbers<[1], [1], [0], [0], [0, 0, 1, 0], [], []>} : vector<48x8xbf16>, vector<48x8xbf16>, vector<48x48xf32> -> vector<48x48xf32>
    %287 = arith.addf %286, %2 : vector<48x48xf32>
    %cst_84 = arith.constant dense<0xFF800000> : vector<48xf32>
    %288 = vector.multi_reduction <maximumf>, %287, %cst_84 [1] : vector<48x48xf32> to vector<48xf32>
    %289 = vector.shape_cast %288 : vector<48xf32> to vector<48x1xf32>
    %290 = vector.broadcast %289 : vector<48x1xf32> to vector<48x48xf32>
    %291 = arith.subf %287, %290 : vector<48x48xf32>
    %292 = math.exp %291 : vector<48x48xf32>
    %cst_85 = arith.constant dense<0.000000e+00> : vector<48xf32>
    %293 = vector.multi_reduction <add>, %292, %cst_85 [1] : vector<48x48xf32> to vector<48xf32>
    %294 = vector.shape_cast %293 : vector<48xf32> to vector<48x1xf32>
    %295 = tpu.reciprocal %294 : vector<48x1xf32> -> vector<48x1xf32>
    %296 = vector.broadcast %295 : vector<48x1xf32> to vector<48x48xf32>
    %297 = arith.mulf %292, %296 : vector<48x48xf32>
    %298 = arith.truncf %297 : vector<48x48xf32> to vector<48x48xbf16>
    %cst_86 = arith.constant dense<0.000000e+00> : vector<48x8xf32>
    %299 = tpu.matmul %298, %285, %cst_86 {dimension_numbers = #tpu.dot_dimension_numbers<[1], [0], [0], [1], [0, 0, 1, 1], [], []>} : vector<48x48xbf16>, vector<48x8xbf16>, vector<48x8xf32> -> vector<48x8xf32>
    %300 = tpu.concatenate %239, %259, %279, %299 in 1 : vector<48x8xf32>, vector<48x8xf32>, vector<48x8xf32>, vector<48x8xf32> -> vector<48x32xf32>
    %301 = arith.truncf %300 : vector<48x32xf32> to vector<48x32xbf16>
    %c1_87 = arith.constant 1 : index
    %c0_88 = arith.constant 0 : index
    %c0_89 = arith.constant 0 : index
    %302 = vector.load %arg7[%c1_87, %c0_88, %c0_89] : memref<2x32x32xbf16, #tpu.memory_space<vmem>>, vector<1x32x32xbf16>
    %303 = vector.shape_cast %302 : vector<1x32x32xbf16> to vector<32x32xbf16>
    %cst_90 = arith.constant dense<0.000000e+00> : vector<48x32xf32>
    %304 = tpu.matmul %301, %303, %cst_90 {dimension_numbers = #tpu.dot_dimension_numbers<[1], [0], [0], [1], [0, 0, 1, 1], [], []>} : vector<48x32xbf16>, vector<32x32xbf16>, vector<48x32xf32> -> vector<48x32xf32>
    %305 = vector.broadcast %187 : vector<1x32xf32> to vector<48x32xf32>
    %306 = arith.addf %304, %305 : vector<48x32xf32>
    %307 = arith.addf %181, %306 : vector<48x32xf32>
    %cst_91 = arith.constant dense<0.000000e+00> : vector<48xf32>
    %308 = vector.multi_reduction <add>, %307, %cst_91 [1] : vector<48x32xf32> to vector<48xf32>
    %309 = vector.shape_cast %308 : vector<48xf32> to vector<48x1xf32>
    %cst_92 = arith.constant 3.200000e+01 : f32
    %310 = vector.broadcast %cst_92 : f32 to vector<48x1xf32>
    %311 = arith.divf %309, %310 : vector<48x1xf32>
    %312 = vector.broadcast %311 : vector<48x1xf32> to vector<48x32xf32>
    %313 = arith.subf %307, %312 : vector<48x32xf32>
    %314 = arith.mulf %313, %313 : vector<48x32xf32>
    %cst_93 = arith.constant dense<0.000000e+00> : vector<48xf32>
    %315 = vector.multi_reduction <add>, %314, %cst_93 [1] : vector<48x32xf32> to vector<48xf32>
    %316 = vector.shape_cast %315 : vector<48xf32> to vector<48x1xf32>
    %cst_94 = arith.constant 3.200000e+01 : f32
    %317 = vector.broadcast %cst_94 : f32 to vector<48x1xf32>
    %318 = arith.divf %316, %317 : vector<48x1xf32>
    %319 = vector.broadcast %311 : vector<48x1xf32> to vector<48x32xf32>
    %320 = arith.subf %307, %319 : vector<48x32xf32>
    %cst_95 = arith.constant 9.99999997E-7 : f32
    %321 = vector.broadcast %cst_95 : f32 to vector<48x1xf32>
    %322 = arith.addf %318, %321 : vector<48x1xf32>
    %323 = math.rsqrt %322 : vector<48x1xf32>
    %324 = vector.broadcast %323 : vector<48x1xf32> to vector<48x32xf32>
    %325 = arith.mulf %320, %324 : vector<48x32xf32>
    %326 = vector.broadcast %188 : vector<1x32xf32> to vector<48x32xf32>
    %327 = arith.mulf %325, %326 : vector<48x32xf32>
    %328 = vector.broadcast %189 : vector<1x32xf32> to vector<48x32xf32>
    %329 = arith.addf %327, %328 : vector<48x32xf32>
    %330 = arith.truncf %329 : vector<48x32xf32> to vector<48x32xbf16>
    %c1_96 = arith.constant 1 : index
    %c0_97 = arith.constant 0 : index
    %c0_98 = arith.constant 0 : index
    %331 = vector.load %arg8[%c1_96, %c0_97, %c0_98] : memref<2x32x128xbf16, #tpu.memory_space<vmem>>, vector<1x32x128xbf16>
    %332 = vector.shape_cast %331 : vector<1x32x128xbf16> to vector<32x128xbf16>
    %cst_99 = arith.constant dense<0.000000e+00> : vector<48x128xf32>
    %333 = tpu.matmul %330, %332, %cst_99 {dimension_numbers = #tpu.dot_dimension_numbers<[1], [0], [0], [1], [0, 0, 1, 1], [], []>} : vector<48x32xbf16>, vector<32x128xbf16>, vector<48x128xf32> -> vector<48x128xf32>
    %334 = vector.broadcast %190 : vector<1x128xf32> to vector<48x128xf32>
    %335 = arith.addf %333, %334 : vector<48x128xf32>
    %336 = arith.mulf %335, %335 : vector<48x128xf32>
    %337 = arith.mulf %335, %336 : vector<48x128xf32>
    %cst_100 = arith.constant 4.471500e-02 : f32
    %338 = vector.broadcast %cst_100 : f32 to vector<48x128xf32>
    %339 = arith.mulf %338, %337 : vector<48x128xf32>
    %340 = arith.addf %335, %339 : vector<48x128xf32>
    %cst_101 = arith.constant 0.797884583 : f32
    %341 = vector.broadcast %cst_101 : f32 to vector<48x128xf32>
    %342 = arith.mulf %341, %340 : vector<48x128xf32>
    %343 = math.tanh %342 : vector<48x128xf32>
    %cst_102 = arith.constant 1.000000e+00 : f32
    %344 = vector.broadcast %cst_102 : f32 to vector<48x128xf32>
    %345 = arith.addf %344, %343 : vector<48x128xf32>
    %cst_103 = arith.constant 5.000000e-01 : f32
    %346 = vector.broadcast %cst_103 : f32 to vector<48x128xf32>
    %347 = arith.mulf %346, %345 : vector<48x128xf32>
    %348 = arith.mulf %335, %347 : vector<48x128xf32>
    %349 = arith.truncf %348 : vector<48x128xf32> to vector<48x128xbf16>
    %c1_104 = arith.constant 1 : index
    %c0_105 = arith.constant 0 : index
    %c0_106 = arith.constant 0 : index
    %350 = vector.load %arg9[%c1_104, %c0_105, %c0_106] : memref<2x128x32xbf16, #tpu.memory_space<vmem>>, vector<1x128x32xbf16>
    %351 = vector.shape_cast %350 : vector<1x128x32xbf16> to vector<128x32xbf16>
    %cst_107 = arith.constant dense<0.000000e+00> : vector<48x32xf32>
    %352 = tpu.matmul %349, %351, %cst_107 {dimension_numbers = #tpu.dot_dimension_numbers<[1], [0], [0], [1], [0, 0, 1, 1], [], []>} : vector<48x128xbf16>, vector<128x32xbf16>, vector<48x32xf32> -> vector<48x32xf32>
    %353 = vector.broadcast %191 : vector<1x32xf32> to vector<48x32xf32>
    %354 = arith.addf %352, %353 : vector<48x32xf32>
    %355 = arith.addf %307, %354 : vector<48x32xf32>
    %cst_108 = arith.constant dense<0.000000e+00> : vector<48xf32>
    %356 = vector.multi_reduction <add>, %355, %cst_108 [1] : vector<48x32xf32> to vector<48xf32>
    %357 = vector.shape_cast %356 : vector<48xf32> to vector<48x1xf32>
    %cst_109 = arith.constant 3.200000e+01 : f32
    %358 = vector.broadcast %cst_109 : f32 to vector<48x1xf32>
    %359 = arith.divf %357, %358 : vector<48x1xf32>
    %360 = vector.broadcast %359 : vector<48x1xf32> to vector<48x32xf32>
    %361 = arith.subf %355, %360 : vector<48x32xf32>
    %362 = arith.mulf %361, %361 : vector<48x32xf32>
    %cst_110 = arith.constant dense<0.000000e+00> : vector<48xf32>
    %363 = vector.multi_reduction <add>, %362, %cst_110 [1] : vector<48x32xf32> to vector<48xf32>
    %364 = vector.shape_cast %363 : vector<48xf32> to vector<48x1xf32>
    %cst_111 = arith.constant 3.200000e+01 : f32
    %365 = vector.broadcast %cst_111 : f32 to vector<48x1xf32>
    %366 = arith.divf %364, %365 : vector<48x1xf32>
    %367 = vector.broadcast %359 : vector<48x1xf32> to vector<48x32xf32>
    %368 = arith.subf %355, %367 : vector<48x32xf32>
    %cst_112 = arith.constant 9.99999997E-7 : f32
    %369 = vector.broadcast %cst_112 : f32 to vector<48x1xf32>
    %370 = arith.addf %366, %369 : vector<48x1xf32>
    %371 = math.rsqrt %370 : vector<48x1xf32>
    %372 = vector.broadcast %371 : vector<48x1xf32> to vector<48x32xf32>
    %373 = arith.mulf %368, %372 : vector<48x32xf32>
    %374 = vector.broadcast %0 : vector<1x32xf32> to vector<48x32xf32>
    %375 = arith.mulf %373, %374 : vector<48x32xf32>
    %376 = vector.broadcast %1 : vector<1x32xf32> to vector<48x32xf32>
    %377 = arith.addf %375, %376 : vector<48x32xf32>
    %c0_113 = arith.constant 0 : index
    %c0_114 = arith.constant 0 : index
    %378 = vector.load %arg11[%c0_113, %c0_114] : memref<48x32xf32, #tpu.memory_space<vmem>>, vector<48x32xf32>
    tpu.vector_store %arg11[%c0_113, %c0_114], %377 {strides = array<i32>} : memref<48x32xf32, #tpu.memory_space<vmem>>, vector<48x32xf32>,
    return
  }
  func.func @transform_0(%arg0: i32) -> (i32, i32) {
    %c0_i32 = arith.constant 0 : i32
    %c0_i32_0 = arith.constant 0 : i32
    return %arg0, %c0_i32 : i32, i32
  }
  func.func @transform_1(%arg0: i32) -> (i32, i32) {
    %c0_i32 = arith.constant 0 : i32
    %c0_i32_0 = arith.constant 0 : i32
    %c0_i32_1 = arith.constant 0 : i32
    return %c0_i32, %c0_i32_0 : i32, i32
  }
  func.func @transform_2(%arg0: i32) -> (i32, i32) {
    %c0_i32 = arith.constant 0 : i32
    %c0_i32_0 = arith.constant 0 : i32
    %c0_i32_1 = arith.constant 0 : i32
    return %c0_i32, %c0_i32_0 : i32, i32
  }
  func.func @transform_3(%arg0: i32) -> (i32, i32) {
    %c0_i32 = arith.constant 0 : i32
    %c0_i32_0 = arith.constant 0 : i32
    %c0_i32_1 = arith.constant 0 : i32
    return %c0_i32, %c0_i32_0 : i32, i32
  }
  func.func @transform_4(%arg0: i32) -> (i32, i32) {
    %c0_i32 = arith.constant 0 : i32
    %c0_i32_0 = arith.constant 0 : i32
    %c0_i32_1 = arith.constant 0 : i32
    return %c0_i32, %c0_i32_0 : i32, i32
  }
  func.func @transform_5(%arg0: i32) -> (i32, i32, i32) {
    %c0_i32 = arith.constant 0 : i32
    %c0_i32_0 = arith.constant 0 : i32
    %c0_i32_1 = arith.constant 0 : i32
    %c0_i32_2 = arith.constant 0 : i32
    return %c0_i32, %c0_i32_0, %c0_i32_1 : i32, i32, i32
  }
  func.func @transform_6(%arg0: i32) -> (i32, i32, i32) {
    %c0_i32 = arith.constant 0 : i32
    %c0_i32_0 = arith.constant 0 : i32
    %c0_i32_1 = arith.constant 0 : i32
    %c0_i32_2 = arith.constant 0 : i32
    return %c0_i32, %c0_i32_0, %c0_i32_1 : i32, i32, i32
  }
  func.func @transform_7(%arg0: i32) -> (i32, i32, i32) {
    %c0_i32 = arith.constant 0 : i32
    %c0_i32_0 = arith.constant 0 : i32
    %c0_i32_1 = arith.constant 0 : i32
    %c0_i32_2 = arith.constant 0 : i32
    return %c0_i32, %c0_i32_0, %c0_i32_1 : i32, i32, i32
  }
  func.func @transform_8(%arg0: i32) -> (i32, i32, i32) {
    %c0_i32 = arith.constant 0 : i32
    %c0_i32_0 = arith.constant 0 : i32
    %c0_i32_1 = arith.constant 0 : i32
    %c0_i32_2 = arith.constant 0 : i32
    return %c0_i32, %c0_i32_0, %c0_i32_1 : i32, i32, i32
  }
  func.func @transform_9(%arg0: i32) -> (i32, i32, i32) {
    %c0_i32 = arith.constant 0 : i32
    %c0_i32_0 = arith.constant 0 : i32
    %c0_i32_1 = arith.constant 0 : i32
    %c0_i32_2 = arith.constant 0 : i32
    return %c0_i32, %c0_i32_0, %c0_i32_1 : i32, i32, i32
  }
  func.func @transform_10(%arg0: i32) -> (i32, i32) {
    %c0_i32 = arith.constant 0 : i32
    %c0_i32_0 = arith.constant 0 : i32
    return %arg0, %c0_i32 : i32, i32
  }
}

</mosaic_0001>

<llo_original>
// kernel: _lambda_.1
$region0: #{_lambda_.1}
  #allocation0 [shape = 'u32[]', space=smem, size = 0x4, offset = 0x4, fixed_abs, tag = 'smem constant byte address 0x4 - core index']
  #allocation1 [shape = 'u32[144,128]{1,0:T(1,128)}', space=vmem, size = 0x12000, scoped, tag = 'internal scratch']
  %s0 = inlined_call_operand.vmem [shape: bf16[48,48], index: 0, kind: input, shape index: {}]
  %s1 = inlined_call_operand.vmem [shape: f32[48,32], index: 1, kind: input, shape index: {}]
  %s2 = inlined_call_operand.vmem [shape: f32[48,48], index: 2, kind: input, shape index: {}]
  %s3 = inlined_call_operand.vmem [shape: f32[2,32], index: 3, kind: input, shape index: {}]
  %s4 = inlined_call_operand.vmem [shape: bf16[48,32], index: 4, kind: input, shape index: {}]
  %s5 = inlined_call_operand.vmem [shape: bf16[2,32,96], index: 5, kind: input, shape index: {}]
  %s6 = inlined_call_operand.vmem [shape: bf16[2,32,32], index: 6, kind: input, shape index: {}]
  %s7 = inlined_call_operand.vmem [shape: bf16[2,32,128], index: 7, kind: input, shape index: {}]
  %s8 = inlined_call_operand.vmem [shape: bf16[2,128,32], index: 8, kind: input, shape index: {}]
  %s9 = inlined_call_operand.vmem [shape: f32[2,8,128], index: 9, kind: input, shape index: {}]
  %s10 = inlined_call_operand.vmem [shape: f32[48,32], index: 10, kind: output, shape index: {}]
  %s11 = sld [smem:[#allocation0]]
  $region50: #{_lambda_.1} parent=0
    _
  %s13 = ssub.s32 1, %s11
  %s14 = scalar_select 0, %s13, %s11
  // Predicated region
  $region2: #{_lambda_.1} parent=0 // pred_check
    _
  $region3: #{_lambda_.1} parent=0 // pred_check_branch
    %16 = sbr.rel (0) target = $region5
  $region4: #{_lambda_.1} parent=0 // pred_region
    _
  $region5: #{_lambda_.1} parent=0 // pred_fallthru
    _
  // Predicated region
  $region6: #{_lambda_.1} parent=0 // pred_check
    _
  $region7: #{_lambda_.1} parent=0 // pred_check_branch
    %18 = sbr.rel (0) target = $region9
  $region8: #{_lambda_.1} parent=0 // pred_region
    _
  $region9: #{_lambda_.1} parent=0 // pred_fallthru
    _
  // Predicated region
  $region10: #{_lambda_.1} parent=0 // pred_check
    _
  $region11: #{_lambda_.1} parent=0 // pred_check_branch
    %20 = sbr.rel (0) target = $region13
  $region12: #{_lambda_.1} parent=0 // pred_region
    _
  $region13: #{_lambda_.1} parent=0 // pred_fallthru
    _
  // Predicated region
  $region14: #{_lambda_.1} parent=0 // pred_check
    _
  $region15: #{_lambda_.1} parent=0 // pred_check_branch
    %22 = sbr.rel (0) target = $region17
  $region16: #{_lambda_.1} parent=0 // pred_region
    _
  $region17: #{_lambda_.1} parent=0 // pred_fallthru
    _
  // Predicated region
  $region18: #{_lambda_.1} parent=0 // pred_check
    _
  $region19: #{_lambda_.1} parent=0 // pred_check_branch
    %24 = sbr.rel (0) target = $region21
  $region20: #{_lambda_.1} parent=0 // pred_region
    _
  $region21: #{_lambda_.1} parent=0 // pred_fallthru
    _
  // Predicated region
  $region22: #{_lambda_.1} parent=0 // pred_check
    _
  $region23: #{_lambda_.1} parent=0 // pred_check_branch
    %26 = sbr.rel (0) target = $region25
  $region24: #{_lambda_.1} parent=0 // pred_region
    _
  $region25: #{_lambda_.1} parent=0 // pred_fallthru
    _
  // Predicated region
  $region26: #{_lambda_.1} parent=0 // pred_check
    _
  $region27: #{_lambda_.1} parent=0 // pred_check_branch
    %28 = sbr.rel (0) target = $region29
  $region28: #{_lambda_.1} parent=0 // pred_region
    _
  $region29: #{_lambda_.1} parent=0 // pred_fallthru
    _
  // Predicated region
  $region30: #{_lambda_.1} parent=0 // pred_check
    _
  $region31: #{_lambda_.1} parent=0 // pred_check_branch
    %30 = sbr.rel (0) target = $region33
  $region32: #{_lambda_.1} parent=0 // pred_region
    _
  $region33: #{_lambda_.1} parent=0 // pred_fallthru
    _
  // Predicated region
  $region34: #{_lambda_.1} parent=0 // pred_check
    _
  $region35: #{_lambda_.1} parent=0 // pred_check_branch
    %32 = sbr.rel (0) target = $region37
  $region36: #{_lambda_.1} parent=0 // pred_region
    _
  $region37: #{_lambda_.1} parent=0 // pred_fallthru
    _
  // Predicated region
  $region38: #{_lambda_.1} parent=0 // pred_check
    _
  $region39: #{_lambda_.1} parent=0 // pred_check_branch
    %34 = sbr.rel (0) target = $region41
  $region40: #{_lambda_.1} parent=0 // pred_region
    _
  $region41: #{_lambda_.1} parent=0 // pred_fallthru
    _
  %v36 = vld [vmem:[%s3] sm:$0x1]
  %v37 = vld [vmem:[%s3 + $0x1] sm:$0x1]
  %v38 = vld [vmem:[%s2] sm:$0xff]
  %v39 = vld [vmem:[%s2 + $0x8] sm:$0xff]
  %v40 = vld [vmem:[%s2 + $0x10] sm:$0xff]
  %v41 = vld [vmem:[%s2 + $0x18] sm:$0xff]
  %v42 = vld [vmem:[%s2 + $0x20] sm:$0xff]
  %v43 = vld [vmem:[%s2 + $0x28] sm:$0xff]
  %v44 = vld [vmem:[%s0] sm:$0xf]
  %v45 = vld [vmem:[%s0 + $0x4] sm:$0xf]
  %v46 = vld [vmem:[%s0 + $0x8] sm:$0xf]
  %v47 = vld [vmem:[%s0 + $0xc] sm:$0xf]
  %v48 = vld [vmem:[%s0 + $0x10] sm:$0xf]
  %v49 = vld [vmem:[%s0 + $0x14] sm:$0xf]
  %v50 = vld [vmem:[%s4] sm:$0xf]
  %v51 = vld [vmem:[%s4 + $0x4] sm:$0xf]
  %v52 = vld [vmem:[%s4 + $0x8] sm:$0xf]
  %v53 = vld [vmem:[%s4 + $0xc] sm:$0xf]
  %v54 = vld [vmem:[%s4 + $0x10] sm:$0xf]
  %v55 = vld [vmem:[%s4 + $0x14] sm:$0xf]
  %v56 = vld [vmem:[%s1] sm:$0xff]
  %v57 = vld [vmem:[%s1 + $0x8] sm:$0xff]
  %v58 = vld [vmem:[%s1 + $0x10] sm:$0xff]
  %v59 = vld [vmem:[%s1 + $0x18] sm:$0xff]
  %v60 = vld [vmem:[%s1 + $0x20] sm:$0xff]
  %v61 = vld [vmem:[%s1 + $0x28] sm:$0xff]
  %v68 = vunpack.c.l.b16 %v44
  %v69 = vunpack.c.l.b16 %v45
  %v70 = vunpack.c.l.b16 %v46
  %v71 = vunpack.c.l.b16 %v47
  %v72 = vunpack.c.l.b16 %v48
  %v73 = vunpack.c.l.b16 %v49
  %v74 = vpack.c.b16 %v69, %v68
  %v75 = vpack.c.b16 %v71, %v70
  %v76 = vpack.c.b16 %v73, %v72
  %v83 = vunpack.c.l.b16 %v50
  %v84 = vunpack.c.l.b16 %v51
  %v85 = vunpack.c.l.b16 %v52
  %v86 = vunpack.c.l.b16 %v53
  %v87 = vunpack.c.l.b16 %v54
  %v88 = vunpack.c.l.b16 %v55
  %v89 = vpack.c.b16 %v84, %v83
  %v90 = vpack.c.b16 %v86, %v85
  %v91 = vpack.c.b16 %v88, %v87
  %vm95 = vcmask 392192
  %v97 = vsel %vm95, %v74, 0
  %v100 = vsel %vm95, %v75, 0
  %v103 = vsel %vm95, %v76, 0
  %105 = vmatprep.subr.bf16.mxu0 0
  %106 = vmatpush1.bf16.msra.mxu0 %v89
  %107 = vmatprep.subr.bf16.mxu0 0
  %108 = vmatpush1.bf16.msra.mxu0 %v90
  %109 = vmatprep.subr.bf16.mxu0 0
  %110 = vmatpush1.bf16.msra.mxu0 %v91
  %111 = vmatprep.subr.bf16.mxu0 0
  %112 = vmatpush1.bf16.msra.mxu0 0
  %113 = vmatprep.subr.bf16.mxu0 0
  %114 = vmatpush1.bf16.msra.mxu0 0
  %115 = vmatprep.subr.bf16.mxu0 0
  %116 = vmatpush1.bf16.msra.mxu0 0
  %117 = vmatprep.subr.bf16.mxu0 0
  %118 = vmatpush1.bf16.msra.mxu0 0
  %119 = vmatprep.subr.bf16.mxu0 0
  %120 = vmatpush1.bf16.msra.mxu0 0
  %121 = vmatprep.subr.bf16.mxu0 0
  %122 = vmatpush1.bf16.msra.mxu0 0
  %123 = vmatprep.subr.bf16.mxu0 0
  %124 = vmatpush1.bf16.msra.mxu0 0
  %125 = vmatprep.subr.bf16.mxu0 0
  %126 = vmatpush1.bf16.msra.mxu0 0
  %127 = vmatprep.subr.bf16.mxu0 0
  %128 = vmatpush1.bf16.msra.mxu0 0
  %129 = vmatprep.subr.bf16.mxu0 0
  %130 = vmatpush1.bf16.msra.mxu0 0
  %131 = vmatprep.subr.bf16.mxu0 0
  %132 = vmatpush1.bf16.msra.mxu0 0
  %133 = vmatprep.subr.bf16.mxu0 0
  %134 = vmatpush1.bf16.msra.mxu0 0
  %135 = vmatprep.subr.bf16.mxu0 0
  %136 = vmatpush1.bf16.msra.mxu0 0
  %137 = vmatprep.mubr.bf16.mxu0 0
  %138 = vmatmul.mubr.bf16.gmra.mrb[0].mxu0 %v97
  %v139 = vpop.f32.mrb[0].mxu0
  %v140 = vadd.f32 %v56, %v139
  %v141 = vpop.f32.mrb[0].mxu0
  %v142 = vpop.f32.mrb[0].mxu0
  %v143 = vadd.f32 %v57, %v142
  %v144 = vpop.f32.mrb[0].mxu0
  %145 = vmatprep.mubr.bf16.mxu0 0
  %146 = vmatmul.mubr.bf16.gmra.mrb[0].mxu0 %v100
  %v147 = vpop.f32.mrb[0].mxu0
  %v148 = vadd.f32 %v58, %v147
  %v149 = vpop.f32.mrb[0].mxu0
  %v150 = vpop.f32.mrb[0].mxu0
  %v151 = vadd.f32 %v59, %v150
  %v152 = vpop.f32.mrb[0].mxu0
  %153 = vmatprep.mubr.bf16.mxu0 0
  %154 = vmatmul.mubr.bf16.gmra.mrb[0].mxu0 %v103
  %v155 = vpop.f32.mrb[0].mxu0
  %v156 = vadd.f32 %v60, %v155
  %v157 = vpop.f32.mrb[0].mxu0
  %v158 = vpop.f32.mrb[0].mxu0
  %v159 = vadd.f32 %v61, %v158
  %v160 = vpop.f32.mrb[0].mxu0
  %161 = vdwg.mxu0
  %v162 = vld [vmem:[%s9] sm:$0xff]
  %vm163 = vcmask 261120
  %v164 = vsel %vm163, %v140, 0.0
  %165 = vadd.xlane.f32.xlu0 %v164
  %v166 = vpop.xlane.xlu0 %165
  %v167 = vsel %vm163, %v143, 0.0
  %168 = vadd.xlane.f32.xlu0 %v167
  %v169 = vpop.xlane.xlu0 %168
  %v170 = vsel %vm163, %v148, 0.0
  %171 = vadd.xlane.f32.xlu0 %v170
  %v172 = vpop.xlane.xlu0 %171
  %v173 = vsel %vm163, %v151, 0.0
  %174 = vadd.xlane.f32.xlu0 %v173
  %v175 = vpop.xlane.xlu0 %174
  %v176 = vsel %vm163, %v156, 0.0
  %177 = vadd.xlane.f32.xlu0 %v176
  %v178 = vpop.xlane.xlu0 %177
  %v179 = vsel %vm163, %v159, 0.0
  %180 = vadd.xlane.f32.xlu0 %v179
  %v181 = vpop.xlane.xlu0 %180
  %v182 = vrcp.pop 32.0
  %v183 = vmul.f32 %v166, %v182
  %v184 = vmul.f32 %v169, %v182
  %v185 = vmul.f32 %v172, %v182
  %v186 = vmul.f32 %v175, %v182
  %v187 = vmul.f32 %v178, %v182
  %v188 = vmul.f32 %v181, %v182
  %v189 = vsub.f32 %v140, %v183
  %v190 = vsub.f32 %v143, %v184
  %v191 = vsub.f32 %v148, %v185
  %v192 = vsub.f32 %v151, %v186
  %v193 = vsub.f32 %v156, %v187
  %v194 = vsub.f32 %v159, %v188
  %v195 = vmul.f32 %v189, %v189
  %v196 = vmul.f32 %v190, %v190
  %v197 = vmul.f32 %v191, %v191
  %v198 = vmul.f32 %v192, %v192
  %v199 = vmul.f32 %v193, %v193
  %v200 = vmul.f32 %v194, %v194
  %v201 = vsel %vm163, %v195, 0.0
  %202 = vadd.xlane.f32.xlu0 %v201
  %v203 = vpop.xlane.xlu0 %202
  %v204 = vsel %vm163, %v196, 0.0
  %205 = vadd.xlane.f32.xlu0 %v204
  %v206 = vpop.xlane.xlu0 %205
  %v207 = vsel %vm163, %v197, 0.0
  %208 = vadd.xlane.f32.xlu0 %v207
  %v209 = vpop.xlane.xlu0 %208
  %v210 = vsel %vm163, %v198, 0.0
  %211 = vadd.xlane.f32.xlu0 %v210
  %v212 = vpop.xlane.xlu0 %211
  %v213 = vsel %vm163, %v199, 0.0
  %214 = vadd.xlane.f32.xlu0 %v213
  %v215 = vpop.xlane.xlu0 %214
  %v216 = vsel %vm163, %v200, 0.0
  %217 = vadd.xlane.f32.xlu0 %v216
  %v218 = vpop.xlane.xlu0 %217
  %v219 = vmul.f32 %v203, %v182
  %v220 = vmul.f32 %v206, %v182
  %v221 = vmul.f32 %v209, %v182
  %v222 = vmul.f32 %v212, %v182
  %v223 = vmul.f32 %v215, %v182
  %v224 = vmul.f32 %v218, %v182
  %v225 = vadd.f32 %v219, 1e-06
  %v226 = vadd.f32 %v220, 1e-06
  %v227 = vadd.f32 %v221, 1e-06
  %v228 = vadd.f32 %v222, 1e-06
  %v229 = vadd.f32 %v223, 1e-06
  %v230 = vadd.f32 %v224, 1e-06
  %v231 = vrsqrt.pop %v225
  %v232 = vrsqrt.pop %v226
  %v233 = vrsqrt.pop %v227
  %v234 = vrsqrt.pop %v228
  %v235 = vrsqrt.pop %v229
  %v236 = vrsqrt.pop %v230
  %v237 = vmul.f32 %v189, %v231
  %v238 = vmul.f32 %v190, %v232
  %v239 = vmul.f32 %v191, %v233
  %v240 = vmul.f32 %v192, %v234
  %v241 = vmul.f32 %v193, %v235
  %v242 = vmul.f32 %v194, %v236
  %v243 = vlaneseq
  %v244 = vshrl.u32 %v243, 7
  %v245 = vsub.s32 0, %v244
  %v246 = vrot.slane %v162, %v245
  %v247 = vmul.f32 %v237, %v246
  %v248 = vmul.f32 %v238, %v246
  %v249 = vmul.f32 %v239, %v246
  %v250 = vmul.f32 %v240, %v246
  %v251 = vmul.f32 %v241, %v246
  %v252 = vmul.f32 %v242, %v246
  %v253 = vlaneseq
  %v254 = vshrl.u32 %v253, 7
  %v255 = vsub.s32 1, %v254
  %v256 = vrot.slane %v162, %v255
  %v257 = vadd.f32 %v247, %v256
  %v258 = vadd.f32 %v248, %v256
  %v259 = vadd.f32 %v249, %v256
  %v260 = vadd.f32 %v250, %v256
  %v261 = vadd.f32 %v251, %v256
  %v262 = vadd.f32 %v252, %v256
  %v263 = vpack.c.bf16 %v258, %v257
  %v264 = vpack.c.bf16 %v260, %v259
  %v265 = vpack.c.bf16 %v262, %v261
  %v266 = vld [vmem:[%s5] sm:$0xf]
  %v267 = vld [vmem:[%s5 + $0x4] sm:$0xf]
  %v268 = vld [vmem:[%s5 + $0x8] sm:$0xf]
  %v269 = vld [vmem:[%s5 + $0xc] sm:$0xf]
  %v270 = vlaneseq
  %v271 = vshrl.u32 %v270, 7
  %v272 = vsub.s32 2, %v271
  %v273 = vrot.slane %v162, %v272
  %v278 = vunpack.c.l.b16 %v266
  %v279 = vunpack.c.l.b16 %v267
  %v280 = vunpack.c.l.b16 %v268
  %v281 = vunpack.c.l.b16 %v269
  %v282 = vpack.c.b16 %v279, %v278
  %v283 = vpack.c.b16 %v281, %v280
  %v287 = vsel %vm163, %v263, 0
  %v290 = vsel %vm163, %v264, 0
  %v293 = vsel %vm163, %v265, 0
  %295 = vmatprep.subr.bf16.mxu0 0
  %296 = vmatpush1.bf16.msra.mxu0 %v282
  %297 = vmatprep.subr.bf16.mxu0 0
  %298 = vmatpush1.bf16.msra.mxu0 %v283
  %299 = vmatprep.subr.bf16.mxu0 0
  %300 = vmatpush1.bf16.msra.mxu0 0
  %301 = vmatprep.subr.bf16.mxu0 0
  %302 = vmatpush1.bf16.msra.mxu0 0
  %303 = vmatprep.subr.bf16.mxu0 0
  %304 = vmatpush1.bf16.msra.mxu0 0
  %305 = vmatprep.subr.bf16.mxu0 0
  %306 = vmatpush1.bf16.msra.mxu0 0
  %307 = vmatprep.subr.bf16.mxu0 0
  %308 = vmatpush1.bf16.msra.mxu0 0
  %309 = vmatprep.subr.bf16.mxu0 0
  %310 = vmatpush1.bf16.msra.mxu0 0
  %311 = vmatprep.subr.bf16.mxu0 0
  %312 = vmatpush1.bf16.msra.mxu0 0
  %313 = vmatprep.subr.bf16.mxu0 0
  %314 = vmatpush1.bf16.msra.mxu0 0
  %315 = vmatprep.subr.bf16.mxu0 0
  %316 = vmatpush1.bf16.msra.mxu0 0
  %317 = vmatprep.subr.bf16.mxu0 0
  %318 = vmatpush1.bf16.msra.mxu0 0
  %319 = vmatprep.subr.bf16.mxu0 0
  %320 = vmatpush1.bf16.msra.mxu0 0
  %321 = vmatprep.subr.bf16.mxu0 0
  %322 = vmatpush1.bf16.msra.mxu0 0
  %323 = vmatprep.subr.bf16.mxu0 0
  %324 = vmatpush1.bf16.msra.mxu0 0
  %325 = vmatprep.subr.bf16.mxu0 0
  %326 = vmatpush1.bf16.msra.mxu0 0
  %327 = vmatprep.mubr.bf16.mxu0 0
  %328 = vmatmul.mubr.bf16.gmra.mrb[0].mxu0 %v287
  %v329 = vpop.f32.mrb[0].mxu0
  %v330 = vadd.f32 %v273, %v329
  %v331 = vpop.f32.mrb[0].mxu0
  %v332 = vpop.f32.mrb[0].mxu0
  %v333 = vadd.f32 %v273, %v332
  %v334 = vpop.f32.mrb[0].mxu0
  %335 = vmatprep.mubr.bf16.mxu0 0
  %336 = vmatmul.mubr.bf16.gmra.mrb[0].mxu0 %v290
  %v337 = vpop.f32.mrb[0].mxu0
  %v338 = vadd.f32 %v273, %v337
  %v339 = vpop.f32.mrb[0].mxu0
  %v340 = vpop.f32.mrb[0].mxu0
  %v341 = vadd.f32 %v273, %v340
  %v342 = vpop.f32.mrb[0].mxu0
  %343 = vmatprep.mubr.bf16.mxu0 0
  %344 = vmatmul.mubr.bf16.gmra.mrb[0].mxu0 %v293
  %v345 = vpop.f32.mrb[0].mxu0
  %v346 = vadd.f32 %v273, %v345
  %v347 = vpop.f32.mrb[0].mxu0
  %v348 = vpop.f32.mrb[0].mxu0
  %v349 = vadd.f32 %v273, %v348
  %v350 = vpop.f32.mrb[0].mxu0
  %351 = vdwg.mxu0
  %v352 = vpack.c.bf16 %v333, %v330
  %v353 = vpack.c.bf16 %v341, %v338
  %v354 = vpack.c.bf16 %v349, %v346
  %358 = vrot.lane.b32.xlu0 %v352, 96
  %v359 = vpop.permute.xlu0 %358
  %360 = vrot.lane.b32.xlu0 %v353, 96
  %v361 = vpop.permute.xlu0 %360
  %362 = vrot.lane.b32.xlu0 %v354, 96
  %v363 = vpop.permute.xlu0 %362
  %vm364 = vcmask 64512
  %v366 = vsel %vm364, %v352, 0
  %v369 = vsel %vm364, %v353, 0
  %v372 = vsel %vm364, %v354, 0
  %v375 = vsel %vm364, %v359, 0
  %v378 = vsel %vm364, %v361, 0
  %v381 = vsel %vm364, %v363, 0
  %383 = vmatprep.subr.bf16.mxu0 0
  %384 = vmatpush1.bf16.xpose.msra.mxu0 %v375
  %385 = vmatprep.subr.bf16.mxu0 0
  %386 = vmatpush1.bf16.xpose.msra.mxu0 %v378
  %387 = vmatprep.subr.bf16.mxu0 0
  %388 = vmatpush1.bf16.xpose.msra.mxu0 %v381
  %389 = vmatprep.subr.bf16.mxu0 0
  %390 = vmatpush1.bf16.xpose.msra.mxu0 0
  %391 = vmatprep.subr.bf16.mxu0 0
  %392 = vmatpush1.bf16.xpose.msra.mxu0 0
  %393 = vmatprep.subr.bf16.mxu0 0
  %394 = vmatpush1.bf16.xpose.msra.mxu0 0
  %395 = vmatprep.subr.bf16.mxu0 0
  %396 = vmatpush1.bf16.xpose.msra.mxu0 0
  %397 = vmatprep.subr.bf16.mxu0 0
  %398 = vmatpush1.bf16.xpose.msra.mxu0 0
  %399 = vmatprep.subr.bf16.mxu0 0
  %400 = vmatpush1.bf16.xpose.msra.mxu0 0
  %401 = vmatprep.subr.bf16.mxu0 0
  %402 = vmatpush1.bf16.xpose.msra.mxu0 0
  %403 = vmatprep.subr.bf16.mxu0 0
  %404 = vmatpush1.bf16.xpose.msra.mxu0 0
  %405 = vmatprep.subr.bf16.mxu0 0
  %406 = vmatpush1.bf16.xpose.msra.mxu0 0
  %407 = vmatprep.subr.bf16.mxu0 0
  %408 = vmatpush1.bf16.xpose.msra.mxu0 0
  %409 = vmatprep.subr.bf16.mxu0 0
  %410 = vmatpush1.bf16.xpose.msra.mxu0 0
  %411 = vmatprep.subr.bf16.mxu0 0
  %412 = vmatpush1.bf16.xpose.msra.mxu0 0
  %413 = vmatprep.subr.bf16.mxu0 0
  %414 = vmatpush1.bf16.xpose.msra.mxu0 0
  %415 = vmatprep.mubr.bf16.mxu0 0
  %416 = vmatmul.mubr.bf16.gmra.mrb[0].mxu0 %v366
  %v417 = vpop.f32.mrb[0].mxu0
  %v418 = vadd.f32 %v38, %v417
  %v419 = vpop.f32.mrb[0].mxu0
  %v420 = vpop.f32.mrb[0].mxu0
  %v421 = vadd.f32 %v39, %v420
  %v422 = vpop.f32.mrb[0].mxu0
  %423 = vmatprep.mubr.bf16.mxu0 0
  %424 = vmatmul.mubr.bf16.gmra.mrb[0].mxu0 %v369
  %v425 = vpop.f32.mrb[0].mxu0
  %v426 = vadd.f32 %v40, %v425
  %v427 = vpop.f32.mrb[0].mxu0
  %v428 = vpop.f32.mrb[0].mxu0
  %v429 = vadd.f32 %v41, %v428
  %v430 = vpop.f32.mrb[0].mxu0
  %431 = vmatprep.mubr.bf16.mxu0 0
  %432 = vmatmul.mubr.bf16.gmra.mrb[0].mxu0 %v372
  %v433 = vpop.f32.mrb[0].mxu0
  %v434 = vadd.f32 %v42, %v433
  %v435 = vpop.f32.mrb[0].mxu0
  %v436 = vpop.f32.mrb[0].mxu0
  %v437 = vadd.f32 %v43, %v436
  %v438 = vpop.f32.mrb[0].mxu0
  %439 = vdwg.mxu0
  %v440 = vsel %vm95, %v418, -inf
  %441 = vmax.xlane.f32.xlu0 %v440
  %v442 = vpop.xlane.xlu0 %441
  %v443 = vsel %vm95, %v421, -inf
  %444 = vmax.xlane.f32.xlu0 %v443
  %v445 = vpop.xlane.xlu0 %444
  %v446 = vsel %vm95, %v426, -inf
  %447 = vmax.xlane.f32.xlu0 %v446
  %v448 = vpop.xlane.xlu0 %447
  %v449 = vsel %vm95, %v429, -inf
  %450 = vmax.xlane.f32.xlu0 %v449
  %v451 = vpop.xlane.xlu0 %450
  %v452 = vsel %vm95, %v434, -inf
  %453 = vmax.xlane.f32.xlu0 %v452
  %v454 = vpop.xlane.xlu0 %453
  %v455 = vsel %vm95, %v437, -inf
  %456 = vmax.xlane.f32.xlu0 %v455
  %v457 = vpop.xlane.xlu0 %456
  %v458 = vsub.f32 %v418, %v442
  %v459 = vsub.f32 %v421, %v445
  %v460 = vsub.f32 %v426, %v448
  %v461 = vsub.f32 %v429, %v451
  %v462 = vsub.f32 %v434, %v454
  %v463 = vsub.f32 %v437, %v457
  %v464 = vmul.f32 %v458, 1.442695
  %v465 = vpow.pop %v464
  %v466 = vmul.f32 %v459, 1.442695
  %v467 = vpow.pop %v466
  %v468 = vmul.f32 %v460, 1.442695
  %v469 = vpow.pop %v468
  %v470 = vmul.f32 %v461, 1.442695
  %v471 = vpow.pop %v470
  %v472 = vmul.f32 %v462, 1.442695
  %v473 = vpow.pop %v472
  %v474 = vmul.f32 %v463, 1.442695
  %v475 = vpow.pop %v474
  %v476 = vsel %vm95, %v465, 0.0
  %477 = vadd.xlane.f32.xlu0 %v476
  %v478 = vpop.xlane.xlu0 %477
  %v479 = vsel %vm95, %v467, 0.0
  %480 = vadd.xlane.f32.xlu0 %v479
  %v481 = vpop.xlane.xlu0 %480
  %v482 = vsel %vm95, %v469, 0.0
  %483 = vadd.xlane.f32.xlu0 %v482
  %v484 = vpop.xlane.xlu0 %483
  %v485 = vsel %vm95, %v471, 0.0
  %486 = vadd.xlane.f32.xlu0 %v485
  %v487 = vpop.xlane.xlu0 %486
  %v488 = vsel %vm95, %v473, 0.0
  %489 = vadd.xlane.f32.xlu0 %v488
  %v490 = vpop.xlane.xlu0 %489
  %v491 = vsel %vm95, %v475, 0.0
  %492 = vadd.xlane.f32.xlu0 %v491
  %v493 = vpop.xlane.xlu0 %492
  %v494 = vrcp.pop %v478
  %v495 = vrcp.pop %v481
  %v496 = vrcp.pop %v484
  %v497 = vrcp.pop %v487
  %v498 = vrcp.pop %v490
  %v499 = vrcp.pop %v493
  %v500 = vmul.f32 %v465, %v494
  %v501 = vmul.f32 %v467, %v495
  %v502 = vmul.f32 %v469, %v496
  %v503 = vmul.f32 %v471, %v497
  %v504 = vmul.f32 %v473, %v498
  %v505 = vmul.f32 %v475, %v499
  %v506 = vpack.c.bf16 %v501, %v500
  %v507 = vpack.c.bf16 %v503, %v502
  %v508 = vpack.c.bf16 %v505, %v504
  %509 = vrot.lane.b32.xlu0 %v352, 64
  %v510 = vpop.permute.xlu0 %509
  %511 = vrot.lane.b32.xlu0 %v353, 64
  %v512 = vpop.permute.xlu0 %511
  %513 = vrot.lane.b32.xlu0 %v354, 64
  %v514 = vpop.permute.xlu0 %513
  %v519 = vsel %vm95, %v506, 0
  %v522 = vsel %vm95, %v507, 0
  %v525 = vsel %vm95, %v508, 0
  %527 = vmatprep.subr.bf16.mxu0 0
  %528 = vmatpush1.bf16.msra.mxu0 %v510
  %529 = vmatprep.subr.bf16.mxu0 0
  %530 = vmatpush1.bf16.msra.mxu0 %v512
  %531 = vmatprep.subr.bf16.mxu0 0
  %532 = vmatpush1.bf16.msra.mxu0 %v514
  %533 = vmatprep.subr.bf16.mxu0 0
  %534 = vmatpush1.bf16.msra.mxu0 0
  %535 = vmatprep.subr.bf16.mxu0 0
  %536 = vmatpush1.bf16.msra.mxu0 0
  %537 = vmatprep.subr.bf16.mxu0 0
  %538 = vmatpush1.bf16.msra.mxu0 0
  %539 = vmatprep.subr.bf16.mxu0 0
  %540 = vmatpush1.bf16.msra.mxu0 0
  %541 = vmatprep.subr.bf16.mxu0 0
  %542 = vmatpush1.bf16.msra.mxu0 0
  %543 = vmatprep.subr.bf16.mxu0 0
  %544 = vmatpush1.bf16.msra.mxu0 0
  %545 = vmatprep.subr.bf16.mxu0 0
  %546 = vmatpush1.bf16.msra.mxu0 0
  %547 = vmatprep.subr.bf16.mxu0 0
  %548 = vmatpush1.bf16.msra.mxu0 0
  %549 = vmatprep.subr.bf16.mxu0 0
  %550 = vmatpush1.bf16.msra.mxu0 0
  %551 = vmatprep.subr.bf16.mxu0 0
  %552 = vmatpush1.bf16.msra.mxu0 0
  %553 = vmatprep.subr.bf16.mxu0 0
  %554 = vmatpush1.bf16.msra.mxu0 0
  %555 = vmatprep.subr.bf16.mxu0 0
  %556 = vmatpush1.bf16.msra.mxu0 0
  %557 = vmatprep.subr.bf16.mxu0 0
  %558 = vmatpush1.bf16.msra.mxu0 0
  %559 = vmatprep.mubr.bf16.mxu0 0
  %560 = vmatmul.mubr.bf16.gmra.mrb[0].mxu0 %v519
  %v561 = vpop.f32.mrb[0].mxu0
  %v562 = vadd.f32 0.0, %v561
  %v563 = vpop.f32.mrb[0].mxu0
  %v564 = vpop.f32.mrb[0].mxu0
  %v565 = vadd.f32 0.0, %v564
  %v566 = vpop.f32.mrb[0].mxu0
  %567 = vmatprep.mubr.bf16.mxu0 0
  %568 = vmatmul.mubr.bf16.gmra.mrb[0].mxu0 %v522
  %v569 = vpop.f32.mrb[0].mxu0
  %v570 = vadd.f32 0.0, %v569
  %v571 = vpop.f32.mrb[0].mxu0
  %v572 = vpop.f32.mrb[0].mxu0
  %v573 = vadd.f32 0.0, %v572
  %v574 = vpop.f32.mrb[0].mxu0
  %575 = vmatprep.mubr.bf16.mxu0 0
  %576 = vmatmul.mubr.bf16.gmra.mrb[0].mxu0 %v525
  %v577 = vpop.f32.mrb[0].mxu0
  %v578 = vadd.f32 0.0, %v577
  %v579 = vpop.f32.mrb[0].mxu0
  %v580 = vpop.f32.mrb[0].mxu0
  %v581 = vadd.f32 0.0, %v580
  %v582 = vpop.f32.mrb[0].mxu0
  %583 = vdwg.mxu0
  %584 = vrot.lane.b32.xlu0 %v352, 120
  %v585 = vpop.permute.xlu0 %584
  %586 = vrot.lane.b32.xlu0 %v353, 120
  %v587 = vpop.permute.xlu0 %586
  %588 = vrot.lane.b32.xlu0 %v354, 120
  %v589 = vpop.permute.xlu0 %588
  %590 = vrot.lane.b32.xlu0 %v352, 88
  %v591 = vpop.permute.xlu0 %590
  %592 = vrot.lane.b32.xlu0 %v353, 88
  %v593 = vpop.permute.xlu0 %592
  %594 = vrot.lane.b32.xlu0 %v354, 88
  %v595 = vpop.permute.xlu0 %594
  %v597 = vsel %vm364, %v585, 0
  %v600 = vsel %vm364, %v587, 0
  %v603 = vsel %vm364, %v589, 0
  %v606 = vsel %vm364, %v591, 0
  %v609 = vsel %vm364, %v593, 0
  %v612 = vsel %vm364, %v595, 0
  %614 = vmatprep.subr.bf16.mxu0 0
  %615 = vmatpush1.bf16.xpose.msra.mxu0 %v606
  %616 = vmatprep.subr.bf16.mxu0 0
  %617 = vmatpush1.bf16.xpose.msra.mxu0 %v609
  %618 = vmatprep.subr.bf16.mxu0 0
  %619 = vmatpush1.bf16.xpose.msra.mxu0 %v612
  %620 = vmatprep.subr.bf16.mxu0 0
  %621 = vmatpush1.bf16.xpose.msra.mxu0 0
  %622 = vmatprep.subr.bf16.mxu0 0
  %623 = vmatpush1.bf16.xpose.msra.mxu0 0
  %624 = vmatprep.subr.bf16.mxu0 0
  %625 = vmatpush1.bf16.xpose.msra.mxu0 0
  %626 = vmatprep.subr.bf16.mxu0 0
  %627 = vmatpush1.bf16.xpose.msra.mxu0 0
  %628 = vmatprep.subr.bf16.mxu0 0
  %629 = vmatpush1.bf16.xpose.msra.mxu0 0
  %630 = vmatprep.subr.bf16.mxu0 0
  %631 = vmatpush1.bf16.xpose.msra.mxu0 0
  %632 = vmatprep.subr.bf16.mxu0 0
  %633 = vmatpush1.bf16.xpose.msra.mxu0 0
  %634 = vmatprep.subr.bf16.mxu0 0
  %635 = vmatpush1.bf16.xpose.msra.mxu0 0
  %636 = vmatprep.subr.bf16.mxu0 0
  %637 = vmatpush1.bf16.xpose.msra.mxu0 0
  %638 = vmatprep.subr.bf16.mxu0 0
  %639 = vmatpush1.bf16.xpose.msra.mxu0 0
  %640 = vmatprep.subr.bf16.mxu0 0
  %641 = vmatpush1.bf16.xpose.msra.mxu0 0
  %642 = vmatprep.subr.bf16.mxu0 0
  %643 = vmatpush1.bf16.xpose.msra.mxu0 0
  %644 = vmatprep.subr.bf16.mxu0 0
  %645 = vmatpush1.bf16.xpose.msra.mxu0 0
  %646 = vmatprep.mubr.bf16.mxu0 0
  %647 = vmatmul.mubr.bf16.gmra.mrb[0].mxu0 %v597
  %v648 = vpop.f32.mrb[0].mxu0
  %v649 = vadd.f32 %v38, %v648
  %v650 = vpop.f32.mrb[0].mxu0
  %v651 = vpop.f32.mrb[0].mxu0
  %v652 = vadd.f32 %v39, %v651
  %v653 = vpop.f32.mrb[0].mxu0
  %654 = vmatprep.mubr.bf16.mxu0 0
  %655 = vmatmul.mubr.bf16.gmra.mrb[0].mxu0 %v600
  %v656 = vpop.f32.mrb[0].mxu0
  %v657 = vadd.f32 %v40, %v656
  %v658 = vpop.f32.mrb[0].mxu0
  %v659 = vpop.f32.mrb[0].mxu0
  %v660 = vadd.f32 %v41, %v659
  %v661 = vpop.f32.mrb[0].mxu0
  %662 = vmatprep.mubr.bf16.mxu0 0
  %663 = vmatmul.mubr.bf16.gmra.mrb[0].mxu0 %v603
  %v664 = vpop.f32.mrb[0].mxu0
  %v665 = vadd.f32 %v42, %v664
  %v666 = vpop.f32.mrb[0].mxu0
  %v667 = vpop.f32.mrb[0].mxu0
  %v668 = vadd.f32 %v43, %v667
  %v669 = vpop.f32.mrb[0].mxu0
  %670 = vdwg.mxu0
  %v671 = vsel %vm95, %v649, -inf
  %672 = vmax.xlane.f32.xlu0 %v671
  %v673 = vpop.xlane.xlu0 %672
  %v674 = vsel %vm95, %v652, -inf
  %675 = vmax.xlane.f32.xlu0 %v674
  %v676 = vpop.xlane.xlu0 %675
  %v677 = vsel %vm95, %v657, -inf
  %678 = vmax.xlane.f32.xlu0 %v677
  %v679 = vpop.xlane.xlu0 %678
  %v680 = vsel %vm95, %v660, -inf
  %681 = vmax.xlane.f32.xlu0 %v680
  %v682 = vpop.xlane.xlu0 %681
  %v683 = vsel %vm95, %v665, -inf
  %684 = vmax.xlane.f32.xlu0 %v683
  %v685 = vpop.xlane.xlu0 %684
  %v686 = vsel %vm95, %v668, -inf
  %687 = vmax.xlane.f32.xlu0 %v686
  %v688 = vpop.xlane.xlu0 %687
  %v689 = vsub.f32 %v649, %v673
  %v690 = vsub.f32 %v652, %v676
  %v691 = vsub.f32 %v657, %v679
  %v692 = vsub.f32 %v660, %v682
  %v693 = vsub.f32 %v665, %v685
  %v694 = vsub.f32 %v668, %v688
  %v695 = vmul.f32 %v689, 1.442695
  %v696 = vpow.pop %v695
  %v697 = vmul.f32 %v690, 1.442695
  %v698 = vpow.pop %v697
  %v699 = vmul.f32 %v691, 1.442695
  %v700 = vpow.pop %v699
  %v701 = vmul.f32 %v692, 1.442695
  %v702 = vpow.pop %v701
  %v703 = vmul.f32 %v693, 1.442695
  %v704 = vpow.pop %v703
  %v705 = vmul.f32 %v694, 1.442695
  %v706 = vpow.pop %v705
  %v707 = vsel %vm95, %v696, 0.0
  %708 = vadd.xlane.f32.xlu0 %v707
  %v709 = vpop.xlane.xlu0 %708
  %v710 = vsel %vm95, %v698, 0.0
  %711 = vadd.xlane.f32.xlu0 %v710
  %v712 = vpop.xlane.xlu0 %711
  %v713 = vsel %vm95, %v700, 0.0
  %714 = vadd.xlane.f32.xlu0 %v713
  %v715 = vpop.xlane.xlu0 %714
  %v716 = vsel %vm95, %v702, 0.0
  %717 = vadd.xlane.f32.xlu0 %v716
  %v718 = vpop.xlane.xlu0 %717
  %v719 = vsel %vm95, %v704, 0.0
  %720 = vadd.xlane.f32.xlu0 %v719
  %v721 = vpop.xlane.xlu0 %720
  %v722 = vsel %vm95, %v706, 0.0
  %723 = vadd.xlane.f32.xlu0 %v722
  %v724 = vpop.xlane.xlu0 %723
  %v725 = vrcp.pop %v709
  %v726 = vrcp.pop %v712
  %v727 = vrcp.pop %v715
  %v728 = vrcp.pop %v718
  %v729 = vrcp.pop %v721
  %v730 = vrcp.pop %v724
  %v731 = vmul.f32 %v696, %v725
  %v732 = vmul.f32 %v698, %v726
  %v733 = vmul.f32 %v700, %v727
  %v734 = vmul.f32 %v702, %v728
  %v735 = vmul.f32 %v704, %v729
  %v736 = vmul.f32 %v706, %v730
  %v737 = vpack.c.bf16 %v732, %v731
  %v738 = vpack.c.bf16 %v734, %v733
  %v739 = vpack.c.bf16 %v736, %v735
  %740 = vrot.lane.b32.xlu0 %v352, 56
  %v741 = vpop.permute.xlu0 %740
  %742 = vrot.lane.b32.xlu0 %v353, 56
  %v743 = vpop.permute.xlu0 %742
  %744 = vrot.lane.b32.xlu0 %v354, 56
  %v745 = vpop.permute.xlu0 %744
  %v750 = vsel %vm95, %v737, 0
  %v753 = vsel %vm95, %v738, 0
  %v756 = vsel %vm95, %v739, 0
  %758 = vmatprep.subr.bf16.mxu0 0
  %759 = vmatpush1.bf16.msra.mxu0 %v741
  %760 = vmatprep.subr.bf16.mxu0 0
  %761 = vmatpush1.bf16.msra.mxu0 %v743
  %762 = vmatprep.subr.bf16.mxu0 0
  %763 = vmatpush1.bf16.msra.mxu0 %v745
  %764 = vmatprep.subr.bf16.mxu0 0
  %765 = vmatpush1.bf16.msra.mxu0 0
  %766 = vmatprep.subr.bf16.mxu0 0
  %767 = vmatpush1.bf16.msra.mxu0 0
  %768 = vmatprep.subr.bf16.mxu0 0
  %769 = vmatpush1.bf16.msra.mxu0 0
  %770 = vmatprep.subr.bf16.mxu0 0
  %771 = vmatpush1.bf16.msra.mxu0 0
  %772 = vmatprep.subr.bf16.mxu0 0
  %773 = vmatpush1.bf16.msra.mxu0 0
  %774 = vmatprep.subr.bf16.mxu0 0
  %775 = vmatpush1.bf16.msra.mxu0 0
  %776 = vmatprep.subr.bf16.mxu0 0
  %777 = vmatpush1.bf16.msra.mxu0 0
  %778 = vmatprep.subr.bf16.mxu0 0
  %779 = vmatpush1.bf16.msra.mxu0 0
  %780 = vmatprep.subr.bf16.mxu0 0
  %781 = vmatpush1.bf16.msra.mxu0 0
  %782 = vmatprep.subr.bf16.mxu0 0
  %783 = vmatpush1.bf16.msra.mxu0 0
  %784 = vmatprep.subr.bf16.mxu0 0
  %785 = vmatpush1.bf16.msra.mxu0 0
  %786 = vmatprep.subr.bf16.mxu0 0
  %787 = vmatpush1.bf16.msra.mxu0 0
  %788 = vmatprep.subr.bf16.mxu0 0
  %789 = vmatpush1.bf16.msra.mxu0 0
  %790 = vmatprep.mubr.bf16.mxu0 0
  %791 = vmatmul.mubr.bf16.gmra.mrb[0].mxu0 %v750
  %v792 = vpop.f32.mrb[0].mxu0
  %v793 = vadd.f32 0.0, %v792
  %v794 = vpop.f32.mrb[0].mxu0
  %v795 = vpop.f32.mrb[0].mxu0
  %v796 = vadd.f32 0.0, %v795
  %v797 = vpop.f32.mrb[0].mxu0
  %798 = vmatprep.mubr.bf16.mxu0 0
  %799 = vmatmul.mubr.bf16.gmra.mrb[0].mxu0 %v753
  %v800 = vpop.f32.mrb[0].mxu0
  %v801 = vadd.f32 0.0, %v800
  %v802 = vpop.f32.mrb[0].mxu0
  %v803 = vpop.f32.mrb[0].mxu0
  %v804 = vadd.f32 0.0, %v803
  %v805 = vpop.f32.mrb[0].mxu0
  %806 = vmatprep.mubr.bf16.mxu0 0
  %807 = vmatmul.mubr.bf16.gmra.mrb[0].mxu0 %v756
  %v808 = vpop.f32.mrb[0].mxu0
  %v809 = vadd.f32 0.0, %v808
  %v810 = vpop.f32.mrb[0].mxu0
  %v811 = vpop.f32.mrb[0].mxu0
  %v812 = vadd.f32 0.0, %v811
  %v813 = vpop.f32.mrb[0].mxu0
  %814 = vdwg.mxu0
  %815 = vrot.lane.b32.xlu0 %v352, 112
  %v816 = vpop.permute.xlu0 %815
  %817 = vrot.lane.b32.xlu0 %v353, 112
  %v818 = vpop.permute.xlu0 %817
  %819 = vrot.lane.b32.xlu0 %v354, 112
  %v820 = vpop.permute.xlu0 %819
  %821 = vrot.lane.b32.xlu0 %v352, 80
  %v822 = vpop.permute.xlu0 %821
  %823 = vrot.lane.b32.xlu0 %v353, 80
  %v824 = vpop.permute.xlu0 %823
  %825 = vrot.lane.b32.xlu0 %v354, 80
  %v826 = vpop.permute.xlu0 %825
  %v828 = vsel %vm364, %v816, 0
  %v831 = vsel %vm364, %v818, 0
  %v834 = vsel %vm364, %v820, 0
  %v837 = vsel %vm364, %v822, 0
  %v840 = vsel %vm364, %v824, 0
  %v843 = vsel %vm364, %v826, 0
  %845 = vmatprep.subr.bf16.mxu0 0
  %846 = vmatpush1.bf16.xpose.msra.mxu0 %v837
  %847 = vmatprep.subr.bf16.mxu0 0
  %848 = vmatpush1.bf16.xpose.msra.mxu0 %v840
  %849 = vmatprep.subr.bf16.mxu0 0
  %850 = vmatpush1.bf16.xpose.msra.mxu0 %v843
  %851 = vmatprep.subr.bf16.mxu0 0
  %852 = vmatpush1.bf16.xpose.msra.mxu0 0
  %853 = vmatprep.subr.bf16.mxu0 0
  %854 = vmatpush1.bf16.xpose.msra.mxu0 0
  %855 = vmatprep.subr.bf16.mxu0 0
  %856 = vmatpush1.bf16.xpose.msra.mxu0 0
  %857 = vmatprep.subr.bf16.mxu0 0
  %858 = vmatpush1.bf16.xpose.msra.mxu0 0
  %859 = vmatprep.subr.bf16.mxu0 0
  %860 = vmatpush1.bf16.xpose.msra.mxu0 0
  %861 = vmatprep.subr.bf16.mxu0 0
  %862 = vmatpush1.bf16.xpose.msra.mxu0 0
  %863 = vmatprep.subr.bf16.mxu0 0
  %864 = vmatpush1.bf16.xpose.msra.mxu0 0
  %865 = vmatprep.subr.bf16.mxu0 0
  %866 = vmatpush1.bf16.xpose.msra.mxu0 0
  %867 = vmatprep.subr.bf16.mxu0 0
  %868 = vmatpush1.bf16.xpose.msra.mxu0 0
  %869 = vmatprep.subr.bf16.mxu0 0
  %870 = vmatpush1.bf16.xpose.msra.mxu0 0
  %871 = vmatprep.subr.bf16.mxu0 0
  %872 = vmatpush1.bf16.xpose.msra.mxu0 0
  %873 = vmatprep.subr.bf16.mxu0 0
  %874 = vmatpush1.bf16.xpose.msra.mxu0 0
  %875 = vmatprep.subr.bf16.mxu0 0
  %876 = vmatpush1.bf16.xpose.msra.mxu0 0
  %877 = vmatprep.mubr.bf16.mxu0 0
  %878 = vmatmul.mubr.bf16.gmra.mrb[0].mxu0 %v828
  %v879 = vpop.f32.mrb[0].mxu0
  %v880 = vadd.f32 %v38, %v879
  %v881 = vpop.f32.mrb[0].mxu0
  %v882 = vpop.f32.mrb[0].mxu0
  %v883 = vadd.f32 %v39, %v882
  %v884 = vpop.f32.mrb[0].mxu0
  %885 = vmatprep.mubr.bf16.mxu0 0
  %886 = vmatmul.mubr.bf16.gmra.mrb[0].mxu0 %v831
  %v887 = vpop.f32.mrb[0].mxu0
  %v888 = vadd.f32 %v40, %v887
  %v889 = vpop.f32.mrb[0].mxu0
  %v890 = vpop.f32.mrb[0].mxu0
  %v891 = vadd.f32 %v41, %v890
  %v892 = vpop.f32.mrb[0].mxu0
  %893 = vmatprep.mubr.bf16.mxu0 0
  %894 = vmatmul.mubr.bf16.gmra.mrb[0].mxu0 %v834
  %v895 = vpop.f32.mrb[0].mxu0
  %v896 = vadd.f32 %v42, %v895
  %v897 = vpop.f32.mrb[0].mxu0
  %v898 = vpop.f32.mrb[0].mxu0
  %v899 = vadd.f32 %v43, %v898
  %v900 = vpop.f32.mrb[0].mxu0
  %901 = vdwg.mxu0
  %v902 = vsel %vm95, %v880, -inf
  %903 = vmax.xlane.f32.xlu0 %v902
  %v904 = vpop.xlane.xlu0 %903
  %v905 = vsel %vm95, %v883, -inf
  %906 = vmax.xlane.f32.xlu0 %v905
  %v907 = vpop.xlane.xlu0 %906
  %v908 = vsel %vm95, %v888, -inf
  %909 = vmax.xlane.f32.xlu0 %v908
  %v910 = vpop.xlane.xlu0 %909
  %v911 = vsel %vm95, %v891, -inf
  %912 = vmax.xlane.f32.xlu0 %v911
  %v913 = vpop.xlane.xlu0 %912
  %v914 = vsel %vm95, %v896, -inf
  %915 = vmax.xlane.f32.xlu0 %v914
  %v916 = vpop.xlane.xlu0 %915
  %v917 = vsel %vm95, %v899, -inf
  %918 = vmax.xlane.f32.xlu0 %v917
  %v919 = vpop.xlane.xlu0 %918
  %v920 = vsub.f32 %v880, %v904
  %v921 = vsub.f32 %v883, %v907
  %v922 = vsub.f32 %v888, %v910
  %v923 = vsub.f32 %v891, %v913
  %v924 = vsub.f32 %v896, %v916
  %v925 = vsub.f32 %v899, %v919
  %v926 = vmul.f32 %v920, 1.442695
  %v927 = vpow.pop %v926
  %v928 = vmul.f32 %v921, 1.442695
  %v929 = vpow.pop %v928
  %v930 = vmul.f32 %v922, 1.442695
  %v931 = vpow.pop %v930
  %v932 = vmul.f32 %v923, 1.442695
  %v933 = vpow.pop %v932
  %v934 = vmul.f32 %v924, 1.442695
  %v935 = vpow.pop %v934
  %v936 = vmul.f32 %v925, 1.442695
  %v937 = vpow.pop %v936
  %v938 = vsel %vm95, %v927, 0.0
  %939 = vadd.xlane.f32.xlu0 %v938
  %v940 = vpop.xlane.xlu0 %939
  %v941 = vsel %vm95, %v929, 0.0
  %942 = vadd.xlane.f32.xlu0 %v941
  %v943 = vpop.xlane.xlu0 %942
  %v944 = vsel %vm95, %v931, 0.0
  %945 = vadd.xlane.f32.xlu0 %v944
  %v946 = vpop.xlane.xlu0 %945
  %v947 = vsel %vm95, %v933, 0.0
  %948 = vadd.xlane.f32.xlu0 %v947
  %v949 = vpop.xlane.xlu0 %948
  %v950 = vsel %vm95, %v935, 0.0
  %951 = vadd.xlane.f32.xlu0 %v950
  %v952 = vpop.xlane.xlu0 %951
  %v953 = vsel %vm95, %v937, 0.0
  %954 = vadd.xlane.f32.xlu0 %v953
  %v955 = vpop.xlane.xlu0 %954
  %v956 = vrcp.pop %v940
  %v957 = vrcp.pop %v943
  %v958 = vrcp.pop %v946
  %v959 = vrcp.pop %v949
  %v960 = vrcp.pop %v952
  %v961 = vrcp.pop %v955
  %v962 = vmul.f32 %v927, %v956
  %v963 = vmul.f32 %v929, %v957
  %v964 = vmul.f32 %v931, %v958
  %v965 = vmul.f32 %v933, %v959
  %v966 = vmul.f32 %v935, %v960
  %v967 = vmul.f32 %v937, %v961
  %v968 = vpack.c.bf16 %v963, %v962
  %v969 = vpack.c.bf16 %v965, %v964
  %v970 = vpack.c.bf16 %v967, %v966
  %971 = vrot.lane.b32.xlu0 %v352, 48
  %v972 = vpop.permute.xlu0 %971
  %973 = vrot.lane.b32.xlu0 %v353, 48
  %v974 = vpop.permute.xlu0 %973
  %975 = vrot.lane.b32.xlu0 %v354, 48
  %v976 = vpop.permute.xlu0 %975
  %v981 = vsel %vm95, %v968, 0
  %v984 = vsel %vm95, %v969, 0
  %v987 = vsel %vm95, %v970, 0
  %989 = vmatprep.subr.bf16.mxu0 0
  %990 = vmatpush1.bf16.msra.mxu0 %v972
  %991 = vmatprep.subr.bf16.mxu0 0
  %992 = vmatpush1.bf16.msra.mxu0 %v974
  %993 = vmatprep.subr.bf16.mxu0 0
  %994 = vmatpush1.bf16.msra.mxu0 %v976
  %995 = vmatprep.subr.bf16.mxu0 0
  %996 = vmatpush1.bf16.msra.mxu0 0
  %997 = vmatprep.subr.bf16.mxu0 0
  %998 = vmatpush1.bf16.msra.mxu0 0
  %999 = vmatprep.subr.bf16.mxu0 0
  %1000 = vmatpush1.bf16.msra.mxu0 0
  %1001 = vmatprep.subr.bf16.mxu0 0
  %1002 = vmatpush1.bf16.msra.mxu0 0
  %1003 = vmatprep.subr.bf16.mxu0 0
  %1004 = vmatpush1.bf16.msra.mxu0 0
  %1005 = vmatprep.subr.bf16.mxu0 0
  %1006 = vmatpush1.bf16.msra.mxu0 0
  %1007 = vmatprep.subr.bf16.mxu0 0
  %1008 = vmatpush1.bf16.msra.mxu0 0
  %1009 = vmatprep.subr.bf16.mxu0 0
  %1010 = vmatpush1.bf16.msra.mxu0 0
  %1011 = vmatprep.subr.bf16.mxu0 0
  %1012 = vmatpush1.bf16.msra.mxu0 0
  %1013 = vmatprep.subr.bf16.mxu0 0
  %1014 = vmatpush1.bf16.msra.mxu0 0
  %1015 = vmatprep.subr.bf16.mxu0 0
  %1016 = vmatpush1.bf16.msra.mxu0 0
  %1017 = vmatprep.subr.bf16.mxu0 0
  %1018 = vmatpush1.bf16.msra.mxu0 0
  %1019 = vmatprep.subr.bf16.mxu0 0
  %1020 = vmatpush1.bf16.msra.mxu0 0
  %1021 = vmatprep.mubr.bf16.mxu0 0
  %1022 = vmatmul.mubr.bf16.gmra.mrb[0].mxu0 %v981
  %v1023 = vpop.f32.mrb[0].mxu0
  %v1024 = vadd.f32 0.0, %v1023
  %v1025 = vpop.f32.mrb[0].mxu0
  %v1026 = vpop.f32.mrb[0].mxu0
  %v1027 = vadd.f32 0.0, %v1026
  %v1028 = vpop.f32.mrb[0].mxu0
  %1029 = vmatprep.mubr.bf16.mxu0 0
  %1030 = vmatmul.mubr.bf16.gmra.mrb[0].mxu0 %v984
  %v1031 = vpop.f32.mrb[0].mxu0
  %v1032 = vadd.f32 0.0, %v1031
  %v1033 = vpop.f32.mrb[0].mxu0
  %v1034 = vpop.f32.mrb[0].mxu0
  %v1035 = vadd.f32 0.0, %v1034
  %v1036 = vpop.f32.mrb[0].mxu0
  %1037 = vmatprep.mubr.bf16.mxu0 0
  %1038 = vmatmul.mubr.bf16.gmra.mrb[0].mxu0 %v987
  %v1039 = vpop.f32.mrb[0].mxu0
  %v1040 = vadd.f32 0.0, %v1039
  %v1041 = vpop.f32.mrb[0].mxu0
  %v1042 = vpop.f32.mrb[0].mxu0
  %v1043 = vadd.f32 0.0, %v1042
  %v1044 = vpop.f32.mrb[0].mxu0
  %1045 = vdwg.mxu0
  %1046 = vrot.lane.b32.xlu0 %v352, 104
  %v1047 = vpop.permute.xlu0 %1046
  %1048 = vrot.lane.b32.xlu0 %v353, 104
  %v1049 = vpop.permute.xlu0 %1048
  %1050 = vrot.lane.b32.xlu0 %v354, 104
  %v1051 = vpop.permute.xlu0 %1050
  %1052 = vrot.lane.b32.xlu0 %v352, 72
  %v1053 = vpop.permute.xlu0 %1052
  %1054 = vrot.lane.b32.xlu0 %v353, 72
  %v1055 = vpop.permute.xlu0 %1054
  %1056 = vrot.lane.b32.xlu0 %v354, 72
  %v1057 = vpop.permute.xlu0 %1056
  %v1059 = vsel %vm364, %v1047, 0
  %v1062 = vsel %vm364, %v1049, 0
  %v1065 = vsel %vm364, %v1051, 0
  %v1068 = vsel %vm364, %v1053, 0
  %v1071 = vsel %vm364, %v1055, 0
  %v1074 = vsel %vm364, %v1057, 0
  %1076 = vmatprep.subr.bf16.mxu0 0
  %1077 = vmatpush1.bf16.xpose.msra.mxu0 %v1068
  %1078 = vmatprep.subr.bf16.mxu0 0
  %1079 = vmatpush1.bf16.xpose.msra.mxu0 %v1071
  %1080 = vmatprep.subr.bf16.mxu0 0
  %1081 = vmatpush1.bf16.xpose.msra.mxu0 %v1074
  %1082 = vmatprep.subr.bf16.mxu0 0
  %1083 = vmatpush1.bf16.xpose.msra.mxu0 0
  %1084 = vmatprep.subr.bf16.mxu0 0
  %1085 = vmatpush1.bf16.xpose.msra.mxu0 0
  %1086 = vmatprep.subr.bf16.mxu0 0
  %1087 = vmatpush1.bf16.xpose.msra.mxu0 0
  %1088 = vmatprep.subr.bf16.mxu0 0
  %1089 = vmatpush1.bf16.xpose.msra.mxu0 0
  %1090 = vmatprep.subr.bf16.mxu0 0
  %1091 = vmatpush1.bf16.xpose.msra.mxu0 0
  %1092 = vmatprep.subr.bf16.mxu0 0
  %1093 = vmatpush1.bf16.xpose.msra.mxu0 0
  %1094 = vmatprep.subr.bf16.mxu0 0
  %1095 = vmatpush1.bf16.xpose.msra.mxu0 0
  %1096 = vmatprep.subr.bf16.mxu0 0
  %1097 = vmatpush1.bf16.xpose.msra.mxu0 0
  %1098 = vmatprep.subr.bf16.mxu0 0
  %1099 = vmatpush1.bf16.xpose.msra.mxu0 0
  %1100 = vmatprep.subr.bf16.mxu0 0
  %1101 = vmatpush1.bf16.xpose.msra.mxu0 0
  %1102 = vmatprep.subr.bf16.mxu0 0
  %1103 = vmatpush1.bf16.xpose.msra.mxu0 0
  %1104 = vmatprep.subr.bf16.mxu0 0
  %1105 = vmatpush1.bf16.xpose.msra.mxu0 0
  %1106 = vmatprep.subr.bf16.mxu0 0
  %1107 = vmatpush1.bf16.xpose.msra.mxu0 0
  %1108 = vmatprep.mubr.bf16.mxu0 0
  %1109 = vmatmul.mubr.bf16.gmra.mrb[0].mxu0 %v1059
  %v1110 = vpop.f32.mrb[0].mxu0
  %v1111 = vadd.f32 %v38, %v1110
  %v1112 = vpop.f32.mrb[0].mxu0
  %v1113 = vpop.f32.mrb[0].mxu0
  %v1114 = vadd.f32 %v39, %v1113
  %v1115 = vpop.f32.mrb[0].mxu0
  %1116 = vmatprep.mubr.bf16.mxu0 0
  %1117 = vmatmul.mubr.bf16.gmra.mrb[0].mxu0 %v1062
  %v1118 = vpop.f32.mrb[0].mxu0
  %v1119 = vadd.f32 %v40, %v1118
  %v1120 = vpop.f32.mrb[0].mxu0
  %v1121 = vpop.f32.mrb[0].mxu0
  %v1122 = vadd.f32 %v41, %v1121
  %v1123 = vpop.f32.mrb[0].mxu0
  %1124 = vmatprep.mubr.bf16.mxu0 0
  %1125 = vmatmul.mubr.bf16.gmra.mrb[0].mxu0 %v1065
  %v1126 = vpop.f32.mrb[0].mxu0
  %v1127 = vadd.f32 %v42, %v1126
  %v1128 = vpop.f32.mrb[0].mxu0
  %v1129 = vpop.f32.mrb[0].mxu0
  %v1130 = vadd.f32 %v43, %v1129
  %v1131 = vpop.f32.mrb[0].mxu0
  %1132 = vdwg.mxu0
  %v1133 = vsel %vm95, %v1111, -inf
  %1134 = vmax.xlane.f32.xlu0 %v1133
  %v1135 = vpop.xlane.xlu0 %1134
  %v1136 = vsel %vm95, %v1114, -inf
  %1137 = vmax.xlane.f32.xlu0 %v1136
  %v1138 = vpop.xlane.xlu0 %1137
  %v1139 = vsel %vm95, %v1119, -inf
  %1140 = vmax.xlane.f32.xlu0 %v1139
  %v1141 = vpop.xlane.xlu0 %1140
  %v1142 = vsel %vm95, %v1122, -inf
  %1143 = vmax.xlane.f32.xlu0 %v1142
  %v1144 = vpop.xlane.xlu0 %1143
  %v1145 = vsel %vm95, %v1127, -inf
  %1146 = vmax.xlane.f32.xlu0 %v1145
  %v1147 = vpop.xlane.xlu0 %1146
  %v1148 = vsel %vm95, %v1130, -inf
  %1149 = vmax.xlane.f32.xlu0 %v1148
  %v1150 = vpop.xlane.xlu0 %1149
  %v1151 = vsub.f32 %v1111, %v1135
  %v1152 = vsub.f32 %v1114, %v1138
  %v1153 = vsub.f32 %v1119, %v1141
  %v1154 = vsub.f32 %v1122, %v1144
  %v1155 = vsub.f32 %v1127, %v1147
  %v1156 = vsub.f32 %v1130, %v1150
  %v1157 = vmul.f32 %v1151, 1.442695
  %v1158 = vpow.pop %v1157
  %v1159 = vmul.f32 %v1152, 1.442695
  %v1160 = vpow.pop %v1159
  %v1161 = vmul.f32 %v1153, 1.442695
  %v1162 = vpow.pop %v1161
  %v1163 = vmul.f32 %v1154, 1.442695
  %v1164 = vpow.pop %v1163
  %v1165 = vmul.f32 %v1155, 1.442695
  %v1166 = vpow.pop %v1165
  %v1167 = vmul.f32 %v1156, 1.442695
  %v1168 = vpow.pop %v1167
  %v1169 = vsel %vm95, %v1158, 0.0
  %1170 = vadd.xlane.f32.xlu0 %v1169
  %v1171 = vpop.xlane.xlu0 %1170
  %v1172 = vsel %vm95, %v1160, 0.0
  %1173 = vadd.xlane.f32.xlu0 %v1172
  %v1174 = vpop.xlane.xlu0 %1173
  %v1175 = vsel %vm95, %v1162, 0.0
  %1176 = vadd.xlane.f32.xlu0 %v1175
  %v1177 = vpop.xlane.xlu0 %1176
  %v1178 = vsel %vm95, %v1164, 0.0
  %1179 = vadd.xlane.f32.xlu0 %v1178
  %v1180 = vpop.xlane.xlu0 %1179
  %v1181 = vsel %vm95, %v1166, 0.0
  %1182 = vadd.xlane.f32.xlu0 %v1181
  %v1183 = vpop.xlane.xlu0 %1182
  %v1184 = vsel %vm95, %v1168, 0.0
  %1185 = vadd.xlane.f32.xlu0 %v1184
  %v1186 = vpop.xlane.xlu0 %1185
  %v1187 = vrcp.pop %v1171
  %v1188 = vrcp.pop %v1174
  %v1189 = vrcp.pop %v1177
  %v1190 = vrcp.pop %v1180
  %v1191 = vrcp.pop %v1183
  %v1192 = vrcp.pop %v1186
  %v1193 = vmul.f32 %v1158, %v1187
  %v1194 = vmul.f32 %v1160, %v1188
  %v1195 = vmul.f32 %v1162, %v1189
  %v1196 = vmul.f32 %v1164, %v1190
  %v1197 = vmul.f32 %v1166, %v1191
  %v1198 = vmul.f32 %v1168, %v1192
  %v1199 = vpack.c.bf16 %v1194, %v1193
  %v1200 = vpack.c.bf16 %v1196, %v1195
  %v1201 = vpack.c.bf16 %v1198, %v1197
  %1202 = vrot.lane.b32.xlu0 %v352, 40
  %v1203 = vpop.permute.xlu0 %1202
  %1204 = vrot.lane.b32.xlu0 %v353, 40
  %v1205 = vpop.permute.xlu0 %1204
  %1206 = vrot.lane.b32.xlu0 %v354, 40
  %v1207 = vpop.permute.xlu0 %1206
  %v1212 = vsel %vm95, %v1199, 0
  %v1215 = vsel %vm95, %v1200, 0
  %v1218 = vsel %vm95, %v1201, 0
  %1220 = vmatprep.subr.bf16.mxu0 0
  %1221 = vmatpush1.bf16.msra.mxu0 %v1203
  %1222 = vmatprep.subr.bf16.mxu0 0
  %1223 = vmatpush1.bf16.msra.mxu0 %v1205
  %1224 = vmatprep.subr.bf16.mxu0 0
  %1225 = vmatpush1.bf16.msra.mxu0 %v1207
  %1226 = vmatprep.subr.bf16.mxu0 0
  %1227 = vmatpush1.bf16.msra.mxu0 0
  %1228 = vmatprep.subr.bf16.mxu0 0
  %1229 = vmatpush1.bf16.msra.mxu0 0
  %1230 = vmatprep.subr.bf16.mxu0 0
  %1231 = vmatpush1.bf16.msra.mxu0 0
  %1232 = vmatprep.subr.bf16.mxu0 0
  %1233 = vmatpush1.bf16.msra.mxu0 0
  %1234 = vmatprep.subr.bf16.mxu0 0
  %1235 = vmatpush1.bf16.msra.mxu0 0
  %1236 = vmatprep.subr.bf16.mxu0 0
  %1237 = vmatpush1.bf16.msra.mxu0 0
  %1238 = vmatprep.subr.bf16.mxu0 0
  %1239 = vmatpush1.bf16.msra.mxu0 0
  %1240 = vmatprep.subr.bf16.mxu0 0
  %1241 = vmatpush1.bf16.msra.mxu0 0
  %1242 = vmatprep.subr.bf16.mxu0 0
  %1243 = vmatpush1.bf16.msra.mxu0 0
  %1244 = vmatprep.subr.bf16.mxu0 0
  %1245 = vmatpush1.bf16.msra.mxu0 0
  %1246 = vmatprep.subr.bf16.mxu0 0
  %1247 = vmatpush1.bf16.msra.mxu0 0
  %1248 = vmatprep.subr.bf16.mxu0 0
  %1249 = vmatpush1.bf16.msra.mxu0 0
  %1250 = vmatprep.subr.bf16.mxu0 0
  %1251 = vmatpush1.bf16.msra.mxu0 0
  %1252 = vmatprep.mubr.bf16.mxu0 0
  %1253 = vmatmul.mubr.bf16.gmra.mrb[0].mxu0 %v1212
  %v1254 = vpop.f32.mrb[0].mxu0
  %v1255 = vadd.f32 0.0, %v1254
  %v1256 = vpop.f32.mrb[0].mxu0
  %v1257 = vpop.f32.mrb[0].mxu0
  %v1258 = vadd.f32 0.0, %v1257
  %v1259 = vpop.f32.mrb[0].mxu0
  %1260 = vmatprep.mubr.bf16.mxu0 0
  %1261 = vmatmul.mubr.bf16.gmra.mrb[0].mxu0 %v1215
  %v1262 = vpop.f32.mrb[0].mxu0
  %v1263 = vadd.f32 0.0, %v1262
  %v1264 = vpop.f32.mrb[0].mxu0
  %v1265 = vpop.f32.mrb[0].mxu0
  %v1266 = vadd.f32 0.0, %v1265
  %v1267 = vpop.f32.mrb[0].mxu0
  %1268 = vmatprep.mubr.bf16.mxu0 0
  %1269 = vmatmul.mubr.bf16.gmra.mrb[0].mxu0 %v1218
  %v1270 = vpop.f32.mrb[0].mxu0
  %v1271 = vadd.f32 0.0, %v1270
  %v1272 = vpop.f32.mrb[0].mxu0
  %v1273 = vpop.f32.mrb[0].mxu0
  %v1274 = vadd.f32 0.0, %v1273
  %v1275 = vpop.f32.mrb[0].mxu0
  %1276 = vdwg.mxu0
  %1283 = vrot.lane.b32.xlu0 %v793, 8
  %v1284 = vpop.permute.xlu0 %1283
  %1285 = vrot.lane.b32.xlu0 %v796, 8
  %v1286 = vpop.permute.xlu0 %1285
  %1287 = vrot.lane.b32.xlu0 %v801, 8
  %v1288 = vpop.permute.xlu0 %1287
  %1289 = vrot.lane.b32.xlu0 %v804, 8
  %v1290 = vpop.permute.xlu0 %1289
  %1291 = vrot.lane.b32.xlu0 %v809, 8
  %v1292 = vpop.permute.xlu0 %1291
  %1293 = vrot.lane.b32.xlu0 %v812, 8
  %v1294 = vpop.permute.xlu0 %1293
  %1307 = vrot.lane.b32.xlu0 %v1024, 16
  %v1308 = vpop.permute.xlu0 %1307
  %1309 = vrot.lane.b32.xlu0 %v1027, 16
  %v1310 = vpop.permute.xlu0 %1309
  %1311 = vrot.lane.b32.xlu0 %v1032, 16
  %v1312 = vpop.permute.xlu0 %1311
  %1313 = vrot.lane.b32.xlu0 %v1035, 16
  %v1314 = vpop.permute.xlu0 %1313
  %1315 = vrot.lane.b32.xlu0 %v1040, 16
  %v1316 = vpop.permute.xlu0 %1315
  %1317 = vrot.lane.b32.xlu0 %v1043, 16
  %v1318 = vpop.permute.xlu0 %1317
  %1331 = vrot.lane.b32.xlu0 %v1255, 24
  %v1332 = vpop.permute.xlu0 %1331
  %1333 = vrot.lane.b32.xlu0 %v1258, 24
  %v1334 = vpop.permute.xlu0 %1333
  %1335 = vrot.lane.b32.xlu0 %v1263, 24
  %v1336 = vpop.permute.xlu0 %1335
  %1337 = vrot.lane.b32.xlu0 %v1266, 24
  %v1338 = vpop.permute.xlu0 %1337
  %1339 = vrot.lane.b32.xlu0 %v1271, 24
  %v1340 = vpop.permute.xlu0 %1339
  %1341 = vrot.lane.b32.xlu0 %v1274, 24
  %v1342 = vpop.permute.xlu0 %1341
  %v1349 = vsel %vm364, %v562, %v1284
  %v1350 = vsel %vm364, %v565, %v1286
  %v1351 = vsel %vm364, %v570, %v1288
  %v1352 = vsel %vm364, %v573, %v1290
  %v1353 = vsel %vm364, %v578, %v1292
  %v1354 = vsel %vm364, %v581, %v1294
  %vm1355 = vcmask 130048
  %v1356 = vsel %vm1355, %v1349, %v1308
  %v1357 = vsel %vm1355, %v1350, %v1310
  %v1358 = vsel %vm1355, %v1351, %v1312
  %v1359 = vsel %vm1355, %v1352, %v1314
  %v1360 = vsel %vm1355, %v1353, %v1316
  %v1361 = vsel %vm1355, %v1354, %v1318
  %vm1362 = vcmask 195584
  %v1363 = vsel %vm1362, %v1356, %v1332
  %v1364 = vsel %vm1362, %v1357, %v1334
  %v1365 = vsel %vm1362, %v1358, %v1336
  %v1366 = vsel %vm1362, %v1359, %v1338
  %v1367 = vsel %vm1362, %v1360, %v1340
  %v1368 = vsel %vm1362, %v1361, %v1342
  %v1369 = vpack.c.bf16 %v1364, %v1363
  %v1370 = vpack.c.bf16 %v1366, %v1365
  %v1371 = vpack.c.bf16 %v1368, %v1367
  %v1372 = vld [vmem:[%s6] sm:$0xf]
  %v1373 = vld [vmem:[%s6 + $0x4] sm:$0xf]
  %v1374 = vld [vmem:[%s6 + $0x8] sm:$0xf]
  %v1375 = vld [vmem:[%s6 + $0xc] sm:$0xf]
  %v1376 = vlaneseq
  %v1377 = vshrl.u32 %v1376, 7
  %v1378 = vsub.s32 3, %v1377
  %v1379 = vrot.slane %v162, %v1378
  %v1384 = vunpack.c.l.b16 %v1372
  %v1385 = vunpack.c.l.b16 %v1373
  %v1386 = vunpack.c.l.b16 %v1374
  %v1387 = vunpack.c.l.b16 %v1375
  %v1388 = vpack.c.b16 %v1385, %v1384
  %v1389 = vpack.c.b16 %v1387, %v1386
  %v1393 = vsel %vm163, %v1369, 0
  %v1396 = vsel %vm163, %v1370, 0
  %v1399 = vsel %vm163, %v1371, 0
  %1401 = vmatprep.subr.bf16.mxu0 0
  %1402 = vmatpush1.bf16.msra.mxu0 %v1388
  %1403 = vmatprep.subr.bf16.mxu0 0
  %1404 = vmatpush1.bf16.msra.mxu0 %v1389
  %1405 = vmatprep.subr.bf16.mxu0 0
  %1406 = vmatpush1.bf16.msra.mxu0 0
  %1407 = vmatprep.subr.bf16.mxu0 0
  %1408 = vmatpush1.bf16.msra.mxu0 0
  %1409 = vmatprep.subr.bf16.mxu0 0
  %1410 = vmatpush1.bf16.msra.mxu0 0
  %1411 = vmatprep.subr.bf16.mxu0 0
  %1412 = vmatpush1.bf16.msra.mxu0 0
  %1413 = vmatprep.subr.bf16.mxu0 0
  %1414 = vmatpush1.bf16.msra.mxu0 0
  %1415 = vmatprep.subr.bf16.mxu0 0
  %1416 = vmatpush1.bf16.msra.mxu0 0
  %1417 = vmatprep.subr.bf16.mxu0 0
  %1418 = vmatpush1.bf16.msra.mxu0 0
  %1419 = vmatprep.subr.bf16.mxu0 0
  %1420 = vmatpush1.bf16.msra.mxu0 0
  %1421 = vmatprep.subr.bf16.mxu0 0
  %1422 = vmatpush1.bf16.msra.mxu0 0
  %1423 = vmatprep.subr.bf16.mxu0 0
  %1424 = vmatpush1.bf16.msra.mxu0 0
  %1425 = vmatprep.subr.bf16.mxu0 0
  %1426 = vmatpush1.bf16.msra.mxu0 0
  %1427 = vmatprep.subr.bf16.mxu0 0
  %1428 = vmatpush1.bf16.msra.mxu0 0
  %1429 = vmatprep.subr.bf16.mxu0 0
  %1430 = vmatpush1.bf16.msra.mxu0 0
  %1431 = vmatprep.subr.bf16.mxu0 0
  %1432 = vmatpush1.bf16.msra.mxu0 0
  %1433 = vmatprep.mubr.bf16.mxu0 0
  %1434 = vmatmul.mubr.bf16.gmra.mrb[0].mxu0 %v1393
  %v1435 = vpop.f32.mrb[0].mxu0
  %v1436 = vadd.f32 %v1379, %v1435
  %v1437 = vpop.f32.mrb[0].mxu0
  %v1438 = vpop.f32.mrb[0].mxu0
  %v1439 = vadd.f32 %v1379, %v1438
  %v1440 = vpop.f32.mrb[0].mxu0
  %1441 = vmatprep.mubr.bf16.mxu0 0
  %1442 = vmatmul.mubr.bf16.gmra.mrb[0].mxu0 %v1396
  %v1443 = vpop.f32.mrb[0].mxu0
  %v1444 = vadd.f32 %v1379, %v1443
  %v1445 = vpop.f32.mrb[0].mxu0
  %v1446 = vpop.f32.mrb[0].mxu0
  %v1447 = vadd.f32 %v1379, %v1446
  %v1448 = vpop.f32.mrb[0].mxu0
  %1449 = vmatprep.mubr.bf16.mxu0 0
  %1450 = vmatmul.mubr.bf16.gmra.mrb[0].mxu0 %v1399
  %v1451 = vpop.f32.mrb[0].mxu0
  %v1452 = vadd.f32 %v1379, %v1451
  %v1453 = vpop.f32.mrb[0].mxu0
  %v1454 = vpop.f32.mrb[0].mxu0
  %v1455 = vadd.f32 %v1379, %v1454
  %v1456 = vpop.f32.mrb[0].mxu0
  %1457 = vdwg.mxu0
  %v1458 = vadd.f32 %v140, %v1436
  %v1459 = vadd.f32 %v143, %v1439
  %v1460 = vadd.f32 %v148, %v1444
  %v1461 = vadd.f32 %v151, %v1447
  %v1462 = vadd.f32 %v156, %v1452
  %v1463 = vadd.f32 %v159, %v1455
  %v1464 = vsel %vm163, %v1458, 0.0
  %1465 = vadd.xlane.f32.xlu0 %v1464
  %v1466 = vpop.xlane.xlu0 %1465
  %v1467 = vsel %vm163, %v1459, 0.0
  %1468 = vadd.xlane.f32.xlu0 %v1467
  %v1469 = vpop.xlane.xlu0 %1468
  %v1470 = vsel %vm163, %v1460, 0.0
  %1471 = vadd.xlane.f32.xlu0 %v1470
  %v1472 = vpop.xlane.xlu0 %1471
  %v1473 = vsel %vm163, %v1461, 0.0
  %1474 = vadd.xlane.f32.xlu0 %v1473
  %v1475 = vpop.xlane.xlu0 %1474
  %v1476 = vsel %vm163, %v1462, 0.0
  %1477 = vadd.xlane.f32.xlu0 %v1476
  %v1478 = vpop.xlane.xlu0 %1477
  %v1479 = vsel %vm163, %v1463, 0.0
  %1480 = vadd.xlane.f32.xlu0 %v1479
  %v1481 = vpop.xlane.xlu0 %1480
  %v1482 = vmul.f32 %v1466, %v182
  %v1483 = vmul.f32 %v1469, %v182
  %v1484 = vmul.f32 %v1472, %v182
  %v1485 = vmul.f32 %v1475, %v182
  %v1486 = vmul.f32 %v1478, %v182
  %v1487 = vmul.f32 %v1481, %v182
  %v1488 = vsub.f32 %v1458, %v1482
  %v1489 = vsub.f32 %v1459, %v1483
  %v1490 = vsub.f32 %v1460, %v1484
  %v1491 = vsub.f32 %v1461, %v1485
  %v1492 = vsub.f32 %v1462, %v1486
  %v1493 = vsub.f32 %v1463, %v1487
  %v1494 = vmul.f32 %v1488, %v1488
  %v1495 = vmul.f32 %v1489, %v1489
  %v1496 = vmul.f32 %v1490, %v1490
  %v1497 = vmul.f32 %v1491, %v1491
  %v1498 = vmul.f32 %v1492, %v1492
  %v1499 = vmul.f32 %v1493, %v1493
  %v1500 = vsel %vm163, %v1494, 0.0
  %1501 = vadd.xlane.f32.xlu0 %v1500
  %v1502 = vpop.xlane.xlu0 %1501
  %v1503 = vsel %vm163, %v1495, 0.0
  %1504 = vadd.xlane.f32.xlu0 %v1503
  %v1505 = vpop.xlane.xlu0 %1504
  %v1506 = vsel %vm163, %v1496, 0.0
  %1507 = vadd.xlane.f32.xlu0 %v1506
  %v1508 = vpop.xlane.xlu0 %1507
  %v1509 = vsel %vm163, %v1497, 0.0
  %1510 = vadd.xlane.f32.xlu0 %v1509
  %v1511 = vpop.xlane.xlu0 %1510
  %v1512 = vsel %vm163, %v1498, 0.0
  %1513 = vadd.xlane.f32.xlu0 %v1512
  %v1514 = vpop.xlane.xlu0 %1513
  %v1515 = vsel %vm163, %v1499, 0.0
  %1516 = vadd.xlane.f32.xlu0 %v1515
  %v1517 = vpop.xlane.xlu0 %1516
  %v1518 = vmul.f32 %v1502, %v182
  %v1519 = vmul.f32 %v1505, %v182
  %v1520 = vmul.f32 %v1508, %v182
  %v1521 = vmul.f32 %v1511, %v182
  %v1522 = vmul.f32 %v1514, %v182
  %v1523 = vmul.f32 %v1517, %v182
  %v1524 = vadd.f32 %v1518, 1e-06
  %v1525 = vadd.f32 %v1519, 1e-06
  %v1526 = vadd.f32 %v1520, 1e-06
  %v1527 = vadd.f32 %v1521, 1e-06
  %v1528 = vadd.f32 %v1522, 1e-06
  %v1529 = vadd.f32 %v1523, 1e-06
  %v1530 = vrsqrt.pop %v1524
  %v1531 = vrsqrt.pop %v1525
  %v1532 = vrsqrt.pop %v1526
  %v1533 = vrsqrt.pop %v1527
  %v1534 = vrsqrt.pop %v1528
  %v1535 = vrsqrt.pop %v1529
  %v1536 = vmul.f32 %v1488, %v1530
  %v1537 = vmul.f32 %v1489, %v1531
  %v1538 = vmul.f32 %v1490, %v1532
  %v1539 = vmul.f32 %v1491, %v1533
  %v1540 = vmul.f32 %v1492, %v1534
  %v1541 = vmul.f32 %v1493, %v1535
  %v1542 = vlaneseq
  %v1543 = vshrl.u32 %v1542, 7
  %v1544 = vsub.s32 4, %v1543
  %v1545 = vrot.slane %v162, %v1544
  %v1546 = vmul.f32 %v1536, %v1545
  %v1547 = vmul.f32 %v1537, %v1545
  %v1548 = vmul.f32 %v1538, %v1545
  %v1549 = vmul.f32 %v1539, %v1545
  %v1550 = vmul.f32 %v1540, %v1545
  %v1551 = vmul.f32 %v1541, %v1545
  %v1552 = vlaneseq
  %v1553 = vshrl.u32 %v1552, 7
  %v1554 = vsub.s32 5, %v1553
  %v1555 = vrot.slane %v162, %v1554
  %v1556 = vadd.f32 %v1546, %v1555
  %v1557 = vadd.f32 %v1547, %v1555
  %v1558 = vadd.f32 %v1548, %v1555
  %v1559 = vadd.f32 %v1549, %v1555
  %v1560 = vadd.f32 %v1550, %v1555
  %v1561 = vadd.f32 %v1551, %v1555
  %v1562 = vpack.c.bf16 %v1557, %v1556
  %v1563 = vpack.c.bf16 %v1559, %v1558
  %v1564 = vpack.c.bf16 %v1561, %v1560
  %v1565 = vld [vmem:[%s7] sm:$0xf]
  %v1566 = vld [vmem:[%s7 + $0x4] sm:$0xf]
  %v1567 = vld [vmem:[%s7 + $0x8] sm:$0xf]
  %v1568 = vld [vmem:[%s7 + $0xc] sm:$0xf]
  %v1569 = vlaneseq
  %v1570 = vshrl.u32 %v1569, 7
  %v1571 = vsub.s32 6, %v1570
  %v1572 = vrot.slane %v162, %v1571
  %v1577 = vunpack.c.l.b16 %v1565
  %v1578 = vunpack.c.l.b16 %v1566
  %v1579 = vunpack.c.l.b16 %v1567
  %v1580 = vunpack.c.l.b16 %v1568
  %v1581 = vpack.c.b16 %v1578, %v1577
  %v1582 = vpack.c.b16 %v1580, %v1579
  %v1586 = vsel %vm163, %v1562, 0
  %v1589 = vsel %vm163, %v1563, 0
  %v1592 = vsel %vm163, %v1564, 0
  %1594 = vmatprep.subr.bf16.mxu0 0
  %1595 = vmatpush1.bf16.msra.mxu0 %v1581
  %1596 = vmatprep.subr.bf16.mxu0 0
  %1597 = vmatpush1.bf16.msra.mxu0 %v1582
  %1598 = vmatprep.subr.bf16.mxu0 0
  %1599 = vmatpush1.bf16.msra.mxu0 0
  %1600 = vmatprep.subr.bf16.mxu0 0
  %1601 = vmatpush1.bf16.msra.mxu0 0
  %1602 = vmatprep.subr.bf16.mxu0 0
  %1603 = vmatpush1.bf16.msra.mxu0 0
  %1604 = vmatprep.subr.bf16.mxu0 0
  %1605 = vmatpush1.bf16.msra.mxu0 0
  %1606 = vmatprep.subr.bf16.mxu0 0
  %1607 = vmatpush1.bf16.msra.mxu0 0
  %1608 = vmatprep.subr.bf16.mxu0 0
  %1609 = vmatpush1.bf16.msra.mxu0 0
  %1610 = vmatprep.subr.bf16.mxu0 0
  %1611 = vmatpush1.bf16.msra.mxu0 0
  %1612 = vmatprep.subr.bf16.mxu0 0
  %1613 = vmatpush1.bf16.msra.mxu0 0
  %1614 = vmatprep.subr.bf16.mxu0 0
  %1615 = vmatpush1.bf16.msra.mxu0 0
  %1616 = vmatprep.subr.bf16.mxu0 0
  %1617 = vmatpush1.bf16.msra.mxu0 0
  %1618 = vmatprep.subr.bf16.mxu0 0
  %1619 = vmatpush1.bf16.msra.mxu0 0
  %1620 = vmatprep.subr.bf16.mxu0 0
  %1621 = vmatpush1.bf16.msra.mxu0 0
  %1622 = vmatprep.subr.bf16.mxu0 0
  %1623 = vmatpush1.bf16.msra.mxu0 0
  %1624 = vmatprep.subr.bf16.mxu0 0
  %1625 = vmatpush1.bf16.msra.mxu0 0
  %1626 = vmatprep.mubr.bf16.mxu0 0
  %1627 = vmatmul.mubr.bf16.gmra.mrb[0].mxu0 %v1586
  %v1628 = vpop.f32.mrb[0].mxu0
  %v1629 = vadd.f32 %v1572, %v1628
  %v1630 = vpop.f32.mrb[0].mxu0
  %v1631 = vpop.f32.mrb[0].mxu0
  %v1632 = vadd.f32 %v1572, %v1631
  %v1633 = vpop.f32.mrb[0].mxu0
  %1634 = vmatprep.mubr.bf16.mxu0 0
  %1635 = vmatmul.mubr.bf16.gmra.mrb[0].mxu0 %v1589
  %v1636 = vpop.f32.mrb[0].mxu0
  %v1637 = vadd.f32 %v1572, %v1636
  %v1638 = vpop.f32.mrb[0].mxu0
  %v1639 = vpop.f32.mrb[0].mxu0
  %v1640 = vadd.f32 %v1572, %v1639
  %v1641 = vpop.f32.mrb[0].mxu0
  %1642 = vmatprep.mubr.bf16.mxu0 0
  %1643 = vmatmul.mubr.bf16.gmra.mrb[0].mxu0 %v1592
  %v1644 = vpop.f32.mrb[0].mxu0
  %v1645 = vadd.f32 %v1572, %v1644
  %v1646 = vpop.f32.mrb[0].mxu0
  %v1647 = vpop.f32.mrb[0].mxu0
  %v1648 = vadd.f32 %v1572, %v1647
  %v1649 = vpop.f32.mrb[0].mxu0
  %1650 = vdwg.mxu0
  %v1651 = vmul.f32 %v1629, %v1629
  %v1652 = vmul.f32 %v1632, %v1632
  %v1653 = vmul.f32 %v1637, %v1637
  %v1654 = vmul.f32 %v1640, %v1640
  %v1655 = vmul.f32 %v1645, %v1645
  %v1656 = vmul.f32 %v1648, %v1648
  %v1657 = vmul.f32 %v1629, %v1651
  %v1658 = vmul.f32 %v1632, %v1652
  %v1659 = vmul.f32 %v1637, %v1653
  %v1660 = vmul.f32 %v1640, %v1654
  %v1661 = vmul.f32 %v1645, %v1655
  %v1662 = vmul.f32 %v1648, %v1656
  %v1663 = vmul.f32 %v1657, 0.044715
  %v1664 = vmul.f32 %v1658, 0.044715
  %v1665 = vmul.f32 %v1659, 0.044715
  %v1666 = vmul.f32 %v1660, 0.044715
  %v1667 = vmul.f32 %v1661, 0.044715
  %v1668 = vmul.f32 %v1662, 0.044715
  %v1669 = vadd.f32 %v1629, %v1663
  %v1670 = vadd.f32 %v1632, %v1664
  %v1671 = vadd.f32 %v1637, %v1665
  %v1672 = vadd.f32 %v1640, %v1666
  %v1673 = vadd.f32 %v1645, %v1667
  %v1674 = vadd.f32 %v1648, %v1668
  %v1675 = vmul.f32 %v1669, 0.7978846
  %v1676 = vmul.f32 %v1670, 0.7978846
  %v1677 = vmul.f32 %v1671, 0.7978846
  %v1678 = vmul.f32 %v1672, 0.7978846
  %v1679 = vmul.f32 %v1673, 0.7978846
  %v1680 = vmul.f32 %v1674, 0.7978846
  %v1681 = vtanh.pop %v1675
  %v1682 = vtanh.pop %v1676
  %v1683 = vtanh.pop %v1677
  %v1684 = vtanh.pop %v1678
  %v1685 = vtanh.pop %v1679
  %v1686 = vtanh.pop %v1680
  %v1687 = vadd.f32 %v1681, 1.0
  %v1688 = vadd.f32 %v1682, 1.0
  %v1689 = vadd.f32 %v1683, 1.0
  %v1690 = vadd.f32 %v1684, 1.0
  %v1691 = vadd.f32 %v1685, 1.0
  %v1692 = vadd.f32 %v1686, 1.0
  %v1693 = vmul.f32 %v1687, 0.5
  %v1694 = vmul.f32 %v1688, 0.5
  %v1695 = vmul.f32 %v1689, 0.5
  %v1696 = vmul.f32 %v1690, 0.5
  %v1697 = vmul.f32 %v1691, 0.5
  %v1698 = vmul.f32 %v1692, 0.5
  %v1699 = vmul.f32 %v1629, %v1693
  %v1700 = vmul.f32 %v1632, %v1694
  %v1701 = vmul.f32 %v1637, %v1695
  %v1702 = vmul.f32 %v1640, %v1696
  %v1703 = vmul.f32 %v1645, %v1697
  %v1704 = vmul.f32 %v1648, %v1698
  %v1705 = vpack.c.bf16 %v1700, %v1699
  %v1706 = vpack.c.bf16 %v1702, %v1701
  %v1707 = vpack.c.bf16 %v1704, %v1703
  %v1708 = vld [vmem:[%s8] sm:$0xf]
  %v1709 = vld [vmem:[%s8 + $0x4] sm:$0xf]
  %v1710 = vld [vmem:[%s8 + $0x8] sm:$0xf]
  %v1711 = vld [vmem:[%s8 + $0xc] sm:$0xf]
  %v1712 = vld [vmem:[%s8 + $0x10] sm:$0xf]
  %v1713 = vld [vmem:[%s8 + $0x14] sm:$0xf]
  %v1714 = vld [vmem:[%s8 + $0x18] sm:$0xf]
  %v1715 = vld [vmem:[%s8 + $0x1c] sm:$0xf]
  %v1716 = vld [vmem:[%s8 + $0x20] sm:$0xf]
  %v1717 = vld [vmem:[%s8 + $0x24] sm:$0xf]
  %v1718 = vld [vmem:[%s8 + $0x28] sm:$0xf]
  %v1719 = vld [vmem:[%s8 + $0x2c] sm:$0xf]
  %v1720 = vld [vmem:[%s8 + $0x30] sm:$0xf]
  %v1721 = vld [vmem:[%s8 + $0x34] sm:$0xf]
  %v1722 = vld [vmem:[%s8 + $0x38] sm:$0xf]
  %v1723 = vld [vmem:[%s8 + $0x3c] sm:$0xf]
  %v1724 = vlaneseq
  %v1725 = vshrl.u32 %v1724, 7
  %v1726 = vsub.s32 7, %v1725
  %v1727 = vrot.slane %v162, %v1726
  %v1744 = vunpack.c.l.b16 %v1708
  %v1745 = vunpack.c.l.b16 %v1709
  %v1746 = vunpack.c.l.b16 %v1710
  %v1747 = vunpack.c.l.b16 %v1711
  %v1748 = vunpack.c.l.b16 %v1712
  %v1749 = vunpack.c.l.b16 %v1713
  %v1750 = vunpack.c.l.b16 %v1714
  %v1751 = vunpack.c.l.b16 %v1715
  %v1752 = vunpack.c.l.b16 %v1716
  %v1753 = vunpack.c.l.b16 %v1717
  %v1754 = vunpack.c.l.b16 %v1718
  %v1755 = vunpack.c.l.b16 %v1719
  %v1756 = vunpack.c.l.b16 %v1720
  %v1757 = vunpack.c.l.b16 %v1721
  %v1758 = vunpack.c.l.b16 %v1722
  %v1759 = vunpack.c.l.b16 %v1723
  %v1760 = vpack.c.b16 %v1745, %v1744
  %v1761 = vpack.c.b16 %v1747, %v1746
  %v1762 = vpack.c.b16 %v1749, %v1748
  %v1763 = vpack.c.b16 %v1751, %v1750
  %v1764 = vpack.c.b16 %v1753, %v1752
  %v1765 = vpack.c.b16 %v1755, %v1754
  %v1766 = vpack.c.b16 %v1757, %v1756
  %v1767 = vpack.c.b16 %v1759, %v1758
  %1776 = vmatprep.subr.bf16.mxu0 0
  %1777 = vmatpush1.bf16.msra.mxu0 %v1760
  %1778 = vmatprep.subr.bf16.mxu0 0
  %1779 = vmatpush1.bf16.msra.mxu0 %v1761
  %1780 = vmatprep.subr.bf16.mxu0 0
  %1781 = vmatpush1.bf16.msra.mxu0 %v1762
  %1782 = vmatprep.subr.bf16.mxu0 0
  %1783 = vmatpush1.bf16.msra.mxu0 %v1763
  %1784 = vmatprep.subr.bf16.mxu0 0
  %1785 = vmatpush1.bf16.msra.mxu0 %v1764
  %1786 = vmatprep.subr.bf16.mxu0 0
  %1787 = vmatpush1.bf16.msra.mxu0 %v1765
  %1788 = vmatprep.subr.bf16.mxu0 0
  %1789 = vmatpush1.bf16.msra.mxu0 %v1766
  %1790 = vmatprep.subr.bf16.mxu0 0
  %1791 = vmatpush1.bf16.msra.mxu0 %v1767
  %1792 = vmatprep.subr.bf16.mxu0 0
  %1793 = vmatpush1.bf16.msra.mxu0 0
  %1794 = vmatprep.subr.bf16.mxu0 0
  %1795 = vmatpush1.bf16.msra.mxu0 0
  %1796 = vmatprep.subr.bf16.mxu0 0
  %1797 = vmatpush1.bf16.msra.mxu0 0
  %1798 = vmatprep.subr.bf16.mxu0 0
  %1799 = vmatpush1.bf16.msra.mxu0 0
  %1800 = vmatprep.subr.bf16.mxu0 0
  %1801 = vmatpush1.bf16.msra.mxu0 0
  %1802 = vmatprep.subr.bf16.mxu0 0
  %1803 = vmatpush1.bf16.msra.mxu0 0
  %1804 = vmatprep.subr.bf16.mxu0 0
  %1805 = vmatpush1.bf16.msra.mxu0 0
  %1806 = vmatprep.subr.bf16.mxu0 0
  %1807 = vmatpush1.bf16.msra.mxu0 0
  %1808 = vmatprep.mubr.bf16.mxu0 0
  %1809 = vmatmul.mubr.bf16.gmra.mrb[0].mxu0 %v1705
  %v1810 = vpop.f32.mrb[0].mxu0
  %v1811 = vadd.f32 %v1727, %v1810
  %v1812 = vpop.f32.mrb[0].mxu0
  %v1813 = vpop.f32.mrb[0].mxu0
  %v1814 = vadd.f32 %v1727, %v1813
  %v1815 = vpop.f32.mrb[0].mxu0
  %1816 = vmatprep.mubr.bf16.mxu0 0
  %1817 = vmatmul.mubr.bf16.gmra.mrb[0].mxu0 %v1706
  %v1818 = vpop.f32.mrb[0].mxu0
  %v1819 = vadd.f32 %v1727, %v1818
  %v1820 = vpop.f32.mrb[0].mxu0
  %v1821 = vpop.f32.mrb[0].mxu0
  %v1822 = vadd.f32 %v1727, %v1821
  %v1823 = vpop.f32.mrb[0].mxu0
  %1824 = vmatprep.mubr.bf16.mxu0 0
  %1825 = vmatmul.mubr.bf16.gmra.mrb[0].mxu0 %v1707
  %v1826 = vpop.f32.mrb[0].mxu0
  %v1827 = vadd.f32 %v1727, %v1826
  %v1828 = vpop.f32.mrb[0].mxu0
  %v1829 = vpop.f32.mrb[0].mxu0
  %v1830 = vadd.f32 %v1727, %v1829
  %v1831 = vpop.f32.mrb[0].mxu0
  %1832 = vdwg.mxu0
  %v1833 = vadd.f32 %v1458, %v1811
  %v1834 = vadd.f32 %v1459, %v1814
  %v1835 = vadd.f32 %v1460, %v1819
  %v1836 = vadd.f32 %v1461, %v1822
  %v1837 = vadd.f32 %v1462, %v1827
  %v1838 = vadd.f32 %v1463, %v1830
  %s1839 = scalar_lea.vmem %s9, 8
  %v1840 = vld [vmem:[%s1839] sm:$0xff]
  %v1841 = vsel %vm163, %v1833, 0.0
  %1842 = vadd.xlane.f32.xlu0 %v1841
  %v1843 = vpop.xlane.xlu0 %1842
  %v1844 = vsel %vm163, %v1834, 0.0
  %1845 = vadd.xlane.f32.xlu0 %v1844
  %v1846 = vpop.xlane.xlu0 %1845
  %v1847 = vsel %vm163, %v1835, 0.0
  %1848 = vadd.xlane.f32.xlu0 %v1847
  %v1849 = vpop.xlane.xlu0 %1848
  %v1850 = vsel %vm163, %v1836, 0.0
  %1851 = vadd.xlane.f32.xlu0 %v1850
  %v1852 = vpop.xlane.xlu0 %1851
  %v1853 = vsel %vm163, %v1837, 0.0
  %1854 = vadd.xlane.f32.xlu0 %v1853
  %v1855 = vpop.xlane.xlu0 %1854
  %v1856 = vsel %vm163, %v1838, 0.0
  %1857 = vadd.xlane.f32.xlu0 %v1856
  %v1858 = vpop.xlane.xlu0 %1857
  %v1859 = vmul.f32 %v1843, %v182
  %v1860 = vmul.f32 %v1846, %v182
  %v1861 = vmul.f32 %v1849, %v182
  %v1862 = vmul.f32 %v1852, %v182
  %v1863 = vmul.f32 %v1855, %v182
  %v1864 = vmul.f32 %v1858, %v182
  %v1865 = vsub.f32 %v1833, %v1859
  %v1866 = vsub.f32 %v1834, %v1860
  %v1867 = vsub.f32 %v1835, %v1861
  %v1868 = vsub.f32 %v1836, %v1862
  %v1869 = vsub.f32 %v1837, %v1863
  %v1870 = vsub.f32 %v1838, %v1864
  %v1871 = vmul.f32 %v1865, %v1865
  %v1872 = vmul.f32 %v1866, %v1866
  %v1873 = vmul.f32 %v1867, %v1867
  %v1874 = vmul.f32 %v1868, %v1868
  %v1875 = vmul.f32 %v1869, %v1869
  %v1876 = vmul.f32 %v1870, %v1870
  %v1877 = vsel %vm163, %v1871, 0.0
  %1878 = vadd.xlane.f32.xlu0 %v1877
  %v1879 = vpop.xlane.xlu0 %1878
  %v1880 = vsel %vm163, %v1872, 0.0
  %1881 = vadd.xlane.f32.xlu0 %v1880
  %v1882 = vpop.xlane.xlu0 %1881
  %v1883 = vsel %vm163, %v1873, 0.0
  %1884 = vadd.xlane.f32.xlu0 %v1883
  %v1885 = vpop.xlane.xlu0 %1884
  %v1886 = vsel %vm163, %v1874, 0.0
  %1887 = vadd.xlane.f32.xlu0 %v1886
  %v1888 = vpop.xlane.xlu0 %1887
  %v1889 = vsel %vm163, %v1875, 0.0
  %1890 = vadd.xlane.f32.xlu0 %v1889
  %v1891 = vpop.xlane.xlu0 %1890
  %v1892 = vsel %vm163, %v1876, 0.0
  %1893 = vadd.xlane.f32.xlu0 %v1892
  %v1894 = vpop.xlane.xlu0 %1893
  %v1895 = vmul.f32 %v1879, %v182
  %v1896 = vmul.f32 %v1882, %v182
  %v1897 = vmul.f32 %v1885, %v182
  %v1898 = vmul.f32 %v1888, %v182
  %v1899 = vmul.f32 %v1891, %v182
  %v1900 = vmul.f32 %v1894, %v182
  %v1901 = vadd.f32 %v1895, 1e-06
  %v1902 = vadd.f32 %v1896, 1e-06
  %v1903 = vadd.f32 %v1897, 1e-06
  %v1904 = vadd.f32 %v1898, 1e-06
  %v1905 = vadd.f32 %v1899, 1e-06
  %v1906 = vadd.f32 %v1900, 1e-06
  %v1907 = vrsqrt.pop %v1901
  %v1908 = vrsqrt.pop %v1902
  %v1909 = vrsqrt.pop %v1903
  %v1910 = vrsqrt.pop %v1904
  %v1911 = vrsqrt.pop %v1905
  %v1912 = vrsqrt.pop %v1906
  %v1913 = vmul.f32 %v1865, %v1907
  %v1914 = vmul.f32 %v1866, %v1908
  %v1915 = vmul.f32 %v1867, %v1909
  %v1916 = vmul.f32 %v1868, %v1910
  %v1917 = vmul.f32 %v1869, %v1911
  %v1918 = vmul.f32 %v1870, %v1912
  %v1919 = vlaneseq
  %v1920 = vshrl.u32 %v1919, 7
  %v1921 = vsub.s32 0, %v1920
  %v1922 = vrot.slane %v1840, %v1921
  %v1923 = vmul.f32 %v1913, %v1922
  %v1924 = vmul.f32 %v1914, %v1922
  %v1925 = vmul.f32 %v1915, %v1922
  %v1926 = vmul.f32 %v1916, %v1922
  %v1927 = vmul.f32 %v1917, %v1922
  %v1928 = vmul.f32 %v1918, %v1922
  %v1929 = vlaneseq
  %v1930 = vshrl.u32 %v1929, 7
  %v1931 = vsub.s32 1, %v1930
  %v1932 = vrot.slane %v1840, %v1931
  %v1933 = vadd.f32 %v1923, %v1932
  %v1934 = vadd.f32 %v1924, %v1932
  %v1935 = vadd.f32 %v1925, %v1932
  %v1936 = vadd.f32 %v1926, %v1932
  %v1937 = vadd.f32 %v1927, %v1932
  %v1938 = vadd.f32 %v1928, %v1932
  %v1939 = vpack.c.bf16 %v1934, %v1933
  %v1940 = vpack.c.bf16 %v1936, %v1935
  %v1941 = vpack.c.bf16 %v1938, %v1937
  %s1942 = scalar_lea.vmem %s5, 16
  %v1943 = vld [vmem:[%s1942] sm:$0xf]
  %v1944 = vld [vmem:[%s1942 + $0x4] sm:$0xf]
  %v1945 = vld [vmem:[%s1942 + $0x8] sm:$0xf]
  %v1946 = vld [vmem:[%s1942 + $0xc] sm:$0xf]
  %v1947 = vlaneseq
  %v1948 = vshrl.u32 %v1947, 7
  %v1949 = vsub.s32 2, %v1948
  %v1950 = vrot.slane %v1840, %v1949
  %v1955 = vunpack.c.l.b16 %v1943
  %v1956 = vunpack.c.l.b16 %v1944
  %v1957 = vunpack.c.l.b16 %v1945
  %v1958 = vunpack.c.l.b16 %v1946
  %v1959 = vpack.c.b16 %v1956, %v1955
  %v1960 = vpack.c.b16 %v1958, %v1957
  %v1964 = vsel %vm163, %v1939, 0
  %v1967 = vsel %vm163, %v1940, 0
  %v1970 = vsel %vm163, %v1941, 0
  %1972 = vmatprep.subr.bf16.mxu0 0
  %1973 = vmatpush1.bf16.msra.mxu0 %v1959
  %1974 = vmatprep.subr.bf16.mxu0 0
  %1975 = vmatpush1.bf16.msra.mxu0 %v1960
  %1976 = vmatprep.subr.bf16.mxu0 0
  %1977 = vmatpush1.bf16.msra.mxu0 0
  %1978 = vmatprep.subr.bf16.mxu0 0
  %1979 = vmatpush1.bf16.msra.mxu0 0
  %1980 = vmatprep.subr.bf16.mxu0 0
  %1981 = vmatpush1.bf16.msra.mxu0 0
  %1982 = vmatprep.subr.bf16.mxu0 0
  %1983 = vmatpush1.bf16.msra.mxu0 0
  %1984 = vmatprep.subr.bf16.mxu0 0
  %1985 = vmatpush1.bf16.msra.mxu0 0
  %1986 = vmatprep.subr.bf16.mxu0 0
  %1987 = vmatpush1.bf16.msra.mxu0 0
  %1988 = vmatprep.subr.bf16.mxu0 0
  %1989 = vmatpush1.bf16.msra.mxu0 0
  %1990 = vmatprep.subr.bf16.mxu0 0
  %1991 = vmatpush1.bf16.msra.mxu0 0
  %1992 = vmatprep.subr.bf16.mxu0 0
  %1993 = vmatpush1.bf16.msra.mxu0 0
  %1994 = vmatprep.subr.bf16.mxu0 0
  %1995 = vmatpush1.bf16.msra.mxu0 0
  %1996 = vmatprep.subr.bf16.mxu0 0
  %1997 = vmatpush1.bf16.msra.mxu0 0
  %1998 = vmatprep.subr.bf16.mxu0 0
  %1999 = vmatpush1.bf16.msra.mxu0 0
  %2000 = vmatprep.subr.bf16.mxu0 0
  %2001 = vmatpush1.bf16.msra.mxu0 0
  %2002 = vmatprep.subr.bf16.mxu0 0
  %2003 = vmatpush1.bf16.msra.mxu0 0
  %2004 = vmatprep.mubr.bf16.mxu0 0
  %2005 = vmatmul.mubr.bf16.gmra.mrb[0].mxu0 %v1964
  %v2006 = vpop.f32.mrb[0].mxu0
  %v2007 = vadd.f32 %v1950, %v2006
  %v2008 = vpop.f32.mrb[0].mxu0
  %v2009 = vpop.f32.mrb[0].mxu0
  %v2010 = vadd.f32 %v1950, %v2009
  %v2011 = vpop.f32.mrb[0].mxu0
  %2012 = vmatprep.mubr.bf16.mxu0 0
  %2013 = vmatmul.mubr.bf16.gmra.mrb[0].mxu0 %v1967
  %v2014 = vpop.f32.mrb[0].mxu0
  %v2015 = vadd.f32 %v1950, %v2014
  %v2016 = vpop.f32.mrb[0].mxu0
  %v2017 = vpop.f32.mrb[0].mxu0
  %v2018 = vadd.f32 %v1950, %v2017
  %v2019 = vpop.f32.mrb[0].mxu0
  %2020 = vmatprep.mubr.bf16.mxu0 0
  %2021 = vmatmul.mubr.bf16.gmra.mrb[0].mxu0 %v1970
  %v2022 = vpop.f32.mrb[0].mxu0
  %v2023 = vadd.f32 %v1950, %v2022
  %v2024 = vpop.f32.mrb[0].mxu0
  %v2025 = vpop.f32.mrb[0].mxu0
  %v2026 = vadd.f32 %v1950, %v2025
  %v2027 = vpop.f32.mrb[0].mxu0
  %2028 = vdwg.mxu0
  %v2029 = vpack.c.bf16 %v2010, %v2007
  %v2030 = vpack.c.bf16 %v2018, %v2015
  %v2031 = vpack.c.bf16 %v2026, %v2023
  %2035 = vrot.lane.b32.xlu0 %v2029, 96
  %v2036 = vpop.permute.xlu0 %2035
  %2037 = vrot.lane.b32.xlu0 %v2030, 96
  %v2038 = vpop.permute.xlu0 %2037
  %2039 = vrot.lane.b32.xlu0 %v2031, 96
  %v2040 = vpop.permute.xlu0 %2039
  %v2042 = vsel %vm364, %v2029, 0
  %v2045 = vsel %vm364, %v2030, 0
  %v2048 = vsel %vm364, %v2031, 0
  %v2051 = vsel %vm364, %v2036, 0
  %v2054 = vsel %vm364, %v2038, 0
  %v2057 = vsel %vm364, %v2040, 0
  %2059 = vmatprep.subr.bf16.mxu0 0
  %2060 = vmatpush1.bf16.xpose.msra.mxu0 %v2051
  %2061 = vmatprep.subr.bf16.mxu0 0
  %2062 = vmatpush1.bf16.xpose.msra.mxu0 %v2054
  %2063 = vmatprep.subr.bf16.mxu0 0
  %2064 = vmatpush1.bf16.xpose.msra.mxu0 %v2057
  %2065 = vmatprep.subr.bf16.mxu0 0
  %2066 = vmatpush1.bf16.xpose.msra.mxu0 0
  %2067 = vmatprep.subr.bf16.mxu0 0
  %2068 = vmatpush1.bf16.xpose.msra.mxu0 0
  %2069 = vmatprep.subr.bf16.mxu0 0
  %2070 = vmatpush1.bf16.xpose.msra.mxu0 0
  %2071 = vmatprep.subr.bf16.mxu0 0
  %2072 = vmatpush1.bf16.xpose.msra.mxu0 0
  %2073 = vmatprep.subr.bf16.mxu0 0
  %2074 = vmatpush1.bf16.xpose.msra.mxu0 0
  %2075 = vmatprep.subr.bf16.mxu0 0
  %2076 = vmatpush1.bf16.xpose.msra.mxu0 0
  %2077 = vmatprep.subr.bf16.mxu0 0
  %2078 = vmatpush1.bf16.xpose.msra.mxu0 0
  %2079 = vmatprep.subr.bf16.mxu0 0
  %2080 = vmatpush1.bf16.xpose.msra.mxu0 0
  %2081 = vmatprep.subr.bf16.mxu0 0
  %2082 = vmatpush1.bf16.xpose.msra.mxu0 0
  %2083 = vmatprep.subr.bf16.mxu0 0
  %2084 = vmatpush1.bf16.xpose.msra.mxu0 0
  %2085 = vmatprep.subr.bf16.mxu0 0
  %2086 = vmatpush1.bf16.xpose.msra.mxu0 0
  %2087 = vmatprep.subr.bf16.mxu0 0
  %2088 = vmatpush1.bf16.xpose.msra.mxu0 0
  %2089 = vmatprep.subr.bf16.mxu0 0
  %2090 = vmatpush1.bf16.xpose.msra.mxu0 0
  %2091 = vmatprep.mubr.bf16.mxu0 0
  %2092 = vmatmul.mubr.bf16.gmra.mrb[0].mxu0 %v2042
  %v2093 = vpop.f32.mrb[0].mxu0
  %v2094 = vadd.f32 %v38, %v2093
  %v2095 = vpop.f32.mrb[0].mxu0
  %v2096 = vpop.f32.mrb[0].mxu0
  %v2097 = vadd.f32 %v39, %v2096
  %v2098 = vpop.f32.mrb[0].mxu0
  %2099 = vmatprep.mubr.bf16.mxu0 0
  %2100 = vmatmul.mubr.bf16.gmra.mrb[0].mxu0 %v2045
  %v2101 = vpop.f32.mrb[0].mxu0
  %v2102 = vadd.f32 %v40, %v2101
  %v2103 = vpop.f32.mrb[0].mxu0
  %v2104 = vpop.f32.mrb[0].mxu0
  %v2105 = vadd.f32 %v41, %v2104
  %v2106 = vpop.f32.mrb[0].mxu0
  %2107 = vmatprep.mubr.bf16.mxu0 0
  %2108 = vmatmul.mubr.bf16.gmra.mrb[0].mxu0 %v2048
  %v2109 = vpop.f32.mrb[0].mxu0
  %v2110 = vadd.f32 %v42, %v2109
  %v2111 = vpop.f32.mrb[0].mxu0
  %v2112 = vpop.f32.mrb[0].mxu0
  %v2113 = vadd.f32 %v43, %v2112
  %v2114 = vpop.f32.mrb[0].mxu0
  %2115 = vdwg.mxu0
  %v2116 = vsel %vm95, %v2094, -inf
  %2117 = vmax.xlane.f32.xlu0 %v2116
  %v2118 = vpop.xlane.xlu0 %2117
  %v2119 = vsel %vm95, %v2097, -inf
  %2120 = vmax.xlane.f32.xlu0 %v2119
  %v2121 = vpop.xlane.xlu0 %2120
  %v2122 = vsel %vm95, %v2102, -inf
  %2123 = vmax.xlane.f32.xlu0 %v2122
  %v2124 = vpop.xlane.xlu0 %2123
  %v2125 = vsel %vm95, %v2105, -inf
  %2126 = vmax.xlane.f32.xlu0 %v2125
  %v2127 = vpop.xlane.xlu0 %2126
  %v2128 = vsel %vm95, %v2110, -inf
  %2129 = vmax.xlane.f32.xlu0 %v2128
  %v2130 = vpop.xlane.xlu0 %2129
  %v2131 = vsel %vm95, %v2113, -inf
  %2132 = vmax.xlane.f32.xlu0 %v2131
  %v2133 = vpop.xlane.xlu0 %2132
  %v2134 = vsub.f32 %v2094, %v2118
  %v2135 = vsub.f32 %v2097, %v2121
  %v2136 = vsub.f32 %v2102, %v2124
  %v2137 = vsub.f32 %v2105, %v2127
  %v2138 = vsub.f32 %v2110, %v2130
  %v2139 = vsub.f32 %v2113, %v2133
  %v2140 = vmul.f32 %v2134, 1.442695
  %v2141 = vpow.pop %v2140
  %v2142 = vmul.f32 %v2135, 1.442695
  %v2143 = vpow.pop %v2142
  %v2144 = vmul.f32 %v2136, 1.442695
  %v2145 = vpow.pop %v2144
  %v2146 = vmul.f32 %v2137, 1.442695
  %v2147 = vpow.pop %v2146
  %v2148 = vmul.f32 %v2138, 1.442695
  %v2149 = vpow.pop %v2148
  %v2150 = vmul.f32 %v2139, 1.442695
  %v2151 = vpow.pop %v2150
  %v2152 = vsel %vm95, %v2141, 0.0
  %2153 = vadd.xlane.f32.xlu0 %v2152
  %v2154 = vpop.xlane.xlu0 %2153
  %v2155 = vsel %vm95, %v2143, 0.0
  %2156 = vadd.xlane.f32.xlu0 %v2155
  %v2157 = vpop.xlane.xlu0 %2156
  %v2158 = vsel %vm95, %v2145, 0.0
  %2159 = vadd.xlane.f32.xlu0 %v2158
  %v2160 = vpop.xlane.xlu0 %2159
  %v2161 = vsel %vm95, %v2147, 0.0
  %2162 = vadd.xlane.f32.xlu0 %v2161
  %v2163 = vpop.xlane.xlu0 %2162
  %v2164 = vsel %vm95, %v2149, 0.0
  %2165 = vadd.xlane.f32.xlu0 %v2164
  %v2166 = vpop.xlane.xlu0 %2165
  %v2167 = vsel %vm95, %v2151, 0.0
  %2168 = vadd.xlane.f32.xlu0 %v2167
  %v2169 = vpop.xlane.xlu0 %2168
  %v2170 = vrcp.pop %v2154
  %v2171 = vrcp.pop %v2157
  %v2172 = vrcp.pop %v2160
  %v2173 = vrcp.pop %v2163
  %v2174 = vrcp.pop %v2166
  %v2175 = vrcp.pop %v2169
  %v2176 = vmul.f32 %v2141, %v2170
  %v2177 = vmul.f32 %v2143, %v2171
  %v2178 = vmul.f32 %v2145, %v2172
  %v2179 = vmul.f32 %v2147, %v2173
  %v2180 = vmul.f32 %v2149, %v2174
  %v2181 = vmul.f32 %v2151, %v2175
  %v2182 = vpack.c.bf16 %v2177, %v2176
  %v2183 = vpack.c.bf16 %v2179, %v2178
  %v2184 = vpack.c.bf16 %v2181, %v2180
  %2185 = vrot.lane.b32.xlu0 %v2029, 64
  %v2186 = vpop.permute.xlu0 %2185
  %2187 = vrot.lane.b32.xlu0 %v2030, 64
  %v2188 = vpop.permute.xlu0 %2187
  %2189 = vrot.lane.b32.xlu0 %v2031, 64
  %v2190 = vpop.permute.xlu0 %2189
  %v2195 = vsel %vm95, %v2182, 0
  %v2198 = vsel %vm95, %v2183, 0
  %v2201 = vsel %vm95, %v2184, 0
  %2203 = vmatprep.subr.bf16.mxu0 0
  %2204 = vmatpush1.bf16.msra.mxu0 %v2186
  %2205 = vmatprep.subr.bf16.mxu0 0
  %2206 = vmatpush1.bf16.msra.mxu0 %v2188
  %2207 = vmatprep.subr.bf16.mxu0 0
  %2208 = vmatpush1.bf16.msra.mxu0 %v2190
  %2209 = vmatprep.subr.bf16.mxu0 0
  %2210 = vmatpush1.bf16.msra.mxu0 0
  %2211 = vmatprep.subr.bf16.mxu0 0
  %2212 = vmatpush1.bf16.msra.mxu0 0
  %2213 = vmatprep.subr.bf16.mxu0 0
  %2214 = vmatpush1.bf16.msra.mxu0 0
  %2215 = vmatprep.subr.bf16.mxu0 0
  %2216 = vmatpush1.bf16.msra.mxu0 0
  %2217 = vmatprep.subr.bf16.mxu0 0
  %2218 = vmatpush1.bf16.msra.mxu0 0
  %2219 = vmatprep.subr.bf16.mxu0 0
  %2220 = vmatpush1.bf16.msra.mxu0 0
  %2221 = vmatprep.subr.bf16.mxu0 0
  %2222 = vmatpush1.bf16.msra.mxu0 0
  %2223 = vmatprep.subr.bf16.mxu0 0
  %2224 = vmatpush1.bf16.msra.mxu0 0
  %2225 = vmatprep.subr.bf16.mxu0 0
  %2226 = vmatpush1.bf16.msra.mxu0 0
  %2227 = vmatprep.subr.bf16.mxu0 0
  %2228 = vmatpush1.bf16.msra.mxu0 0
  %2229 = vmatprep.subr.bf16.mxu0 0
  %2230 = vmatpush1.bf16.msra.mxu0 0
  %2231 = vmatprep.subr.bf16.mxu0 0
  %2232 = vmatpush1.bf16.msra.mxu0 0
  %2233 = vmatprep.subr.bf16.mxu0 0
  %2234 = vmatpush1.bf16.msra.mxu0 0
  %2235 = vmatprep.mubr.bf16.mxu0 0
  %2236 = vmatmul.mubr.bf16.gmra.mrb[0].mxu0 %v2195
  %v2237 = vpop.f32.mrb[0].mxu0
  %v2238 = vadd.f32 0.0, %v2237
  %v2239 = vpop.f32.mrb[0].mxu0
  %v2240 = vpop.f32.mrb[0].mxu0
  %v2241 = vadd.f32 0.0, %v2240
  %v2242 = vpop.f32.mrb[0].mxu0
  %2243 = vmatprep.mubr.bf16.mxu0 0
  %2244 = vmatmul.mubr.bf16.gmra.mrb[0].mxu0 %v2198
  %v2245 = vpop.f32.mrb[0].mxu0
  %v2246 = vadd.f32 0.0, %v2245
  %v2247 = vpop.f32.mrb[0].mxu0
  %v2248 = vpop.f32.mrb[0].mxu0
  %v2249 = vadd.f32 0.0, %v2248
  %v2250 = vpop.f32.mrb[0].mxu0
  %2251 = vmatprep.mubr.bf16.mxu0 0
  %2252 = vmatmul.mubr.bf16.gmra.mrb[0].mxu0 %v2201
  %v2253 = vpop.f32.mrb[0].mxu0
  %v2254 = vadd.f32 0.0, %v2253
  %v2255 = vpop.f32.mrb[0].mxu0
  %v2256 = vpop.f32.mrb[0].mxu0
  %v2257 = vadd.f32 0.0, %v2256
  %v2258 = vpop.f32.mrb[0].mxu0
  %2259 = vdwg.mxu0
  %2260 = vrot.lane.b32.xlu0 %v2029, 120
  %v2261 = vpop.permute.xlu0 %2260
  %2262 = vrot.lane.b32.xlu0 %v2030, 120
  %v2263 = vpop.permute.xlu0 %2262
  %2264 = vrot.lane.b32.xlu0 %v2031, 120
  %v2265 = vpop.permute.xlu0 %2264
  %2266 = vrot.lane.b32.xlu0 %v2029, 88
  %v2267 = vpop.permute.xlu0 %2266
  %2268 = vrot.lane.b32.xlu0 %v2030, 88
  %v2269 = vpop.permute.xlu0 %2268
  %2270 = vrot.lane.b32.xlu0 %v2031, 88
  %v2271 = vpop.permute.xlu0 %2270
  %v2273 = vsel %vm364, %v2261, 0
  %v2276 = vsel %vm364, %v2263, 0
  %v2279 = vsel %vm364, %v2265, 0
  %v2282 = vsel %vm364, %v2267, 0
  %v2285 = vsel %vm364, %v2269, 0
  %v2288 = vsel %vm364, %v2271, 0
  %2290 = vmatprep.subr.bf16.mxu0 0
  %2291 = vmatpush1.bf16.xpose.msra.mxu0 %v2282
  %2292 = vmatprep.subr.bf16.mxu0 0
  %2293 = vmatpush1.bf16.xpose.msra.mxu0 %v2285
  %2294 = vmatprep.subr.bf16.mxu0 0
  %2295 = vmatpush1.bf16.xpose.msra.mxu0 %v2288
  %2296 = vmatprep.subr.bf16.mxu0 0
  %2297 = vmatpush1.bf16.xpose.msra.mxu0 0
  %2298 = vmatprep.subr.bf16.mxu0 0
  %2299 = vmatpush1.bf16.xpose.msra.mxu0 0
  %2300 = vmatprep.subr.bf16.mxu0 0
  %2301 = vmatpush1.bf16.xpose.msra.mxu0 0
  %2302 = vmatprep.subr.bf16.mxu0 0
  %2303 = vmatpush1.bf16.xpose.msra.mxu0 0
  %2304 = vmatprep.subr.bf16.mxu0 0
  %2305 = vmatpush1.bf16.xpose.msra.mxu0 0
  %2306 = vmatprep.subr.bf16.mxu0 0
  %2307 = vmatpush1.bf16.xpose.msra.mxu0 0
  %2308 = vmatprep.subr.bf16.mxu0 0
  %2309 = vmatpush1.bf16.xpose.msra.mxu0 0
  %2310 = vmatprep.subr.bf16.mxu0 0
  %2311 = vmatpush1.bf16.xpose.msra.mxu0 0
  %2312 = vmatprep.subr.bf16.mxu0 0
  %2313 = vmatpush1.bf16.xpose.msra.mxu0 0
  %2314 = vmatprep.subr.bf16.mxu0 0
  %2315 = vmatpush1.bf16.xpose.msra.mxu0 0
  %2316 = vmatprep.subr.bf16.mxu0 0
  %2317 = vmatpush1.bf16.xpose.msra.mxu0 0
  %2318 = vmatprep.subr.bf16.mxu0 0
  %2319 = vmatpush1.bf16.xpose.msra.mxu0 0
  %2320 = vmatprep.subr.bf16.mxu0 0
  %2321 = vmatpush1.bf16.xpose.msra.mxu0 0
  %2322 = vmatprep.mubr.bf16.mxu0 0
  %2323 = vmatmul.mubr.bf16.gmra.mrb[0].mxu0 %v2273
  %v2324 = vpop.f32.mrb[0].mxu0
  %v2325 = vadd.f32 %v38, %v2324
  %v2326 = vpop.f32.mrb[0].mxu0
  %v2327 = vpop.f32.mrb[0].mxu0
  %v2328 = vadd.f32 %v39, %v2327
  %v2329 = vpop.f32.mrb[0].mxu0
  %2330 = vmatprep.mubr.bf16.mxu0 0
  %2331 = vmatmul.mubr.bf16.gmra.mrb[0].mxu0 %v2276
  %v2332 = vpop.f32.mrb[0].mxu0
  %v2333 = vadd.f32 %v40, %v2332
  %v2334 = vpop.f32.mrb[0].mxu0
  %v2335 = vpop.f32.mrb[0].mxu0
  %v2336 = vadd.f32 %v41, %v2335
  %v2337 = vpop.f32.mrb[0].mxu0
  %2338 = vmatprep.mubr.bf16.mxu0 0
  %2339 = vmatmul.mubr.bf16.gmra.mrb[0].mxu0 %v2279
  %v2340 = vpop.f32.mrb[0].mxu0
  %v2341 = vadd.f32 %v42, %v2340
  %v2342 = vpop.f32.mrb[0].mxu0
  %v2343 = vpop.f32.mrb[0].mxu0
  %v2344 = vadd.f32 %v43, %v2343
  %v2345 = vpop.f32.mrb[0].mxu0
  %2346 = vdwg.mxu0
  %v2347 = vsel %vm95, %v2325, -inf
  %2348 = vmax.xlane.f32.xlu0 %v2347
  %v2349 = vpop.xlane.xlu0 %2348
  %v2350 = vsel %vm95, %v2328, -inf
  %2351 = vmax.xlane.f32.xlu0 %v2350
  %v2352 = vpop.xlane.xlu0 %2351
  %v2353 = vsel %vm95, %v2333, -inf
  %2354 = vmax.xlane.f32.xlu0 %v2353
  %v2355 = vpop.xlane.xlu0 %2354
  %v2356 = vsel %vm95, %v2336, -inf
  %2357 = vmax.xlane.f32.xlu0 %v2356
  %v2358 = vpop.xlane.xlu0 %2357
  %v2359 = vsel %vm95, %v2341, -inf
  %2360 = vmax.xlane.f32.xlu0 %v2359
  %v2361 = vpop.xlane.xlu0 %2360
  %v2362 = vsel %vm95, %v2344, -inf
  %2363 = vmax.xlane.f32.xlu0 %v2362
  %v2364 = vpop.xlane.xlu0 %2363
  %v2365 = vsub.f32 %v2325, %v2349
  %v2366 = vsub.f32 %v2328, %v2352
  %v2367 = vsub.f32 %v2333, %v2355
  %v2368 = vsub.f32 %v2336, %v2358
  %v2369 = vsub.f32 %v2341, %v2361
  %v2370 = vsub.f32 %v2344, %v2364
  %v2371 = vmul.f32 %v2365, 1.442695
  %v2372 = vpow.pop %v2371
  %v2373 = vmul.f32 %v2366, 1.442695
  %v2374 = vpow.pop %v2373
  %v2375 = vmul.f32 %v2367, 1.442695
  %v2376 = vpow.pop %v2375
  %v2377 = vmul.f32 %v2368, 1.442695
  %v2378 = vpow.pop %v2377
  %v2379 = vmul.f32 %v2369, 1.442695
  %v2380 = vpow.pop %v2379
  %v2381 = vmul.f32 %v2370, 1.442695
  %v2382 = vpow.pop %v2381
  %v2383 = vsel %vm95, %v2372, 0.0
  %2384 = vadd.xlane.f32.xlu0 %v2383
  %v2385 = vpop.xlane.xlu0 %2384
  %v2386 = vsel %vm95, %v2374, 0.0
  %2387 = vadd.xlane.f32.xlu0 %v2386
  %v2388 = vpop.xlane.xlu0 %2387
  %v2389 = vsel %vm95, %v2376, 0.0
  %2390 = vadd.xlane.f32.xlu0 %v2389
  %v2391 = vpop.xlane.xlu0 %2390
  %v2392 = vsel %vm95, %v2378, 0.0
  %2393 = vadd.xlane.f32.xlu0 %v2392
  %v2394 = vpop.xlane.xlu0 %2393
  %v2395 = vsel %vm95, %v2380, 0.0
  %2396 = vadd.xlane.f32.xlu0 %v2395
  %v2397 = vpop.xlane.xlu0 %2396
  %v2398 = vsel %vm95, %v2382, 0.0
  %2399 = vadd.xlane.f32.xlu0 %v2398
  %v2400 = vpop.xlane.xlu0 %2399
  %v2401 = vrcp.pop %v2385
  %v2402 = vrcp.pop %v2388
  %v2403 = vrcp.pop %v2391
  %v2404 = vrcp.pop %v2394
  %v2405 = vrcp.pop %v2397
  %v2406 = vrcp.pop %v2400
  %v2407 = vmul.f32 %v2372, %v2401
  %v2408 = vmul.f32 %v2374, %v2402
  %v2409 = vmul.f32 %v2376, %v2403
  %v2410 = vmul.f32 %v2378, %v2404
  %v2411 = vmul.f32 %v2380, %v2405
  %v2412 = vmul.f32 %v2382, %v2406
  %v2413 = vpack.c.bf16 %v2408, %v2407
  %v2414 = vpack.c.bf16 %v2410, %v2409
  %v2415 = vpack.c.bf16 %v2412, %v2411
  %2416 = vrot.lane.b32.xlu0 %v2029, 56
  %v2417 = vpop.permute.xlu0 %2416
  %2418 = vrot.lane.b32.xlu0 %v2030, 56
  %v2419 = vpop.permute.xlu0 %2418
  %2420 = vrot.lane.b32.xlu0 %v2031, 56
  %v2421 = vpop.permute.xlu0 %2420
  %v2426 = vsel %vm95, %v2413, 0
  %v2429 = vsel %vm95, %v2414, 0
  %v2432 = vsel %vm95, %v2415, 0
  %2434 = vmatprep.subr.bf16.mxu0 0
  %2435 = vmatpush1.bf16.msra.mxu0 %v2417
  %2436 = vmatprep.subr.bf16.mxu0 0
  %2437 = vmatpush1.bf16.msra.mxu0 %v2419
  %2438 = vmatprep.subr.bf16.mxu0 0
  %2439 = vmatpush1.bf16.msra.mxu0 %v2421
  %2440 = vmatprep.subr.bf16.mxu0 0
  %2441 = vmatpush1.bf16.msra.mxu0 0
  %2442 = vmatprep.subr.bf16.mxu0 0
  %2443 = vmatpush1.bf16.msra.mxu0 0
  %2444 = vmatprep.subr.bf16.mxu0 0
  %2445 = vmatpush1.bf16.msra.mxu0 0
  %2446 = vmatprep.subr.bf16.mxu0 0
  %2447 = vmatpush1.bf16.msra.mxu0 0
  %2448 = vmatprep.subr.bf16.mxu0 0
  %2449 = vmatpush1.bf16.msra.mxu0 0
  %2450 = vmatprep.subr.bf16.mxu0 0
  %2451 = vmatpush1.bf16.msra.mxu0 0
  %2452 = vmatprep.subr.bf16.mxu0 0
  %2453 = vmatpush1.bf16.msra.mxu0 0
  %2454 = vmatprep.subr.bf16.mxu0 0
  %2455 = vmatpush1.bf16.msra.mxu0 0
  %2456 = vmatprep.subr.bf16.mxu0 0
  %2457 = vmatpush1.bf16.msra.mxu0 0
  %2458 = vmatprep.subr.bf16.mxu0 0
  %2459 = vmatpush1.bf16.msra.mxu0 0
  %2460 = vmatprep.subr.bf16.mxu0 0
  %2461 = vmatpush1.bf16.msra.mxu0 0
  %2462 = vmatprep.subr.bf16.mxu0 0
  %2463 = vmatpush1.bf16.msra.mxu0 0
  %2464 = vmatprep.subr.bf16.mxu0 0
  %2465 = vmatpush1.bf16.msra.mxu0 0
  %2466 = vmatprep.mubr.bf16.mxu0 0
  %2467 = vmatmul.mubr.bf16.gmra.mrb[0].mxu0 %v2426
  %v2468 = vpop.f32.mrb[0].mxu0
  %v2469 = vadd.f32 0.0, %v2468
  %v2470 = vpop.f32.mrb[0].mxu0
  %v2471 = vpop.f32.mrb[0].mxu0
  %v2472 = vadd.f32 0.0, %v2471
  %v2473 = vpop.f32.mrb[0].mxu0
  %2474 = vmatprep.mubr.bf16.mxu0 0
  %2475 = vmatmul.mubr.bf16.gmra.mrb[0].mxu0 %v2429
  %v2476 = vpop.f32.mrb[0].mxu0
  %v2477 = vadd.f32 0.0, %v2476
  %v2478 = vpop.f32.mrb[0].mxu0
  %v2479 = vpop.f32.mrb[0].mxu0
  %v2480 = vadd.f32 0.0, %v2479
  %v2481 = vpop.f32.mrb[0].mxu0
  %2482 = vmatprep.mubr.bf16.mxu0 0
  %2483 = vmatmul.mubr.bf16.gmra.mrb[0].mxu0 %v2432
  %v2484 = vpop.f32.mrb[0].mxu0
  %v2485 = vadd.f32 0.0, %v2484
  %v2486 = vpop.f32.mrb[0].mxu0
  %v2487 = vpop.f32.mrb[0].mxu0
  %v2488 = vadd.f32 0.0, %v2487
  %v2489 = vpop.f32.mrb[0].mxu0
  %2490 = vdwg.mxu0
  %2491 = vrot.lane.b32.xlu0 %v2029, 112
  %v2492 = vpop.permute.xlu0 %2491
  %2493 = vrot.lane.b32.xlu0 %v2030, 112
  %v2494 = vpop.permute.xlu0 %2493
  %2495 = vrot.lane.b32.xlu0 %v2031, 112
  %v2496 = vpop.permute.xlu0 %2495
  %2497 = vrot.lane.b32.xlu0 %v2029, 80
  %v2498 = vpop.permute.xlu0 %2497
  %2499 = vrot.lane.b32.xlu0 %v2030, 80
  %v2500 = vpop.permute.xlu0 %2499
  %2501 = vrot.lane.b32.xlu0 %v2031, 80
  %v2502 = vpop.permute.xlu0 %2501
  %v2504 = vsel %vm364, %v2492, 0
  %v2507 = vsel %vm364, %v2494, 0
  %v2510 = vsel %vm364, %v2496, 0
  %v2513 = vsel %vm364, %v2498, 0
  %v2516 = vsel %vm364, %v2500, 0
  %v2519 = vsel %vm364, %v2502, 0
  %2521 = vmatprep.subr.bf16.mxu0 0
  %2522 = vmatpush1.bf16.xpose.msra.mxu0 %v2513
  %2523 = vmatprep.subr.bf16.mxu0 0
  %2524 = vmatpush1.bf16.xpose.msra.mxu0 %v2516
  %2525 = vmatprep.subr.bf16.mxu0 0
  %2526 = vmatpush1.bf16.xpose.msra.mxu0 %v2519
  %2527 = vmatprep.subr.bf16.mxu0 0
  %2528 = vmatpush1.bf16.xpose.msra.mxu0 0
  %2529 = vmatprep.subr.bf16.mxu0 0
  %2530 = vmatpush1.bf16.xpose.msra.mxu0 0
  %2531 = vmatprep.subr.bf16.mxu0 0
  %2532 = vmatpush1.bf16.xpose.msra.mxu0 0
  %2533 = vmatprep.subr.bf16.mxu0 0
  %2534 = vmatpush1.bf16.xpose.msra.mxu0 0
  %2535 = vmatprep.subr.bf16.mxu0 0
  %2536 = vmatpush1.bf16.xpose.msra.mxu0 0
  %2537 = vmatprep.subr.bf16.mxu0 0
  %2538 = vmatpush1.bf16.xpose.msra.mxu0 0
  %2539 = vmatprep.subr.bf16.mxu0 0
  %2540 = vmatpush1.bf16.xpose.msra.mxu0 0
  %2541 = vmatprep.subr.bf16.mxu0 0
  %2542 = vmatpush1.bf16.xpose.msra.mxu0 0
  %2543 = vmatprep.subr.bf16.mxu0 0
  %2544 = vmatpush1.bf16.xpose.msra.mxu0 0
  %2545 = vmatprep.subr.bf16.mxu0 0
  %2546 = vmatpush1.bf16.xpose.msra.mxu0 0
  %2547 = vmatprep.subr.bf16.mxu0 0
  %2548 = vmatpush1.bf16.xpose.msra.mxu0 0
  %2549 = vmatprep.subr.bf16.mxu0 0
  %2550 = vmatpush1.bf16.xpose.msra.mxu0 0
  %2551 = vmatprep.subr.bf16.mxu0 0
  %2552 = vmatpush1.bf16.xpose.msra.mxu0 0
  %2553 = vmatprep.mubr.bf16.mxu0 0
  %2554 = vmatmul.mubr.bf16.gmra.mrb[0].mxu0 %v2504
  %v2555 = vpop.f32.mrb[0].mxu0
  %v2556 = vadd.f32 %v38, %v2555
  %v2557 = vpop.f32.mrb[0].mxu0
  %v2558 = vpop.f32.mrb[0].mxu0
  %v2559 = vadd.f32 %v39, %v2558
  %v2560 = vpop.f32.mrb[0].mxu0
  %2561 = vmatprep.mubr.bf16.mxu0 0
  %2562 = vmatmul.mubr.bf16.gmra.mrb[0].mxu0 %v2507
  %v2563 = vpop.f32.mrb[0].mxu0
  %v2564 = vadd.f32 %v40, %v2563
  %v2565 = vpop.f32.mrb[0].mxu0
  %v2566 = vpop.f32.mrb[0].mxu0
  %v2567 = vadd.f32 %v41, %v2566
  %v2568 = vpop.f32.mrb[0].mxu0
  %2569 = vmatprep.mubr.bf16.mxu0 0
  %2570 = vmatmul.mubr.bf16.gmra.mrb[0].mxu0 %v2510
  %v2571 = vpop.f32.mrb[0].mxu0
  %v2572 = vadd.f32 %v42, %v2571
  %v2573 = vpop.f32.mrb[0].mxu0
  %v2574 = vpop.f32.mrb[0].mxu0
  %v2575 = vadd.f32 %v43, %v2574
  %v2576 = vpop.f32.mrb[0].mxu0
  %2577 = vdwg.mxu0
  %v2578 = vsel %vm95, %v2556, -inf
  %2579 = vmax.xlane.f32.xlu0 %v2578
  %v2580 = vpop.xlane.xlu0 %2579
  %v2581 = vsel %vm95, %v2559, -inf
  %2582 = vmax.xlane.f32.xlu0 %v2581
  %v2583 = vpop.xlane.xlu0 %2582
  %v2584 = vsel %vm95, %v2564, -inf
  %2585 = vmax.xlane.f32.xlu0 %v2584
  %v2586 = vpop.xlane.xlu0 %2585
  %v2587 = vsel %vm95, %v2567, -inf
  %2588 = vmax.xlane.f32.xlu0 %v2587
  %v2589 = vpop.xlane.xlu0 %2588
  %v2590 = vsel %vm95, %v2572, -inf
  %2591 = vmax.xlane.f32.xlu0 %v2590
  %v2592 = vpop.xlane.xlu0 %2591
  %v2593 = vsel %vm95, %v2575, -inf
  %2594 = vmax.xlane.f32.xlu0 %v2593
  %v2595 = vpop.xlane.xlu0 %2594
  %v2596 = vsub.f32 %v2556, %v2580
  %v2597 = vsub.f32 %v2559, %v2583
  %v2598 = vsub.f32 %v2564, %v2586
  %v2599 = vsub.f32 %v2567, %v2589
  %v2600 = vsub.f32 %v2572, %v2592
  %v2601 = vsub.f32 %v2575, %v2595
  %v2602 = vmul.f32 %v2596, 1.442695
  %v2603 = vpow.pop %v2602
  %v2604 = vmul.f32 %v2597, 1.442695
  %v2605 = vpow.pop %v2604
  %v2606 = vmul.f32 %v2598, 1.442695
  %v2607 = vpow.pop %v2606
  %v2608 = vmul.f32 %v2599, 1.442695
  %v2609 = vpow.pop %v2608
  %v2610 = vmul.f32 %v2600, 1.442695
  %v2611 = vpow.pop %v2610
  %v2612 = vmul.f32 %v2601, 1.442695
  %v2613 = vpow.pop %v2612
  %v2614 = vsel %vm95, %v2603, 0.0
  %2615 = vadd.xlane.f32.xlu0 %v2614
  %v2616 = vpop.xlane.xlu0 %2615
  %v2617 = vsel %vm95, %v2605, 0.0
  %2618 = vadd.xlane.f32.xlu0 %v2617
  %v2619 = vpop.xlane.xlu0 %2618
  %v2620 = vsel %vm95, %v2607, 0.0
  %2621 = vadd.xlane.f32.xlu0 %v2620
  %v2622 = vpop.xlane.xlu0 %2621
  %v2623 = vsel %vm95, %v2609, 0.0
  %2624 = vadd.xlane.f32.xlu0 %v2623
  %v2625 = vpop.xlane.xlu0 %2624
  %v2626 = vsel %vm95, %v2611, 0.0
  %2627 = vadd.xlane.f32.xlu0 %v2626
  %v2628 = vpop.xlane.xlu0 %2627
  %v2629 = vsel %vm95, %v2613, 0.0
  %2630 = vadd.xlane.f32.xlu0 %v2629
  %v2631 = vpop.xlane.xlu0 %2630
  %v2632 = vrcp.pop %v2616
  %v2633 = vrcp.pop %v2619
  %v2634 = vrcp.pop %v2622
  %v2635 = vrcp.pop %v2625
  %v2636 = vrcp.pop %v2628
  %v2637 = vrcp.pop %v2631
  %v2638 = vmul.f32 %v2603, %v2632
  %v2639 = vmul.f32 %v2605, %v2633
  %v2640 = vmul.f32 %v2607, %v2634
  %v2641 = vmul.f32 %v2609, %v2635
  %v2642 = vmul.f32 %v2611, %v2636
  %v2643 = vmul.f32 %v2613, %v2637
  %v2644 = vpack.c.bf16 %v2639, %v2638
  %v2645 = vpack.c.bf16 %v2641, %v2640
  %v2646 = vpack.c.bf16 %v2643, %v2642
  %2647 = vrot.lane.b32.xlu0 %v2029, 48
  %v2648 = vpop.permute.xlu0 %2647
  %2649 = vrot.lane.b32.xlu0 %v2030, 48
  %v2650 = vpop.permute.xlu0 %2649
  %2651 = vrot.lane.b32.xlu0 %v2031, 48
  %v2652 = vpop.permute.xlu0 %2651
  %v2657 = vsel %vm95, %v2644, 0
  %v2660 = vsel %vm95, %v2645, 0
  %v2663 = vsel %vm95, %v2646, 0
  %2665 = vmatprep.subr.bf16.mxu0 0
  %2666 = vmatpush1.bf16.msra.mxu0 %v2648
  %2667 = vmatprep.subr.bf16.mxu0 0
  %2668 = vmatpush1.bf16.msra.mxu0 %v2650
  %2669 = vmatprep.subr.bf16.mxu0 0
  %2670 = vmatpush1.bf16.msra.mxu0 %v2652
  %2671 = vmatprep.subr.bf16.mxu0 0
  %2672 = vmatpush1.bf16.msra.mxu0 0
  %2673 = vmatprep.subr.bf16.mxu0 0
  %2674 = vmatpush1.bf16.msra.mxu0 0
  %2675 = vmatprep.subr.bf16.mxu0 0
  %2676 = vmatpush1.bf16.msra.mxu0 0
  %2677 = vmatprep.subr.bf16.mxu0 0
  %2678 = vmatpush1.bf16.msra.mxu0 0
  %2679 = vmatprep.subr.bf16.mxu0 0
  %2680 = vmatpush1.bf16.msra.mxu0 0
  %2681 = vmatprep.subr.bf16.mxu0 0
  %2682 = vmatpush1.bf16.msra.mxu0 0
  %2683 = vmatprep.subr.bf16.mxu0 0
  %2684 = vmatpush1.bf16.msra.mxu0 0
  %2685 = vmatprep.subr.bf16.mxu0 0
  %2686 = vmatpush1.bf16.msra.mxu0 0
  %2687 = vmatprep.subr.bf16.mxu0 0
  %2688 = vmatpush1.bf16.msra.mxu0 0
  %2689 = vmatprep.subr.bf16.mxu0 0
  %2690 = vmatpush1.bf16.msra.mxu0 0
  %2691 = vmatprep.subr.bf16.mxu0 0
  %2692 = vmatpush1.bf16.msra.mxu0 0
  %2693 = vmatprep.subr.bf16.mxu0 0
  %2694 = vmatpush1.bf16.msra.mxu0 0
  %2695 = vmatprep.subr.bf16.mxu0 0
  %2696 = vmatpush1.bf16.msra.mxu0 0
  %2697 = vmatprep.mubr.bf16.mxu0 0
  %2698 = vmatmul.mubr.bf16.gmra.mrb[0].mxu0 %v2657
  %v2699 = vpop.f32.mrb[0].mxu0
  %v2700 = vadd.f32 0.0, %v2699
  %v2701 = vpop.f32.mrb[0].mxu0
  %v2702 = vpop.f32.mrb[0].mxu0
  %v2703 = vadd.f32 0.0, %v2702
  %v2704 = vpop.f32.mrb[0].mxu0
  %2705 = vmatprep.mubr.bf16.mxu0 0
  %2706 = vmatmul.mubr.bf16.gmra.mrb[0].mxu0 %v2660
  %v2707 = vpop.f32.mrb[0].mxu0
  %v2708 = vadd.f32 0.0, %v2707
  %v2709 = vpop.f32.mrb[0].mxu0
  %v2710 = vpop.f32.mrb[0].mxu0
  %v2711 = vadd.f32 0.0, %v2710
  %v2712 = vpop.f32.mrb[0].mxu0
  %2713 = vmatprep.mubr.bf16.mxu0 0
  %2714 = vmatmul.mubr.bf16.gmra.mrb[0].mxu0 %v2663
  %v2715 = vpop.f32.mrb[0].mxu0
  %v2716 = vadd.f32 0.0, %v2715
  %v2717 = vpop.f32.mrb[0].mxu0
  %v2718 = vpop.f32.mrb[0].mxu0
  %v2719 = vadd.f32 0.0, %v2718
  %v2720 = vpop.f32.mrb[0].mxu0
  %2721 = vdwg.mxu0
  %2722 = vrot.lane.b32.xlu0 %v2029, 104
  %v2723 = vpop.permute.xlu0 %2722
  %2724 = vrot.lane.b32.xlu0 %v2030, 104
  %v2725 = vpop.permute.xlu0 %2724
  %2726 = vrot.lane.b32.xlu0 %v2031, 104
  %v2727 = vpop.permute.xlu0 %2726
  %2728 = vrot.lane.b32.xlu0 %v2029, 72
  %v2729 = vpop.permute.xlu0 %2728
  %2730 = vrot.lane.b32.xlu0 %v2030, 72
  %v2731 = vpop.permute.xlu0 %2730
  %2732 = vrot.lane.b32.xlu0 %v2031, 72
  %v2733 = vpop.permute.xlu0 %2732
  %v2735 = vsel %vm364, %v2723, 0
  %v2738 = vsel %vm364, %v2725, 0
  %v2741 = vsel %vm364, %v2727, 0
  %v2744 = vsel %vm364, %v2729, 0
  %v2747 = vsel %vm364, %v2731, 0
  %v2750 = vsel %vm364, %v2733, 0
  %2752 = vmatprep.subr.bf16.mxu0 0
  %2753 = vmatpush1.bf16.xpose.msra.mxu0 %v2744
  %2754 = vmatprep.subr.bf16.mxu0 0
  %2755 = vmatpush1.bf16.xpose.msra.mxu0 %v2747
  %2756 = vmatprep.subr.bf16.mxu0 0
  %2757 = vmatpush1.bf16.xpose.msra.mxu0 %v2750
  %2758 = vmatprep.subr.bf16.mxu0 0
  %2759 = vmatpush1.bf16.xpose.msra.mxu0 0
  %2760 = vmatprep.subr.bf16.mxu0 0
  %2761 = vmatpush1.bf16.xpose.msra.mxu0 0
  %2762 = vmatprep.subr.bf16.mxu0 0
  %2763 = vmatpush1.bf16.xpose.msra.mxu0 0
  %2764 = vmatprep.subr.bf16.mxu0 0
  %2765 = vmatpush1.bf16.xpose.msra.mxu0 0
  %2766 = vmatprep.subr.bf16.mxu0 0
  %2767 = vmatpush1.bf16.xpose.msra.mxu0 0
  %2768 = vmatprep.subr.bf16.mxu0 0
  %2769 = vmatpush1.bf16.xpose.msra.mxu0 0
  %2770 = vmatprep.subr.bf16.mxu0 0
  %2771 = vmatpush1.bf16.xpose.msra.mxu0 0
  %2772 = vmatprep.subr.bf16.mxu0 0
  %2773 = vmatpush1.bf16.xpose.msra.mxu0 0
  %2774 = vmatprep.subr.bf16.mxu0 0
  %2775 = vmatpush1.bf16.xpose.msra.mxu0 0
  %2776 = vmatprep.subr.bf16.mxu0 0
  %2777 = vmatpush1.bf16.xpose.msra.mxu0 0
  %2778 = vmatprep.subr.bf16.mxu0 0
  %2779 = vmatpush1.bf16.xpose.msra.mxu0 0
  %2780 = vmatprep.subr.bf16.mxu0 0
  %2781 = vmatpush1.bf16.xpose.msra.mxu0 0
  %2782 = vmatprep.subr.bf16.mxu0 0
  %2783 = vmatpush1.bf16.xpose.msra.mxu0 0
  %2784 = vmatprep.mubr.bf16.mxu0 0
  %2785 = vmatmul.mubr.bf16.gmra.mrb[0].mxu0 %v2735
  %v2786 = vpop.f32.mrb[0].mxu0
  %v2787 = vadd.f32 %v38, %v2786
  %v2788 = vpop.f32.mrb[0].mxu0
  %v2789 = vpop.f32.mrb[0].mxu0
  %v2790 = vadd.f32 %v39, %v2789
  %v2791 = vpop.f32.mrb[0].mxu0
  %2792 = vmatprep.mubr.bf16.mxu0 0
  %2793 = vmatmul.mubr.bf16.gmra.mrb[0].mxu0 %v2738
  %v2794 = vpop.f32.mrb[0].mxu0
  %v2795 = vadd.f32 %v40, %v2794
  %v2796 = vpop.f32.mrb[0].mxu0
  %v2797 = vpop.f32.mrb[0].mxu0
  %v2798 = vadd.f32 %v41, %v2797
  %v2799 = vpop.f32.mrb[0].mxu0
  %2800 = vmatprep.mubr.bf16.mxu0 0
  %2801 = vmatmul.mubr.bf16.gmra.mrb[0].mxu0 %v2741
  %v2802 = vpop.f32.mrb[0].mxu0
  %v2803 = vadd.f32 %v42, %v2802
  %v2804 = vpop.f32.mrb[0].mxu0
  %v2805 = vpop.f32.mrb[0].mxu0
  %v2806 = vadd.f32 %v43, %v2805
  %v2807 = vpop.f32.mrb[0].mxu0
  %2808 = vdwg.mxu0
  %v2809 = vsel %vm95, %v2787, -inf
  %2810 = vmax.xlane.f32.xlu0 %v2809
  %v2811 = vpop.xlane.xlu0 %2810
  %v2812 = vsel %vm95, %v2790, -inf
  %2813 = vmax.xlane.f32.xlu0 %v2812
  %v2814 = vpop.xlane.xlu0 %2813
  %v2815 = vsel %vm95, %v2795, -inf
  %2816 = vmax.xlane.f32.xlu0 %v2815
  %v2817 = vpop.xlane.xlu0 %2816
  %v2818 = vsel %vm95, %v2798, -inf
  %2819 = vmax.xlane.f32.xlu0 %v2818
  %v2820 = vpop.xlane.xlu0 %2819
  %v2821 = vsel %vm95, %v2803, -inf
  %2822 = vmax.xlane.f32.xlu0 %v2821
  %v2823 = vpop.xlane.xlu0 %2822
  %v2824 = vsel %vm95, %v2806, -inf
  %2825 = vmax.xlane.f32.xlu0 %v2824
  %v2826 = vpop.xlane.xlu0 %2825
  %v2827 = vsub.f32 %v2787, %v2811
  %v2828 = vsub.f32 %v2790, %v2814
  %v2829 = vsub.f32 %v2795, %v2817
  %v2830 = vsub.f32 %v2798, %v2820
  %v2831 = vsub.f32 %v2803, %v2823
  %v2832 = vsub.f32 %v2806, %v2826
  %v2833 = vmul.f32 %v2827, 1.442695
  %v2834 = vpow.pop %v2833
  %v2835 = vmul.f32 %v2828, 1.442695
  %v2836 = vpow.pop %v2835
  %v2837 = vmul.f32 %v2829, 1.442695
  %v2838 = vpow.pop %v2837
  %v2839 = vmul.f32 %v2830, 1.442695
  %v2840 = vpow.pop %v2839
  %v2841 = vmul.f32 %v2831, 1.442695
  %v2842 = vpow.pop %v2841
  %v2843 = vmul.f32 %v2832, 1.442695
  %v2844 = vpow.pop %v2843
  %v2845 = vsel %vm95, %v2834, 0.0
  %2846 = vadd.xlane.f32.xlu0 %v2845
  %v2847 = vpop.xlane.xlu0 %2846
  %v2848 = vsel %vm95, %v2836, 0.0
  %2849 = vadd.xlane.f32.xlu0 %v2848
  %v2850 = vpop.xlane.xlu0 %2849
  %v2851 = vsel %vm95, %v2838, 0.0
  %2852 = vadd.xlane.f32.xlu0 %v2851
  %v2853 = vpop.xlane.xlu0 %2852
  %v2854 = vsel %vm95, %v2840, 0.0
  %2855 = vadd.xlane.f32.xlu0 %v2854
  %v2856 = vpop.xlane.xlu0 %2855
  %v2857 = vsel %vm95, %v2842, 0.0
  %2858 = vadd.xlane.f32.xlu0 %v2857
  %v2859 = vpop.xlane.xlu0 %2858
  %v2860 = vsel %vm95, %v2844, 0.0
  %2861 = vadd.xlane.f32.xlu0 %v2860
  %v2862 = vpop.xlane.xlu0 %2861
  %v2863 = vrcp.pop %v2847
  %v2864 = vrcp.pop %v2850
  %v2865 = vrcp.pop %v2853
  %v2866 = vrcp.pop %v2856
  %v2867 = vrcp.pop %v2859
  %v2868 = vrcp.pop %v2862
  %v2869 = vmul.f32 %v2834, %v2863
  %v2870 = vmul.f32 %v2836, %v2864
  %v2871 = vmul.f32 %v2838, %v2865
  %v2872 = vmul.f32 %v2840, %v2866
  %v2873 = vmul.f32 %v2842, %v2867
  %v2874 = vmul.f32 %v2844, %v2868
  %v2875 = vpack.c.bf16 %v2870, %v2869
  %v2876 = vpack.c.bf16 %v2872, %v2871
  %v2877 = vpack.c.bf16 %v2874, %v2873
  %2878 = vrot.lane.b32.xlu0 %v2029, 40
  %v2879 = vpop.permute.xlu0 %2878
  %2880 = vrot.lane.b32.xlu0 %v2030, 40
  %v2881 = vpop.permute.xlu0 %2880
  %2882 = vrot.lane.b32.xlu0 %v2031, 40
  %v2883 = vpop.permute.xlu0 %2882
  %v2888 = vsel %vm95, %v2875, 0
  %v2891 = vsel %vm95, %v2876, 0
  %v2894 = vsel %vm95, %v2877, 0
  %2896 = vmatprep.subr.bf16.mxu0 0
  %2897 = vmatpush1.bf16.msra.mxu0 %v2879
  %2898 = vmatprep.subr.bf16.mxu0 0
  %2899 = vmatpush1.bf16.msra.mxu0 %v2881
  %2900 = vmatprep.subr.bf16.mxu0 0
  %2901 = vmatpush1.bf16.msra.mxu0 %v2883
  %2902 = vmatprep.subr.bf16.mxu0 0
  %2903 = vmatpush1.bf16.msra.mxu0 0
  %2904 = vmatprep.subr.bf16.mxu0 0
  %2905 = vmatpush1.bf16.msra.mxu0 0
  %2906 = vmatprep.subr.bf16.mxu0 0
  %2907 = vmatpush1.bf16.msra.mxu0 0
  %2908 = vmatprep.subr.bf16.mxu0 0
  %2909 = vmatpush1.bf16.msra.mxu0 0
  %2910 = vmatprep.subr.bf16.mxu0 0
  %2911 = vmatpush1.bf16.msra.mxu0 0
  %2912 = vmatprep.subr.bf16.mxu0 0
  %2913 = vmatpush1.bf16.msra.mxu0 0
  %2914 = vmatprep.subr.bf16.mxu0 0
  %2915 = vmatpush1.bf16.msra.mxu0 0
  %2916 = vmatprep.subr.bf16.mxu0 0
  %2917 = vmatpush1.bf16.msra.mxu0 0
  %2918 = vmatprep.subr.bf16.mxu0 0
  %2919 = vmatpush1.bf16.msra.mxu0 0
  %2920 = vmatprep.subr.bf16.mxu0 0
  %2921 = vmatpush1.bf16.msra.mxu0 0
  %2922 = vmatprep.subr.bf16.mxu0 0
  %2923 = vmatpush1.bf16.msra.mxu0 0
  %2924 = vmatprep.subr.bf16.mxu0 0
  %2925 = vmatpush1.bf16.msra.mxu0 0
  %2926 = vmatprep.subr.bf16.mxu0 0
  %2927 = vmatpush1.bf16.msra.mxu0 0
  %2928 = vmatprep.mubr.bf16.mxu0 0
  %2929 = vmatmul.mubr.bf16.gmra.mrb[0].mxu0 %v2888
  %v2930 = vpop.f32.mrb[0].mxu0
  %v2931 = vadd.f32 0.0, %v2930
  %v2932 = vpop.f32.mrb[0].mxu0
  %v2933 = vpop.f32.mrb[0].mxu0
  %v2934 = vadd.f32 0.0, %v2933
  %v2935 = vpop.f32.mrb[0].mxu0
  %2936 = vmatprep.mubr.bf16.mxu0 0
  %2937 = vmatmul.mubr.bf16.gmra.mrb[0].mxu0 %v2891
  %v2938 = vpop.f32.mrb[0].mxu0
  %v2939 = vadd.f32 0.0, %v2938
  %v2940 = vpop.f32.mrb[0].mxu0
  %v2941 = vpop.f32.mrb[0].mxu0
  %v2942 = vadd.f32 0.0, %v2941
  %v2943 = vpop.f32.mrb[0].mxu0
  %2944 = vmatprep.mubr.bf16.mxu0 0
  %2945 = vmatmul.mubr.bf16.gmra.mrb[0].mxu0 %v2894
  %v2946 = vpop.f32.mrb[0].mxu0
  %v2947 = vadd.f32 0.0, %v2946
  %v2948 = vpop.f32.mrb[0].mxu0
  %v2949 = vpop.f32.mrb[0].mxu0
  %v2950 = vadd.f32 0.0, %v2949
  %v2951 = vpop.f32.mrb[0].mxu0
  %2952 = vdwg.mxu0
  %2959 = vrot.lane.b32.xlu0 %v2469, 8
  %v2960 = vpop.permute.xlu0 %2959
  %2961 = vrot.lane.b32.xlu0 %v2472, 8
  %v2962 = vpop.permute.xlu0 %2961
  %2963 = vrot.lane.b32.xlu0 %v2477, 8
  %v2964 = vpop.permute.xlu0 %2963
  %2965 = vrot.lane.b32.xlu0 %v2480, 8
  %v2966 = vpop.permute.xlu0 %2965
  %2967 = vrot.lane.b32.xlu0 %v2485, 8
  %v2968 = vpop.permute.xlu0 %2967
  %2969 = vrot.lane.b32.xlu0 %v2488, 8
  %v2970 = vpop.permute.xlu0 %2969
  %2983 = vrot.lane.b32.xlu0 %v2700, 16
  %v2984 = vpop.permute.xlu0 %2983
  %2985 = vrot.lane.b32.xlu0 %v2703, 16
  %v2986 = vpop.permute.xlu0 %2985
  %2987 = vrot.lane.b32.xlu0 %v2708, 16
  %v2988 = vpop.permute.xlu0 %2987
  %2989 = vrot.lane.b32.xlu0 %v2711, 16
  %v2990 = vpop.permute.xlu0 %2989
  %2991 = vrot.lane.b32.xlu0 %v2716, 16
  %v2992 = vpop.permute.xlu0 %2991
  %2993 = vrot.lane.b32.xlu0 %v2719, 16
  %v2994 = vpop.permute.xlu0 %2993
  %3007 = vrot.lane.b32.xlu0 %v2931, 24
  %v3008 = vpop.permute.xlu0 %3007
  %3009 = vrot.lane.b32.xlu0 %v2934, 24
  %v3010 = vpop.permute.xlu0 %3009
  %3011 = vrot.lane.b32.xlu0 %v2939, 24
  %v3012 = vpop.permute.xlu0 %3011
  %3013 = vrot.lane.b32.xlu0 %v2942, 24
  %v3014 = vpop.permute.xlu0 %3013
  %3015 = vrot.lane.b32.xlu0 %v2947, 24
  %v3016 = vpop.permute.xlu0 %3015
  %3017 = vrot.lane.b32.xlu0 %v2950, 24
  %v3018 = vpop.permute.xlu0 %3017
  %v3025 = vsel %vm364, %v2238, %v2960
  %v3026 = vsel %vm364, %v2241, %v2962
  %v3027 = vsel %vm364, %v2246, %v2964
  %v3028 = vsel %vm364, %v2249, %v2966
  %v3029 = vsel %vm364, %v2254, %v2968
  %v3030 = vsel %vm364, %v2257, %v2970
  %v3031 = vsel %vm1355, %v3025, %v2984
  %v3032 = vsel %vm1355, %v3026, %v2986
  %v3033 = vsel %vm1355, %v3027, %v2988
  %v3034 = vsel %vm1355, %v3028, %v2990
  %v3035 = vsel %vm1355, %v3029, %v2992
  %v3036 = vsel %vm1355, %v3030, %v2994
  %v3037 = vsel %vm1362, %v3031, %v3008
  %v3038 = vsel %vm1362, %v3032, %v3010
  %v3039 = vsel %vm1362, %v3033, %v3012
  %v3040 = vsel %vm1362, %v3034, %v3014
  %v3041 = vsel %vm1362, %v3035, %v3016
  %v3042 = vsel %vm1362, %v3036, %v3018
  %v3043 = vpack.c.bf16 %v3038, %v3037
  %v3044 = vpack.c.bf16 %v3040, %v3039
  %v3045 = vpack.c.bf16 %v3042, %v3041
  %s3046 = scalar_lea.vmem %s6, 16
  %v3047 = vld [vmem:[%s3046] sm:$0xf]
  %v3048 = vld [vmem:[%s3046 + $0x4] sm:$0xf]
  %v3049 = vld [vmem:[%s3046 + $0x8] sm:$0xf]
  %v3050 = vld [vmem:[%s3046 + $0xc] sm:$0xf]
  %v3051 = vlaneseq
  %v3052 = vshrl.u32 %v3051, 7
  %v3053 = vsub.s32 3, %v3052
  %v3054 = vrot.slane %v1840, %v3053
  %v3059 = vunpack.c.l.b16 %v3047
  %v3060 = vunpack.c.l.b16 %v3048
  %v3061 = vunpack.c.l.b16 %v3049
  %v3062 = vunpack.c.l.b16 %v3050
  %v3063 = vpack.c.b16 %v3060, %v3059
  %v3064 = vpack.c.b16 %v3062, %v3061
  %v3068 = vsel %vm163, %v3043, 0
  %v3071 = vsel %vm163, %v3044, 0
  %v3074 = vsel %vm163, %v3045, 0
  %3076 = vmatprep.subr.bf16.mxu0 0
  %3077 = vmatpush1.bf16.msra.mxu0 %v3063
  %3078 = vmatprep.subr.bf16.mxu0 0
  %3079 = vmatpush1.bf16.msra.mxu0 %v3064
  %3080 = vmatprep.subr.bf16.mxu0 0
  %3081 = vmatpush1.bf16.msra.mxu0 0
  %3082 = vmatprep.subr.bf16.mxu0 0
  %3083 = vmatpush1.bf16.msra.mxu0 0
  %3084 = vmatprep.subr.bf16.mxu0 0
  %3085 = vmatpush1.bf16.msra.mxu0 0
  %3086 = vmatprep.subr.bf16.mxu0 0
  %3087 = vmatpush1.bf16.msra.mxu0 0
  %3088 = vmatprep.subr.bf16.mxu0 0
  %3089 = vmatpush1.bf16.msra.mxu0 0
  %3090 = vmatprep.subr.bf16.mxu0 0
  %3091 = vmatpush1.bf16.msra.mxu0 0
  %3092 = vmatprep.subr.bf16.mxu0 0
  %3093 = vmatpush1.bf16.msra.mxu0 0
  %3094 = vmatprep.subr.bf16.mxu0 0
  %3095 = vmatpush1.bf16.msra.mxu0 0
  %3096 = vmatprep.subr.bf16.mxu0 0
  %3097 = vmatpush1.bf16.msra.mxu0 0
  %3098 = vmatprep.subr.bf16.mxu0 0
  %3099 = vmatpush1.bf16.msra.mxu0 0
  %3100 = vmatprep.subr.bf16.mxu0 0
  %3101 = vmatpush1.bf16.msra.mxu0 0
  %3102 = vmatprep.subr.bf16.mxu0 0
  %3103 = vmatpush1.bf16.msra.mxu0 0
  %3104 = vmatprep.subr.bf16.mxu0 0
  %3105 = vmatpush1.bf16.msra.mxu0 0
  %3106 = vmatprep.subr.bf16.mxu0 0
  %3107 = vmatpush1.bf16.msra.mxu0 0
  %3108 = vmatprep.mubr.bf16.mxu0 0
  %3109 = vmatmul.mubr.bf16.gmra.mrb[0].mxu0 %v3068
  %v3110 = vpop.f32.mrb[0].mxu0
  %v3111 = vadd.f32 %v3054, %v3110
  %v3112 = vpop.f32.mrb[0].mxu0
  %v3113 = vpop.f32.mrb[0].mxu0
  %v3114 = vadd.f32 %v3054, %v3113
  %v3115 = vpop.f32.mrb[0].mxu0
  %3116 = vmatprep.mubr.bf16.mxu0 0
  %3117 = vmatmul.mubr.bf16.gmra.mrb[0].mxu0 %v3071
  %v3118 = vpop.f32.mrb[0].mxu0
  %v3119 = vadd.f32 %v3054, %v3118
  %v3120 = vpop.f32.mrb[0].mxu0
  %v3121 = vpop.f32.mrb[0].mxu0
  %v3122 = vadd.f32 %v3054, %v3121
  %v3123 = vpop.f32.mrb[0].mxu0
  %3124 = vmatprep.mubr.bf16.mxu0 0
  %3125 = vmatmul.mubr.bf16.gmra.mrb[0].mxu0 %v3074
  %v3126 = vpop.f32.mrb[0].mxu0
  %v3127 = vadd.f32 %v3054, %v3126
  %v3128 = vpop.f32.mrb[0].mxu0
  %v3129 = vpop.f32.mrb[0].mxu0
  %v3130 = vadd.f32 %v3054, %v3129
  %v3131 = vpop.f32.mrb[0].mxu0
  %3132 = vdwg.mxu0
  %v3133 = vadd.f32 %v1833, %v3111
  %v3134 = vadd.f32 %v1834, %v3114
  %v3135 = vadd.f32 %v1835, %v3119
  %v3136 = vadd.f32 %v1836, %v3122
  %v3137 = vadd.f32 %v1837, %v3127
  %v3138 = vadd.f32 %v1838, %v3130
  %v3139 = vsel %vm163, %v3133, 0.0
  %3140 = vadd.xlane.f32.xlu0 %v3139
  %v3141 = vpop.xlane.xlu0 %3140
  %v3142 = vsel %vm163, %v3134, 0.0
  %3143 = vadd.xlane.f32.xlu0 %v3142
  %v3144 = vpop.xlane.xlu0 %3143
  %v3145 = vsel %vm163, %v3135, 0.0
  %3146 = vadd.xlane.f32.xlu0 %v3145
  %v3147 = vpop.xlane.xlu0 %3146
  %v3148 = vsel %vm163, %v3136, 0.0
  %3149 = vadd.xlane.f32.xlu0 %v3148
  %v3150 = vpop.xlane.xlu0 %3149
  %v3151 = vsel %vm163, %v3137, 0.0
  %3152 = vadd.xlane.f32.xlu0 %v3151
  %v3153 = vpop.xlane.xlu0 %3152
  %v3154 = vsel %vm163, %v3138, 0.0
  %3155 = vadd.xlane.f32.xlu0 %v3154
  %v3156 = vpop.xlane.xlu0 %3155
  %v3157 = vmul.f32 %v3141, %v182
  %v3158 = vmul.f32 %v3144, %v182
  %v3159 = vmul.f32 %v3147, %v182
  %v3160 = vmul.f32 %v3150, %v182
  %v3161 = vmul.f32 %v3153, %v182
  %v3162 = vmul.f32 %v3156, %v182
  %v3163 = vsub.f32 %v3133, %v3157
  %v3164 = vsub.f32 %v3134, %v3158
  %v3165 = vsub.f32 %v3135, %v3159
  %v3166 = vsub.f32 %v3136, %v3160
  %v3167 = vsub.f32 %v3137, %v3161
  %v3168 = vsub.f32 %v3138, %v3162
  %v3169 = vmul.f32 %v3163, %v3163
  %v3170 = vmul.f32 %v3164, %v3164
  %v3171 = vmul.f32 %v3165, %v3165
  %v3172 = vmul.f32 %v3166, %v3166
  %v3173 = vmul.f32 %v3167, %v3167
  %v3174 = vmul.f32 %v3168, %v3168
  %v3175 = vsel %vm163, %v3169, 0.0
  %3176 = vadd.xlane.f32.xlu0 %v3175
  %v3177 = vpop.xlane.xlu0 %3176
  %v3178 = vsel %vm163, %v3170, 0.0
  %3179 = vadd.xlane.f32.xlu0 %v3178
  %v3180 = vpop.xlane.xlu0 %3179
  %v3181 = vsel %vm163, %v3171, 0.0
  %3182 = vadd.xlane.f32.xlu0 %v3181
  %v3183 = vpop.xlane.xlu0 %3182
  %v3184 = vsel %vm163, %v3172, 0.0
  %3185 = vadd.xlane.f32.xlu0 %v3184
  %v3186 = vpop.xlane.xlu0 %3185
  %v3187 = vsel %vm163, %v3173, 0.0
  %3188 = vadd.xlane.f32.xlu0 %v3187
  %v3189 = vpop.xlane.xlu0 %3188
  %v3190 = vsel %vm163, %v3174, 0.0
  %3191 = vadd.xlane.f32.xlu0 %v3190
  %v3192 = vpop.xlane.xlu0 %3191
  %v3193 = vmul.f32 %v3177, %v182
  %v3194 = vmul.f32 %v3180, %v182
  %v3195 = vmul.f32 %v3183, %v182
  %v3196 = vmul.f32 %v3186, %v182
  %v3197 = vmul.f32 %v3189, %v182
  %v3198 = vmul.f32 %v3192, %v182
  %v3199 = vadd.f32 %v3193, 1e-06
  %v3200 = vadd.f32 %v3194, 1e-06
  %v3201 = vadd.f32 %v3195, 1e-06
  %v3202 = vadd.f32 %v3196, 1e-06
  %v3203 = vadd.f32 %v3197, 1e-06
  %v3204 = vadd.f32 %v3198, 1e-06
  %v3205 = vrsqrt.pop %v3199
  %v3206 = vrsqrt.pop %v3200
  %v3207 = vrsqrt.pop %v3201
  %v3208 = vrsqrt.pop %v3202
  %v3209 = vrsqrt.pop %v3203
  %v3210 = vrsqrt.pop %v3204
  %v3211 = vmul.f32 %v3163, %v3205
  %v3212 = vmul.f32 %v3164, %v3206
  %v3213 = vmul.f32 %v3165, %v3207
  %v3214 = vmul.f32 %v3166, %v3208
  %v3215 = vmul.f32 %v3167, %v3209
  %v3216 = vmul.f32 %v3168, %v3210
  %v3217 = vlaneseq
  %v3218 = vshrl.u32 %v3217, 7
  %v3219 = vsub.s32 4, %v3218
  %v3220 = vrot.slane %v1840, %v3219
  %v3221 = vmul.f32 %v3211, %v3220
  %v3222 = vmul.f32 %v3212, %v3220
  %v3223 = vmul.f32 %v3213, %v3220
  %v3224 = vmul.f32 %v3214, %v3220
  %v3225 = vmul.f32 %v3215, %v3220
  %v3226 = vmul.f32 %v3216, %v3220
  %v3227 = vlaneseq
  %v3228 = vshrl.u32 %v3227, 7
  %v3229 = vsub.s32 5, %v3228
  %v3230 = vrot.slane %v1840, %v3229
  %v3231 = vadd.f32 %v3221, %v3230
  %v3232 = vadd.f32 %v3222, %v3230
  %v3233 = vadd.f32 %v3223, %v3230
  %v3234 = vadd.f32 %v3224, %v3230
  %v3235 = vadd.f32 %v3225, %v3230
  %v3236 = vadd.f32 %v3226, %v3230
  %v3237 = vpack.c.bf16 %v3232, %v3231
  %v3238 = vpack.c.bf16 %v3234, %v3233
  %v3239 = vpack.c.bf16 %v3236, %v3235
  %s3240 = scalar_lea.vmem %s7, 16
  %v3241 = vld [vmem:[%s3240] sm:$0xf]
  %v3242 = vld [vmem:[%s3240 + $0x4] sm:$0xf]
  %v3243 = vld [vmem:[%s3240 + $0x8] sm:$0xf]
  %v3244 = vld [vmem:[%s3240 + $0xc] sm:$0xf]
  %v3245 = vlaneseq
  %v3246 = vshrl.u32 %v3245, 7
  %v3247 = vsub.s32 6, %v3246
  %v3248 = vrot.slane %v1840, %v3247
  %v3253 = vunpack.c.l.b16 %v3241
  %v3254 = vunpack.c.l.b16 %v3242
  %v3255 = vunpack.c.l.b16 %v3243
  %v3256 = vunpack.c.l.b16 %v3244
  %v3257 = vpack.c.b16 %v3254, %v3253
  %v3258 = vpack.c.b16 %v3256, %v3255
  %v3262 = vsel %vm163, %v3237, 0
  %v3265 = vsel %vm163, %v3238, 0
  %v3268 = vsel %vm163, %v3239, 0
  %3270 = vmatprep.subr.bf16.mxu0 0
  %3271 = vmatpush1.bf16.msra.mxu0 %v3257
  %3272 = vmatprep.subr.bf16.mxu0 0
  %3273 = vmatpush1.bf16.msra.mxu0 %v3258
  %3274 = vmatprep.subr.bf16.mxu0 0
  %3275 = vmatpush1.bf16.msra.mxu0 0
  %3276 = vmatprep.subr.bf16.mxu0 0
  %3277 = vmatpush1.bf16.msra.mxu0 0
  %3278 = vmatprep.subr.bf16.mxu0 0
  %3279 = vmatpush1.bf16.msra.mxu0 0
  %3280 = vmatprep.subr.bf16.mxu0 0
  %3281 = vmatpush1.bf16.msra.mxu0 0
  %3282 = vmatprep.subr.bf16.mxu0 0
  %3283 = vmatpush1.bf16.msra.mxu0 0
  %3284 = vmatprep.subr.bf16.mxu0 0
  %3285 = vmatpush1.bf16.msra.mxu0 0
  %3286 = vmatprep.subr.bf16.mxu0 0
  %3287 = vmatpush1.bf16.msra.mxu0 0
  %3288 = vmatprep.subr.bf16.mxu0 0
  %3289 = vmatpush1.bf16.msra.mxu0 0
  %3290 = vmatprep.subr.bf16.mxu0 0
  %3291 = vmatpush1.bf16.msra.mxu0 0
  %3292 = vmatprep.subr.bf16.mxu0 0
  %3293 = vmatpush1.bf16.msra.mxu0 0
  %3294 = vmatprep.subr.bf16.mxu0 0
  %3295 = vmatpush1.bf16.msra.mxu0 0
  %3296 = vmatprep.subr.bf16.mxu0 0
  %3297 = vmatpush1.bf16.msra.mxu0 0
  %3298 = vmatprep.subr.bf16.mxu0 0
  %3299 = vmatpush1.bf16.msra.mxu0 0
  %3300 = vmatprep.subr.bf16.mxu0 0
  %3301 = vmatpush1.bf16.msra.mxu0 0
  %3302 = vmatprep.mubr.bf16.mxu0 0
  %3303 = vmatmul.mubr.bf16.gmra.mrb[0].mxu0 %v3262
  %v3304 = vpop.f32.mrb[0].mxu0
  %v3305 = vadd.f32 %v3248, %v3304
  %v3306 = vpop.f32.mrb[0].mxu0
  %v3307 = vpop.f32.mrb[0].mxu0
  %v3308 = vadd.f32 %v3248, %v3307
  %v3309 = vpop.f32.mrb[0].mxu0
  %3310 = vmatprep.mubr.bf16.mxu0 0
  %3311 = vmatmul.mubr.bf16.gmra.mrb[0].mxu0 %v3265
  %v3312 = vpop.f32.mrb[0].mxu0
  %v3313 = vadd.f32 %v3248, %v3312
  %v3314 = vpop.f32.mrb[0].mxu0
  %v3315 = vpop.f32.mrb[0].mxu0
  %v3316 = vadd.f32 %v3248, %v3315
  %v3317 = vpop.f32.mrb[0].mxu0
  %3318 = vmatprep.mubr.bf16.mxu0 0
  %3319 = vmatmul.mubr.bf16.gmra.mrb[0].mxu0 %v3268
  %v3320 = vpop.f32.mrb[0].mxu0
  %v3321 = vadd.f32 %v3248, %v3320
  %v3322 = vpop.f32.mrb[0].mxu0
  %v3323 = vpop.f32.mrb[0].mxu0
  %v3324 = vadd.f32 %v3248, %v3323
  %v3325 = vpop.f32.mrb[0].mxu0
  %3326 = vdwg.mxu0
  %v3327 = vmul.f32 %v3305, %v3305
  %v3328 = vmul.f32 %v3308, %v3308
  %v3329 = vmul.f32 %v3313, %v3313
  %v3330 = vmul.f32 %v3316, %v3316
  %v3331 = vmul.f32 %v3321, %v3321
  %v3332 = vmul.f32 %v3324, %v3324
  %v3333 = vmul.f32 %v3305, %v3327
  %v3334 = vmul.f32 %v3308, %v3328
  %v3335 = vmul.f32 %v3313, %v3329
  %v3336 = vmul.f32 %v3316, %v3330
  %v3337 = vmul.f32 %v3321, %v3331
  %v3338 = vmul.f32 %v3324, %v3332
  %v3339 = vmul.f32 %v3333, 0.044715
  %v3340 = vmul.f32 %v3334, 0.044715
  %v3341 = vmul.f32 %v3335, 0.044715
  %v3342 = vmul.f32 %v3336, 0.044715
  %v3343 = vmul.f32 %v3337, 0.044715
  %v3344 = vmul.f32 %v3338, 0.044715
  %v3345 = vadd.f32 %v3305, %v3339
  %v3346 = vadd.f32 %v3308, %v3340
  %v3347 = vadd.f32 %v3313, %v3341
  %v3348 = vadd.f32 %v3316, %v3342
  %v3349 = vadd.f32 %v3321, %v3343
  %v3350 = vadd.f32 %v3324, %v3344
  %v3351 = vmul.f32 %v3345, 0.7978846
  %v3352 = vmul.f32 %v3346, 0.7978846
  %v3353 = vmul.f32 %v3347, 0.7978846
  %v3354 = vmul.f32 %v3348, 0.7978846
  %v3355 = vmul.f32 %v3349, 0.7978846
  %v3356 = vmul.f32 %v3350, 0.7978846
  %v3357 = vtanh.pop %v3351
  %v3358 = vtanh.pop %v3352
  %v3359 = vtanh.pop %v3353
  %v3360 = vtanh.pop %v3354
  %v3361 = vtanh.pop %v3355
  %v3362 = vtanh.pop %v3356
  %v3363 = vadd.f32 %v3357, 1.0
  %v3364 = vadd.f32 %v3358, 1.0
  %v3365 = vadd.f32 %v3359, 1.0
  %v3366 = vadd.f32 %v3360, 1.0
  %v3367 = vadd.f32 %v3361, 1.0
  %v3368 = vadd.f32 %v3362, 1.0
  %v3369 = vmul.f32 %v3363, 0.5
  %v3370 = vmul.f32 %v3364, 0.5
  %v3371 = vmul.f32 %v3365, 0.5
  %v3372 = vmul.f32 %v3366, 0.5
  %v3373 = vmul.f32 %v3367, 0.5
  %v3374 = vmul.f32 %v3368, 0.5
  %v3375 = vmul.f32 %v3305, %v3369
  %v3376 = vmul.f32 %v3308, %v3370
  %v3377 = vmul.f32 %v3313, %v3371
  %v3378 = vmul.f32 %v3316, %v3372
  %v3379 = vmul.f32 %v3321, %v3373
  %v3380 = vmul.f32 %v3324, %v3374
  %v3381 = vpack.c.bf16 %v3376, %v3375
  %v3382 = vpack.c.bf16 %v3378, %v3377
  %v3383 = vpack.c.bf16 %v3380, %v3379
  %s3384 = scalar_lea.vmem %s8, 64
  %v3385 = vld [vmem:[%s3384] sm:$0xf]
  %v3386 = vld [vmem:[%s3384 + $0x4] sm:$0xf]
  %v3387 = vld [vmem:[%s3384 + $0x8] sm:$0xf]
  %v3388 = vld [vmem:[%s3384 + $0xc] sm:$0xf]
  %v3389 = vld [vmem:[%s3384 + $0x10] sm:$0xf]
  %v3390 = vld [vmem:[%s3384 + $0x14] sm:$0xf]
  %v3391 = vld [vmem:[%s3384 + $0x18] sm:$0xf]
  %v3392 = vld [vmem:[%s3384 + $0x1c] sm:$0xf]
  %v3393 = vld [vmem:[%s3384 + $0x20] sm:$0xf]
  %v3394 = vld [vmem:[%s3384 + $0x24] sm:$0xf]
  %v3395 = vld [vmem:[%s3384 + $0x28] sm:$0xf]
  %v3396 = vld [vmem:[%s3384 + $0x2c] sm:$0xf]
  %v3397 = vld [vmem:[%s3384 + $0x30] sm:$0xf]
  %v3398 = vld [vmem:[%s3384 + $0x34] sm:$0xf]
  %v3399 = vld [vmem:[%s3384 + $0x38] sm:$0xf]
  %v3400 = vld [vmem:[%s3384 + $0x3c] sm:$0xf]
  %v3401 = vlaneseq
  %v3402 = vshrl.u32 %v3401, 7
  %v3403 = vsub.s32 7, %v3402
  %v3404 = vrot.slane %v1840, %v3403
  %v3421 = vunpack.c.l.b16 %v3385
  %v3422 = vunpack.c.l.b16 %v3386
  %v3423 = vunpack.c.l.b16 %v3387
  %v3424 = vunpack.c.l.b16 %v3388
  %v3425 = vunpack.c.l.b16 %v3389
  %v3426 = vunpack.c.l.b16 %v3390
  %v3427 = vunpack.c.l.b16 %v3391
  %v3428 = vunpack.c.l.b16 %v3392
  %v3429 = vunpack.c.l.b16 %v3393
  %v3430 = vunpack.c.l.b16 %v3394
  %v3431 = vunpack.c.l.b16 %v3395
  %v3432 = vunpack.c.l.b16 %v3396
  %v3433 = vunpack.c.l.b16 %v3397
  %v3434 = vunpack.c.l.b16 %v3398
  %v3435 = vunpack.c.l.b16 %v3399
  %v3436 = vunpack.c.l.b16 %v3400
  %v3437 = vpack.c.b16 %v3422, %v3421
  %v3438 = vpack.c.b16 %v3424, %v3423
  %v3439 = vpack.c.b16 %v3426, %v3425
  %v3440 = vpack.c.b16 %v3428, %v3427
  %v3441 = vpack.c.b16 %v3430, %v3429
  %v3442 = vpack.c.b16 %v3432, %v3431
  %v3443 = vpack.c.b16 %v3434, %v3433
  %v3444 = vpack.c.b16 %v3436, %v3435
  %3453 = vmatprep.subr.bf16.mxu0 0
  %3454 = vmatpush1.bf16.msra.mxu0 %v3437
  %3455 = vmatprep.subr.bf16.mxu0 0
  %3456 = vmatpush1.bf16.msra.mxu0 %v3438
  %3457 = vmatprep.subr.bf16.mxu0 0
  %3458 = vmatpush1.bf16.msra.mxu0 %v3439
  %3459 = vmatprep.subr.bf16.mxu0 0
  %3460 = vmatpush1.bf16.msra.mxu0 %v3440
  %3461 = vmatprep.subr.bf16.mxu0 0
  %3462 = vmatpush1.bf16.msra.mxu0 %v3441
  %3463 = vmatprep.subr.bf16.mxu0 0
  %3464 = vmatpush1.bf16.msra.mxu0 %v3442
  %3465 = vmatprep.subr.bf16.mxu0 0
  %3466 = vmatpush1.bf16.msra.mxu0 %v3443
  %3467 = vmatprep.subr.bf16.mxu0 0
  %3468 = vmatpush1.bf16.msra.mxu0 %v3444
  %3469 = vmatprep.subr.bf16.mxu0 0
  %3470 = vmatpush1.bf16.msra.mxu0 0
  %3471 = vmatprep.subr.bf16.mxu0 0
  %3472 = vmatpush1.bf16.msra.mxu0 0
  %3473 = vmatprep.subr.bf16.mxu0 0
  %3474 = vmatpush1.bf16.msra.mxu0 0
  %3475 = vmatprep.subr.bf16.mxu0 0
  %3476 = vmatpush1.bf16.msra.mxu0 0
  %3477 = vmatprep.subr.bf16.mxu0 0
  %3478 = vmatpush1.bf16.msra.mxu0 0
  %3479 = vmatprep.subr.bf16.mxu0 0
  %3480 = vmatpush1.bf16.msra.mxu0 0
  %3481 = vmatprep.subr.bf16.mxu0 0
  %3482 = vmatpush1.bf16.msra.mxu0 0
  %3483 = vmatprep.subr.bf16.mxu0 0
  %3484 = vmatpush1.bf16.msra.mxu0 0
  %3485 = vmatprep.mubr.bf16.mxu0 0
  %3486 = vmatmul.mubr.bf16.gmra.mrb[0].mxu0 %v3381
  %v3487 = vpop.f32.mrb[0].mxu0
  %v3488 = vadd.f32 %v3404, %v3487
  %v3489 = vpop.f32.mrb[0].mxu0
  %v3490 = vpop.f32.mrb[0].mxu0
  %v3491 = vadd.f32 %v3404, %v3490
  %v3492 = vpop.f32.mrb[0].mxu0
  %3493 = vmatprep.mubr.bf16.mxu0 0
  %3494 = vmatmul.mubr.bf16.gmra.mrb[0].mxu0 %v3382
  %v3495 = vpop.f32.mrb[0].mxu0
  %v3496 = vadd.f32 %v3404, %v3495
  %v3497 = vpop.f32.mrb[0].mxu0
  %v3498 = vpop.f32.mrb[0].mxu0
  %v3499 = vadd.f32 %v3404, %v3498
  %v3500 = vpop.f32.mrb[0].mxu0
  %3501 = vmatprep.mubr.bf16.mxu0 0
  %3502 = vmatmul.mubr.bf16.gmra.mrb[0].mxu0 %v3383
  %v3503 = vpop.f32.mrb[0].mxu0
  %v3504 = vadd.f32 %v3404, %v3503
  %v3505 = vpop.f32.mrb[0].mxu0
  %v3506 = vpop.f32.mrb[0].mxu0
  %v3507 = vadd.f32 %v3404, %v3506
  %v3508 = vpop.f32.mrb[0].mxu0
  %3509 = vdwg.mxu0
  %v3510 = vadd.f32 %v3133, %v3488
  %v3511 = vadd.f32 %v3134, %v3491
  %v3512 = vadd.f32 %v3135, %v3496
  %v3513 = vadd.f32 %v3136, %v3499
  %v3514 = vadd.f32 %v3137, %v3504
  %v3515 = vadd.f32 %v3138, %v3507
  %v3516 = vsel %vm163, %v3510, 0.0
  %3517 = vadd.xlane.f32.xlu0 %v3516
  %v3518 = vpop.xlane.xlu0 %3517
  %v3519 = vsel %vm163, %v3511, 0.0
  %3520 = vadd.xlane.f32.xlu0 %v3519
  %v3521 = vpop.xlane.xlu0 %3520
  %v3522 = vsel %vm163, %v3512, 0.0
  %3523 = vadd.xlane.f32.xlu0 %v3522
  %v3524 = vpop.xlane.xlu0 %3523
  %v3525 = vsel %vm163, %v3513, 0.0
  %3526 = vadd.xlane.f32.xlu0 %v3525
  %v3527 = vpop.xlane.xlu0 %3526
  %v3528 = vsel %vm163, %v3514, 0.0
  %3529 = vadd.xlane.f32.xlu0 %v3528
  %v3530 = vpop.xlane.xlu0 %3529
  %v3531 = vsel %vm163, %v3515, 0.0
  %3532 = vadd.xlane.f32.xlu0 %v3531
  %v3533 = vpop.xlane.xlu0 %3532
  %v3534 = vmul.f32 %v3518, %v182
  %v3535 = vmul.f32 %v3521, %v182
  %v3536 = vmul.f32 %v3524, %v182
  %v3537 = vmul.f32 %v3527, %v182
  %v3538 = vmul.f32 %v3530, %v182
  %v3539 = vmul.f32 %v3533, %v182
  %v3540 = vsub.f32 %v3510, %v3534
  %v3541 = vsub.f32 %v3511, %v3535
  %v3542 = vsub.f32 %v3512, %v3536
  %v3543 = vsub.f32 %v3513, %v3537
  %v3544 = vsub.f32 %v3514, %v3538
  %v3545 = vsub.f32 %v3515, %v3539
  %v3546 = vmul.f32 %v3540, %v3540
  %v3547 = vmul.f32 %v3541, %v3541
  %v3548 = vmul.f32 %v3542, %v3542
  %v3549 = vmul.f32 %v3543, %v3543
  %v3550 = vmul.f32 %v3544, %v3544
  %v3551 = vmul.f32 %v3545, %v3545
  %v3552 = vsel %vm163, %v3546, 0.0
  %3553 = vadd.xlane.f32.xlu0 %v3552
  %v3554 = vpop.xlane.xlu0 %3553
  %v3555 = vsel %vm163, %v3547, 0.0
  %3556 = vadd.xlane.f32.xlu0 %v3555
  %v3557 = vpop.xlane.xlu0 %3556
  %v3558 = vsel %vm163, %v3548, 0.0
  %3559 = vadd.xlane.f32.xlu0 %v3558
  %v3560 = vpop.xlane.xlu0 %3559
  %v3561 = vsel %vm163, %v3549, 0.0
  %3562 = vadd.xlane.f32.xlu0 %v3561
  %v3563 = vpop.xlane.xlu0 %3562
  %v3564 = vsel %vm163, %v3550, 0.0
  %3565 = vadd.xlane.f32.xlu0 %v3564
  %v3566 = vpop.xlane.xlu0 %3565
  %v3567 = vsel %vm163, %v3551, 0.0
  %3568 = vadd.xlane.f32.xlu0 %v3567
  %v3569 = vpop.xlane.xlu0 %3568
  %v3570 = vmul.f32 %v3554, %v182
  %v3571 = vmul.f32 %v3557, %v182
  %v3572 = vmul.f32 %v3560, %v182
  %v3573 = vmul.f32 %v3563, %v182
  %v3574 = vmul.f32 %v3566, %v182
  %v3575 = vmul.f32 %v3569, %v182
  %v3576 = vadd.f32 %v3570, 1e-06
  %v3577 = vadd.f32 %v3571, 1e-06
  %v3578 = vadd.f32 %v3572, 1e-06
  %v3579 = vadd.f32 %v3573, 1e-06
  %v3580 = vadd.f32 %v3574, 1e-06
  %v3581 = vadd.f32 %v3575, 1e-06
  %v3582 = vrsqrt.pop %v3576
  %v3583 = vrsqrt.pop %v3577
  %v3584 = vrsqrt.pop %v3578
  %v3585 = vrsqrt.pop %v3579
  %v3586 = vrsqrt.pop %v3580
  %v3587 = vrsqrt.pop %v3581
  %v3588 = vmul.f32 %v3540, %v3582
  %v3589 = vmul.f32 %v3541, %v3583
  %v3590 = vmul.f32 %v3542, %v3584
  %v3591 = vmul.f32 %v3543, %v3585
  %v3592 = vmul.f32 %v3544, %v3586
  %v3593 = vmul.f32 %v3545, %v3587
  %v3594 = vlaneseq
  %v3595 = vshrl.u32 %v3594, 7
  %v3596 = vsub.s32 0, %v3595
  %v3597 = vrot.slane %v36, %v3596
  %v3598 = vmul.f32 %v3588, %v3597
  %v3599 = vmul.f32 %v3589, %v3597
  %v3600 = vmul.f32 %v3590, %v3597
  %v3601 = vmul.f32 %v3591, %v3597
  %v3602 = vmul.f32 %v3592, %v3597
  %v3603 = vmul.f32 %v3593, %v3597
  %v3604 = vlaneseq
  %v3605 = vshrl.u32 %v3604, 7
  %v3606 = vsub.s32 0, %v3605
  %v3607 = vrot.slane %v37, %v3606
  %v3608 = vadd.f32 %v3598, %v3607
  %v3609 = vadd.f32 %v3599, %v3607
  %v3610 = vadd.f32 %v3600, %v3607
  %v3611 = vadd.f32 %v3601, %v3607
  %v3612 = vadd.f32 %v3602, %v3607
  %v3613 = vadd.f32 %v3603, %v3607
  %3614 = vst.msk [vmem:[%s10] sm:$0xff] %vm163, %v3608
  %3615 = vst.msk [vmem:[%s10 + $0x8] sm:$0xff] %vm163, %v3609
  %3616 = vst.msk [vmem:[%s10 + $0x10] sm:$0xff] %vm163, %v3610
  %3617 = vst.msk [vmem:[%s10 + $0x18] sm:$0xff] %vm163, %v3611
  %3618 = vst.msk [vmem:[%s10 + $0x20] sm:$0xff] %vm163, %v3612
  %3619 = vst.msk [vmem:[%s10 + $0x28] sm:$0xff] %vm163, %v3613
  // Predicated region
  $region42: #{_lambda_.1} parent=0 // pred_check
    _
  $region43: #{_lambda_.1} parent=0 // pred_check_branch
    %3621 = sbr.rel (0) target = $region45
  $region44: #{_lambda_.1} parent=0 // pred_region
    _
  $region45: #{_lambda_.1} parent=0 // pred_fallthru
    _
  // Predicated region
  $region46: #{_lambda_.1} parent=0 // pred_check
    _
  $region47: #{_lambda_.1} parent=0 // pred_check_branch
    %3623 = sbr.rel (0) target = $region49
  $region48: #{_lambda_.1} parent=0 // pred_region
    _
  $region49: #{_lambda_.1} parent=0 // pred_fallthru
    _

</llo_original>
